<compile_context>
chip_gen: v7x
topology: tpu7x:2x2x1
jax: 0.10.0
libtpu: 0.0.40
codegen_flags: <defaults>
</compile_context>

<pallas_src>
import jax
import jax.numpy as jnp
from jax.experimental import pallas as pl
from jax.experimental.pallas import tpu as pltpu

LANE = 128


def _round_up(v, m):
    return (v + m - 1) // m * m


def aux_head_kernel(x_ref, w1_ref, b1_ref, w2_ref, wfc_ref, bfc_ref, out_ref):
    # x_ref: (T, H, W, Cp) bf16 tile of the NHWC activation (Cp = channel-padded C).
    def rl(h):
        # ReLU on the bf16 slice (exact), upcast for f32 accumulation (suits v5e VPU too).
        return jnp.maximum(x_ref[:, h], 0).astype(jnp.float32)          # (T, W, Cp)

    # AvgPool2d(5, stride=2, padding=0): window starts {0, 2} along H and W.
    # Hoist shared row sums (rows 2..4 belong to both windows), then shared column sums.
    r_mid = rl(2) + rl(3) + rl(4)                                       # rows 2..4
    r_top = r_mid + rl(0) + rl(1)                                       # rows 0..4
    r_bot = r_mid + rl(5) + rl(6)                                       # rows 2..6

    def two_windows(r):                                                 # (T, W, Cp) -> 2x (T, Cp)
        c_mid = r[:, 2] + r[:, 3] + r[:, 4]
        return c_mid + r[:, 0] + r[:, 1], c_mid + r[:, 5] + r[:, 6]

    p00, p01 = two_windows(r_top)                                       # windows (0,0), (0,2)
    p10, p11 = two_windows(r_bot)                                       # windows (2,0), (2,2)

    # Per pooled position: 1x1 conv (BN1 + 1/25 folded into w1) + ReLU, then that
    # position's slice of the 2x2 conv2, accumulated in f32. bf16 operands -> full MXU rate.
    w1 = w1_ref[...]                                                    # (Cp, 128) bf16
    b1 = b1_ref[...]                                                    # (1, 128) f32
    h2 = None
    for p, pooled in enumerate((p00, p01, p10, p11)):
        h1 = jnp.dot(pooled.astype(jnp.bfloat16), w1,
                     preferred_element_type=jnp.float32)                # (T, 128)
        h1 = jnp.maximum(h1 + b1, 0.0)                                  # BN1 shift + ReLU
        contrib = jnp.dot(h1.astype(jnp.bfloat16), w2_ref[p],
                          preferred_element_type=jnp.float32)           # (T, 768)
        h2 = contrib if h2 is None else h2 + contrib

    h2 = jnp.maximum(h2, 0.0)                                           # ReLU (no BN2 here)

    # Linear(768, num_classes), lane-padded output columns.
    out_ref[...] = (jnp.dot(h2.astype(jnp.bfloat16), wfc_ref[...],
                            preferred_element_type=jnp.float32) + bfc_ref[...])


def aux_head_pallas(x_nhwc, kernel_params, *, tile_n=None):
    """x_nhwc: (N, H, W, C) activation; ideally already NHWC bf16 from the producer."""
    N, H, W, C = x_nhwc.shape
    assert (H - 5) // 2 + 1 == 2 and (W - 5) // 2 + 1 == 2, (
        "AuxiliaryHeadImageNet needs a 7x7 (or 8x8) spatial input for Linear(768)")
    w1, b1, w2, wfc, bfc = kernel_params
    Cp = w1.shape[0]                                   # channel-padded (multiple of 128)
    nc_pad = wfc.shape[-1]
    assert Cp >= C and Cp % LANE == 0

    # Per-generation VMEM budget (v5e/v6e: 128 MiB, v7x: 64 MiB per TC).
    try:
        vmem_cap = int(pltpu.get_tpu_info().vmem_capacity_bytes)
    except Exception:  # conservative (v7x-safe) fallback
        vmem_cap = 64 << 20
    budget = int(vmem_cap * 0.6)

    weight_bytes = sum(int(a.size) * a.dtype.itemsize for a in (w1, b1, w2, wfc, bfc))

    # Per-batch-row VMEM: double-buffered bf16 input + f32 output blocks, plus the live
    # f32 intermediates (r_mid/r_top/r_bot, 4 pooled vectors, h1 (x2 headroom), h2, fc row).
    in_row = H * W * Cp * 2
    out_row = nc_pad * 4
    live_row = (3 * W * Cp + 4 * Cp + 2 * 128 + 768 + nc_pad) * 4
    per_row = 2 * in_row + 2 * out_row + live_row

    if tile_n is None:
        avail = max(budget - 2 * weight_bytes, per_row * 8)
        tile_n = max(8, min(1024, (avail // per_row) // 8 * 8))
    # Keep >= 2 grid steps so ("parallel",) can shard the batch over v7x's 2 TensorCores.
    if N >= 16:
        tile_n = min(tile_n, max(8, _round_up(pl.cdiv(N, 2), 8)))
    tile_n = max(8, min(tile_n, _round_up(N, 8)))

    # Zero-pad channels to the lane-dense width and batch to a tile multiple.
    x = x_nhwc
    if Cp != C:
        x = jnp.pad(x, ((0, 0), (0, 0), (0, 0), (0, Cp - C)))
    n_pad = _round_up(N, tile_n)
    if n_pad != N:
        x = jnp.pad(x, ((0, n_pad - N), (0, 0), (0, 0), (0, 0)))
    x = x.astype(jnp.bfloat16)                         # no-op if producer already emits bf16

    grid = (n_pad // tile_n,)
    tile_bytes = tile_n * per_row
    vmem_limit = int(min(int(vmem_cap * 0.9),
                         max(int(1.25 * (2 * weight_bytes + tile_bytes)), 16 << 20)))

    cost = pl.CostEstimate(
        flops=int(n_pad * (H * W * Cp
                           + 4 * (2 * Cp * 128 + 2 * 128 * 768)
                           + 2 * 768 * nc_pad)),
        transcendentals=0,
        bytes_accessed=int(n_pad * H * W * Cp * 2 + weight_bytes + n_pad * nc_pad * 4),
    )

    out = pl.pallas_call(
        aux_head_kernel,
        out_shape=jax.ShapeDtypeStruct((n_pad, nc_pad), jnp.float32),
        grid=grid,
        in_specs=[
            pl.BlockSpec((tile_n, H, W, Cp), lambda i: (i, 0, 0, 0)),   # batch-tiled input
            pl.BlockSpec(w1.shape, lambda i: (0, 0)),                   # VMEM-resident weights
            pl.BlockSpec(b1.shape, lambda i: (0, 0)),
            pl.BlockSpec(w2.shape, lambda i: (0, 0, 0)),
            pl.BlockSpec(wfc.shape, lambda i: (0, 0)),
            pl.BlockSpec(bfc.shape, lambda i: (0, 0)),
        ],
        out_specs=pl.BlockSpec((tile_n, nc_pad), lambda i: (i, 0)),
        compiler_params=pltpu.CompilerParams(
            dimension_semantics=("parallel",),
            vmem_limit_bytes=vmem_limit,
        ),
        cost_estimate=cost,
    )(x, w1, b1, w2, wfc, bfc)

    return out[:N] if n_pad != N else out


def aux_head_reference(x_nchw, torch_params):
    """Pure-JAX reference mirroring the PyTorch (NCHW, eval-mode BN) semantics."""
    conv1_w, s1, b1, conv2_w, fc_w, fc_b = torch_params
    x = jnp.maximum(x_nchw, 0.0)
    wins = []
    for hi in (0, 2):                                            # AvgPool2d(5, stride=2)
        for wi in (0, 2):
            wins.append(jnp.mean(x[:, :, hi:hi + 5, wi:wi + 5], axis=(2, 3)))
    N, C = wins[0].shape
    pooled = jnp.stack(wins, axis=-1).reshape(N, C, 2, 2)        # (N, C, 2, 2)
    h1 = jnp.einsum('nchw,oc->nohw', pooled, conv1_w)            # 1x1 conv
    h1 = jnp.maximum(h1 * s1[None, :, None, None] + b1[None, :, None, None], 0.0)
    h2 = jnp.einsum('nchw,ochw->no', h1, conv2_w)                # 2x2 conv -> 1x1
    h2 = jnp.maximum(h2, 0.0)                                    # ReLU (no BN2)
    return h2 @ fc_w.T + fc_b[None, :]


def make_params(key, C, num_classes):
    """Deterministic synthetic parameters; BN1 folded (inference mode) for the kernel."""
    # TODO(synk): training-mode BatchNorm (batch statistics) is not implemented; BN1 is
    # folded with running stats (inference semantics), as in the deployed aux head.
    ks = jax.random.split(key, 8)
    eps = 1e-5
    conv1_w = 0.1 * jax.random.normal(ks[0], (128, C), jnp.float32)        # (O, C), 1x1
    conv2_w = 0.1 * jax.random.normal(ks[1], (768, 128, 2, 2), jnp.float32)
    fc_w = 0.1 * jax.random.normal(ks[2], (num_classes, 768), jnp.float32)
    fc_b = 0.1 * jax.random.normal(ks[3], (num_classes,), jnp.float32)
    g1 = jax.random.uniform(ks[4], (128,), jnp.float32, 0.5, 1.5)
    be1 = 0.1 * jax.random.normal(ks[5], (128,), jnp.float32)
    m1 = 0.1 * jax.random.normal(ks[6], (128,), jnp.float32)
    v1 = jax.random.uniform(ks[7], (128,), jnp.float32, 0.5, 1.5)

    s1 = g1 / jnp.sqrt(v1 + eps)
    b1 = be1 - m1 * s1
    torch_params = (conv1_w, s1, b1, conv2_w, fc_w, fc_b)

    # Kernel-layout params (all folds done offline, once; matmul weights in bf16).
    Cp = _round_up(max(C, LANE), LANE)                             # lane-dense channel axis
    w1_eff = conv1_w.T * (s1[None, :] / 25.0)                      # (C, 128): 1/25 + BN1 scale
    w1_pad = (jnp.zeros((Cp, 128), jnp.float32)
              .at[:C].set(w1_eff).astype(jnp.bfloat16))            # (Cp, 128)
    b1_row = b1.reshape(1, 128)                                    # f32 shift (post-matmul)
    # (O, Cin, kh, kw) -> (kh, kw, Cin, O) -> (4, 128, 768); index p = kh*2 + kw
    w2_k = jnp.transpose(conv2_w, (2, 3, 1, 0)).reshape(4, 128, 768).astype(jnp.bfloat16)
    nc_pad = _round_up(max(num_classes, LANE), LANE)               # lane-dense output
    wfc_pad = (jnp.zeros((768, nc_pad), jnp.float32)
               .at[:, :num_classes].set(fc_w.T).astype(jnp.bfloat16))
    bfc_pad = jnp.zeros((1, nc_pad), jnp.float32).at[0, :num_classes].set(fc_b)
    kernel_params = (w1_pad, b1_row, w2_k, wfc_pad, bfc_pad)
    return torch_params, kernel_params


if __name__ == "__main__":
    key = jax.random.PRNGKey(0)
    N, C, H, W, num_classes = 16, 4, 7, 7, 10
    kx, kp = jax.random.split(key)
    x_nchw = jax.random.normal(kx, (N, C, H, W), jnp.float32)      # PyTorch-style NCHW input
    torch_params, kernel_params = make_params(kp, C, num_classes)

    # In a real model the producer emits the activation directly as NHWC bf16; the
    # transpose/cast here only builds that layout from the PyTorch-style tensor.
    x_nhwc = jnp.transpose(x_nchw, (0, 2, 3, 1)).astype(jnp.bfloat16)

    out_pad = jax.block_until_ready(aux_head_pallas(x_nhwc, kernel_params))
    out = out_pad[:, :num_classes]
    ref = jax.block_until_ready(aux_head_reference(x_nchw, torch_params))

    assert out.shape == (N, num_classes)
    assert bool(jnp.allclose(out, ref, rtol=5e-2, atol=5e-2)), "mismatch vs reference"
    print("KERNEL_OK")
</pallas_src>

<mosaic_0001>
module attributes {stable_mosaic.version = 11 : i64} {
  func.func @aux_head_kernel(%arg0: i32, %arg1: memref<8x7x7x128xbf16, #tpu.memory_space<vmem>>, %arg2: memref<128x128xbf16, #tpu.memory_space<vmem>>, %arg3: memref<1x128xf32, #tpu.memory_space<vmem>>, %arg4: memref<4x128x768xbf16, #tpu.memory_space<vmem>>, %arg5: memref<768x128xbf16, #tpu.memory_space<vmem>>, %arg6: memref<1x128xf32, #tpu.memory_space<vmem>>, %arg7: memref<8x128xf32, #tpu.memory_space<vmem>>) attributes {dimension_semantics = [#tpu.dimension_semantics<parallel>], iteration_bounds = array<i64: 2>, scalar_prefetch = 0 : i64, scratch_operands = 0 : i64, tpu.core_type = #tpu.core_type<tc>, window_params = [{transform_indices = @transform_0, window_bounds = array<i64: 8, 7, 7, 128>}, {pipeline_mode = #tpu.pipeline_mode<synchronous>, transform_indices = @transform_1, window_bounds = array<i64: 128, 128>}, {pipeline_mode = #tpu.pipeline_mode<synchronous>, transform_indices = @transform_2, window_bounds = array<i64: 1, 128>}, {pipeline_mode = #tpu.pipeline_mode<synchronous>, transform_indices = @transform_3, window_bounds = array<i64: 4, 128, 768>}, {pipeline_mode = #tpu.pipeline_mode<synchronous>, transform_indices = @transform_4, window_bounds = array<i64: 768, 128>}, {pipeline_mode = #tpu.pipeline_mode<synchronous>, transform_indices = @transform_5, window_bounds = array<i64: 1, 128>}, {transform_indices = @transform_6, window_bounds = array<i64: 8, 128>}]} {
    %c0 = arith.constant 0 : index
    %c2 = arith.constant 2 : index
    %c0_0 = arith.constant 0 : index
    %c0_1 = arith.constant 0 : index
    %0 = vector.load %arg1[%c0, %c2, %c0_0, %c0_1] : memref<8x7x7x128xbf16, #tpu.memory_space<vmem>>, vector<8x1x7x128xbf16>
    %1 = vector.shape_cast %0 : vector<8x1x7x128xbf16> to vector<8x7x128xbf16>
    %cst = arith.constant 0.000000e+00 : bf16
    %2 = vector.broadcast %cst : bf16 to vector<8x7x128xbf16>
    %3 = arith.maximumf %1, %2 : vector<8x7x128xbf16>
    %4 = arith.extf %3 : vector<8x7x128xbf16> to vector<8x7x128xf32>
    %c0_2 = arith.constant 0 : index
    %c3 = arith.constant 3 : index
    %c0_3 = arith.constant 0 : index
    %c0_4 = arith.constant 0 : index
    %5 = vector.load %arg1[%c0_2, %c3, %c0_3, %c0_4] : memref<8x7x7x128xbf16, #tpu.memory_space<vmem>>, vector<8x1x7x128xbf16>
    %6 = vector.shape_cast %5 : vector<8x1x7x128xbf16> to vector<8x7x128xbf16>
    %cst_5 = arith.constant 0.000000e+00 : bf16
    %7 = vector.broadcast %cst_5 : bf16 to vector<8x7x128xbf16>
    %8 = arith.maximumf %6, %7 : vector<8x7x128xbf16>
    %9 = arith.extf %8 : vector<8x7x128xbf16> to vector<8x7x128xf32>
    %10 = arith.addf %4, %9 : vector<8x7x128xf32>
    %c0_6 = arith.constant 0 : index
    %c4 = arith.constant 4 : index
    %c0_7 = arith.constant 0 : index
    %c0_8 = arith.constant 0 : index
    %11 = vector.load %arg1[%c0_6, %c4, %c0_7, %c0_8] : memref<8x7x7x128xbf16, #tpu.memory_space<vmem>>, vector<8x1x7x128xbf16>
    %12 = vector.shape_cast %11 : vector<8x1x7x128xbf16> to vector<8x7x128xbf16>
    %cst_9 = arith.constant 0.000000e+00 : bf16
    %13 = vector.broadcast %cst_9 : bf16 to vector<8x7x128xbf16>
    %14 = arith.maximumf %12, %13 : vector<8x7x128xbf16>
    %15 = arith.extf %14 : vector<8x7x128xbf16> to vector<8x7x128xf32>
    %16 = arith.addf %10, %15 : vector<8x7x128xf32>
    %c0_10 = arith.constant 0 : index
    %c0_11 = arith.constant 0 : index
    %c0_12 = arith.constant 0 : index
    %c0_13 = arith.constant 0 : index
    %17 = vector.load %arg1[%c0_10, %c0_11, %c0_12, %c0_13] : memref<8x7x7x128xbf16, #tpu.memory_space<vmem>>, vector<8x1x7x128xbf16>
    %18 = vector.shape_cast %17 : vector<8x1x7x128xbf16> to vector<8x7x128xbf16>
    %cst_14 = arith.constant 0.000000e+00 : bf16
    %19 = vector.broadcast %cst_14 : bf16 to vector<8x7x128xbf16>
    %20 = arith.maximumf %18, %19 : vector<8x7x128xbf16>
    %21 = arith.extf %20 : vector<8x7x128xbf16> to vector<8x7x128xf32>
    %22 = arith.addf %16, %21 : vector<8x7x128xf32>
    %c0_15 = arith.constant 0 : index
    %c1 = arith.constant 1 : index
    %c0_16 = arith.constant 0 : index
    %c0_17 = arith.constant 0 : index
    %23 = vector.load %arg1[%c0_15, %c1, %c0_16, %c0_17] : memref<8x7x7x128xbf16, #tpu.memory_space<vmem>>, vector<8x1x7x128xbf16>
    %24 = vector.shape_cast %23 : vector<8x1x7x128xbf16> to vector<8x7x128xbf16>
    %cst_18 = arith.constant 0.000000e+00 : bf16
    %25 = vector.broadcast %cst_18 : bf16 to vector<8x7x128xbf16>
    %26 = arith.maximumf %24, %25 : vector<8x7x128xbf16>
    %27 = arith.extf %26 : vector<8x7x128xbf16> to vector<8x7x128xf32>
    %28 = arith.addf %22, %27 : vector<8x7x128xf32>
    %c0_19 = arith.constant 0 : index
    %c5 = arith.constant 5 : index
    %c0_20 = arith.constant 0 : index
    %c0_21 = arith.constant 0 : index
    %29 = vector.load %arg1[%c0_19, %c5, %c0_20, %c0_21] : memref<8x7x7x128xbf16, #tpu.memory_space<vmem>>, vector<8x1x7x128xbf16>
    %30 = vector.shape_cast %29 : vector<8x1x7x128xbf16> to vector<8x7x128xbf16>
    %cst_22 = arith.constant 0.000000e+00 : bf16
    %31 = vector.broadcast %cst_22 : bf16 to vector<8x7x128xbf16>
    %32 = arith.maximumf %30, %31 : vector<8x7x128xbf16>
    %33 = arith.extf %32 : vector<8x7x128xbf16> to vector<8x7x128xf32>
    %34 = arith.addf %16, %33 : vector<8x7x128xf32>
    %c0_23 = arith.constant 0 : index
    %c6 = arith.constant 6 : index
    %c0_24 = arith.constant 0 : index
    %c0_25 = arith.constant 0 : index
    %35 = vector.load %arg1[%c0_23, %c6, %c0_24, %c0_25] : memref<8x7x7x128xbf16, #tpu.memory_space<vmem>>, vector<8x1x7x128xbf16>
    %36 = vector.shape_cast %35 : vector<8x1x7x128xbf16> to vector<8x7x128xbf16>
    %cst_26 = arith.constant 0.000000e+00 : bf16
    %37 = vector.broadcast %cst_26 : bf16 to vector<8x7x128xbf16>
    %38 = arith.maximumf %36, %37 : vector<8x7x128xbf16>
    %39 = arith.extf %38 : vector<8x7x128xbf16> to vector<8x7x128xf32>
    %40 = arith.addf %34, %39 : vector<8x7x128xf32>
    %41 = vector.extract_strided_slice %28 {offsets = [0, 2, 0], sizes = [8, 1, 128], strides = [1, 1, 1]} : vector<8x7x128xf32> to vector<8x1x128xf32>
    %42 = vector.shape_cast %41 : vector<8x1x128xf32> to vector<8x128xf32>
    %43 = vector.extract_strided_slice %28 {offsets = [0, 3, 0], sizes = [8, 1, 128], strides = [1, 1, 1]} : vector<8x7x128xf32> to vector<8x1x128xf32>
    %44 = vector.shape_cast %43 : vector<8x1x128xf32> to vector<8x128xf32>
    %45 = arith.addf %42, %44 : vector<8x128xf32>
    %46 = vector.extract_strided_slice %28 {offsets = [0, 4, 0], sizes = [8, 1, 128], strides = [1, 1, 1]} : vector<8x7x128xf32> to vector<8x1x128xf32>
    %47 = vector.shape_cast %46 : vector<8x1x128xf32> to vector<8x128xf32>
    %48 = arith.addf %45, %47 : vector<8x128xf32>
    %49 = vector.extract_strided_slice %28 {offsets = [0, 0, 0], sizes = [8, 1, 128], strides = [1, 1, 1]} : vector<8x7x128xf32> to vector<8x1x128xf32>
    %50 = vector.shape_cast %49 : vector<8x1x128xf32> to vector<8x128xf32>
    %51 = arith.addf %48, %50 : vector<8x128xf32>
    %52 = vector.extract_strided_slice %28 {offsets = [0, 1, 0], sizes = [8, 1, 128], strides = [1, 1, 1]} : vector<8x7x128xf32> to vector<8x1x128xf32>
    %53 = vector.shape_cast %52 : vector<8x1x128xf32> to vector<8x128xf32>
    %54 = arith.addf %51, %53 : vector<8x128xf32>
    %55 = vector.extract_strided_slice %28 {offsets = [0, 5, 0], sizes = [8, 1, 128], strides = [1, 1, 1]} : vector<8x7x128xf32> to vector<8x1x128xf32>
    %56 = vector.shape_cast %55 : vector<8x1x128xf32> to vector<8x128xf32>
    %57 = arith.addf %48, %56 : vector<8x128xf32>
    %58 = vector.extract_strided_slice %28 {offsets = [0, 6, 0], sizes = [8, 1, 128], strides = [1, 1, 1]} : vector<8x7x128xf32> to vector<8x1x128xf32>
    %59 = vector.shape_cast %58 : vector<8x1x128xf32> to vector<8x128xf32>
    %60 = arith.addf %57, %59 : vector<8x128xf32>
    %61 = vector.extract_strided_slice %40 {offsets = [0, 2, 0], sizes = [8, 1, 128], strides = [1, 1, 1]} : vector<8x7x128xf32> to vector<8x1x128xf32>
    %62 = vector.shape_cast %61 : vector<8x1x128xf32> to vector<8x128xf32>
    %63 = vector.extract_strided_slice %40 {offsets = [0, 3, 0], sizes = [8, 1, 128], strides = [1, 1, 1]} : vector<8x7x128xf32> to vector<8x1x128xf32>
    %64 = vector.shape_cast %63 : vector<8x1x128xf32> to vector<8x128xf32>
    %65 = arith.addf %62, %64 : vector<8x128xf32>
    %66 = vector.extract_strided_slice %40 {offsets = [0, 4, 0], sizes = [8, 1, 128], strides = [1, 1, 1]} : vector<8x7x128xf32> to vector<8x1x128xf32>
    %67 = vector.shape_cast %66 : vector<8x1x128xf32> to vector<8x128xf32>
    %68 = arith.addf %65, %67 : vector<8x128xf32>
    %69 = vector.extract_strided_slice %40 {offsets = [0, 0, 0], sizes = [8, 1, 128], strides = [1, 1, 1]} : vector<8x7x128xf32> to vector<8x1x128xf32>
    %70 = vector.shape_cast %69 : vector<8x1x128xf32> to vector<8x128xf32>
    %71 = arith.addf %68, %70 : vector<8x128xf32>
    %72 = vector.extract_strided_slice %40 {offsets = [0, 1, 0], sizes = [8, 1, 128], strides = [1, 1, 1]} : vector<8x7x128xf32> to vector<8x1x128xf32>
    %73 = vector.shape_cast %72 : vector<8x1x128xf32> to vector<8x128xf32>
    %74 = arith.addf %71, %73 : vector<8x128xf32>
    %75 = vector.extract_strided_slice %40 {offsets = [0, 5, 0], sizes = [8, 1, 128], strides = [1, 1, 1]} : vector<8x7x128xf32> to vector<8x1x128xf32>
    %76 = vector.shape_cast %75 : vector<8x1x128xf32> to vector<8x128xf32>
    %77 = arith.addf %68, %76 : vector<8x128xf32>
    %78 = vector.extract_strided_slice %40 {offsets = [0, 6, 0], sizes = [8, 1, 128], strides = [1, 1, 1]} : vector<8x7x128xf32> to vector<8x1x128xf32>
    %79 = vector.shape_cast %78 : vector<8x1x128xf32> to vector<8x128xf32>
    %80 = arith.addf %77, %79 : vector<8x128xf32>
    %c0_27 = arith.constant 0 : index
    %c0_28 = arith.constant 0 : index
    %81 = vector.load %arg2[%c0_27, %c0_28] : memref<128x128xbf16, #tpu.memory_space<vmem>>, vector<128x128xbf16>
    %c0_29 = arith.constant 0 : index
    %c0_30 = arith.constant 0 : index
    %82 = vector.load %arg3[%c0_29, %c0_30] : memref<1x128xf32, #tpu.memory_space<vmem>>, vector<1x128xf32>
    %83 = arith.truncf %54 : vector<8x128xf32> to vector<8x128xbf16>
    %cst_31 = arith.constant dense<0.000000e+00> : vector<8x128xf32>
    %84 = tpu.matmul %83, %81, %cst_31 {dimension_numbers = #tpu.dot_dimension_numbers<[1], [0], [0], [1], [0, 0, 1, 1], [], []>} : vector<8x128xbf16>, vector<128x128xbf16>, vector<8x128xf32> -> vector<8x128xf32>
    %85 = vector.broadcast %82 : vector<1x128xf32> to vector<8x128xf32>
    %86 = arith.addf %84, %85 : vector<8x128xf32>
    %cst_32 = arith.constant 0.000000e+00 : f32
    %87 = vector.broadcast %cst_32 : f32 to vector<8x128xf32>
    %88 = arith.maximumf %86, %87 : vector<8x128xf32>
    %89 = arith.truncf %88 : vector<8x128xf32> to vector<8x128xbf16>
    %c0_33 = arith.constant 0 : index
    %c0_34 = arith.constant 0 : index
    %c0_35 = arith.constant 0 : index
    %90 = vector.load %arg4[%c0_33, %c0_34, %c0_35] : memref<4x128x768xbf16, #tpu.memory_space<vmem>>, vector<1x128x768xbf16>
    %91 = vector.shape_cast %90 : vector<1x128x768xbf16> to vector<128x768xbf16>
    %cst_36 = arith.constant dense<0.000000e+00> : vector<8x768xf32>
    %92 = tpu.matmul %89, %91, %cst_36 {dimension_numbers = #tpu.dot_dimension_numbers<[1], [0], [0], [1], [0, 0, 1, 1], [], []>} : vector<8x128xbf16>, vector<128x768xbf16>, vector<8x768xf32> -> vector<8x768xf32>
    %93 = arith.truncf %60 : vector<8x128xf32> to vector<8x128xbf16>
    %cst_37 = arith.constant dense<0.000000e+00> : vector<8x128xf32>
    %94 = tpu.matmul %93, %81, %cst_37 {dimension_numbers = #tpu.dot_dimension_numbers<[1], [0], [0], [1], [0, 0, 1, 1], [], []>} : vector<8x128xbf16>, vector<128x128xbf16>, vector<8x128xf32> -> vector<8x128xf32>
    %95 = vector.broadcast %82 : vector<1x128xf32> to vector<8x128xf32>
    %96 = arith.addf %94, %95 : vector<8x128xf32>
    %cst_38 = arith.constant 0.000000e+00 : f32
    %97 = vector.broadcast %cst_38 : f32 to vector<8x128xf32>
    %98 = arith.maximumf %96, %97 : vector<8x128xf32>
    %99 = arith.truncf %98 : vector<8x128xf32> to vector<8x128xbf16>
    %c1_39 = arith.constant 1 : index
    %c0_40 = arith.constant 0 : index
    %c0_41 = arith.constant 0 : index
    %100 = vector.load %arg4[%c1_39, %c0_40, %c0_41] : memref<4x128x768xbf16, #tpu.memory_space<vmem>>, vector<1x128x768xbf16>
    %101 = vector.shape_cast %100 : vector<1x128x768xbf16> to vector<128x768xbf16>
    %cst_42 = arith.constant dense<0.000000e+00> : vector<8x768xf32>
    %102 = tpu.matmul %99, %101, %cst_42 {dimension_numbers = #tpu.dot_dimension_numbers<[1], [0], [0], [1], [0, 0, 1, 1], [], []>} : vector<8x128xbf16>, vector<128x768xbf16>, vector<8x768xf32> -> vector<8x768xf32>
    %103 = arith.addf %92, %102 : vector<8x768xf32>
    %104 = arith.truncf %74 : vector<8x128xf32> to vector<8x128xbf16>
    %cst_43 = arith.constant dense<0.000000e+00> : vector<8x128xf32>
    %105 = tpu.matmul %104, %81, %cst_43 {dimension_numbers = #tpu.dot_dimension_numbers<[1], [0], [0], [1], [0, 0, 1, 1], [], []>} : vector<8x128xbf16>, vector<128x128xbf16>, vector<8x128xf32> -> vector<8x128xf32>
    %106 = vector.broadcast %82 : vector<1x128xf32> to vector<8x128xf32>
    %107 = arith.addf %105, %106 : vector<8x128xf32>
    %cst_44 = arith.constant 0.000000e+00 : f32
    %108 = vector.broadcast %cst_44 : f32 to vector<8x128xf32>
    %109 = arith.maximumf %107, %108 : vector<8x128xf32>
    %110 = arith.truncf %109 : vector<8x128xf32> to vector<8x128xbf16>
    %c2_45 = arith.constant 2 : index
    %c0_46 = arith.constant 0 : index
    %c0_47 = arith.constant 0 : index
    %111 = vector.load %arg4[%c2_45, %c0_46, %c0_47] : memref<4x128x768xbf16, #tpu.memory_space<vmem>>, vector<1x128x768xbf16>
    %112 = vector.shape_cast %111 : vector<1x128x768xbf16> to vector<128x768xbf16>
    %cst_48 = arith.constant dense<0.000000e+00> : vector<8x768xf32>
    %113 = tpu.matmul %110, %112, %cst_48 {dimension_numbers = #tpu.dot_dimension_numbers<[1], [0], [0], [1], [0, 0, 1, 1], [], []>} : vector<8x128xbf16>, vector<128x768xbf16>, vector<8x768xf32> -> vector<8x768xf32>
    %114 = arith.addf %103, %113 : vector<8x768xf32>
    %115 = arith.truncf %80 : vector<8x128xf32> to vector<8x128xbf16>
    %cst_49 = arith.constant dense<0.000000e+00> : vector<8x128xf32>
    %116 = tpu.matmul %115, %81, %cst_49 {dimension_numbers = #tpu.dot_dimension_numbers<[1], [0], [0], [1], [0, 0, 1, 1], [], []>} : vector<8x128xbf16>, vector<128x128xbf16>, vector<8x128xf32> -> vector<8x128xf32>
    %117 = vector.broadcast %82 : vector<1x128xf32> to vector<8x128xf32>
    %118 = arith.addf %116, %117 : vector<8x128xf32>
    %cst_50 = arith.constant 0.000000e+00 : f32
    %119 = vector.broadcast %cst_50 : f32 to vector<8x128xf32>
    %120 = arith.maximumf %118, %119 : vector<8x128xf32>
    %121 = arith.truncf %120 : vector<8x128xf32> to vector<8x128xbf16>
    %c3_51 = arith.constant 3 : index
    %c0_52 = arith.constant 0 : index
    %c0_53 = arith.constant 0 : index
    %122 = vector.load %arg4[%c3_51, %c0_52, %c0_53] : memref<4x128x768xbf16, #tpu.memory_space<vmem>>, vector<1x128x768xbf16>
    %123 = vector.shape_cast %122 : vector<1x128x768xbf16> to vector<128x768xbf16>
    %cst_54 = arith.constant dense<0.000000e+00> : vector<8x768xf32>
    %124 = tpu.matmul %121, %123, %cst_54 {dimension_numbers = #tpu.dot_dimension_numbers<[1], [0], [0], [1], [0, 0, 1, 1], [], []>} : vector<8x128xbf16>, vector<128x768xbf16>, vector<8x768xf32> -> vector<8x768xf32>
    %125 = arith.addf %114, %124 : vector<8x768xf32>
    %cst_55 = arith.constant 0.000000e+00 : f32
    %126 = vector.broadcast %cst_55 : f32 to vector<8x768xf32>
    %127 = arith.maximumf %125, %126 : vector<8x768xf32>
    %128 = arith.truncf %127 : vector<8x768xf32> to vector<8x768xbf16>
    %c0_56 = arith.constant 0 : index
    %c0_57 = arith.constant 0 : index
    %129 = vector.load %arg5[%c0_56, %c0_57] : memref<768x128xbf16, #tpu.memory_space<vmem>>, vector<768x128xbf16>
    %cst_58 = arith.constant dense<0.000000e+00> : vector<8x128xf32>
    %130 = tpu.matmul %128, %129, %cst_58 {dimension_numbers = #tpu.dot_dimension_numbers<[1], [0], [0], [1], [0, 0, 1, 1], [], []>} : vector<8x768xbf16>, vector<768x128xbf16>, vector<8x128xf32> -> vector<8x128xf32>
    %c0_59 = arith.constant 0 : index
    %c0_60 = arith.constant 0 : index
    %131 = vector.load %arg6[%c0_59, %c0_60] : memref<1x128xf32, #tpu.memory_space<vmem>>, vector<1x128xf32>
    %132 = vector.broadcast %131 : vector<1x128xf32> to vector<8x128xf32>
    %133 = arith.addf %130, %132 : vector<8x128xf32>
    %c0_61 = arith.constant 0 : index
    %c0_62 = arith.constant 0 : index
    %134 = vector.load %arg7[%c0_61, %c0_62] : memref<8x128xf32, #tpu.memory_space<vmem>>, vector<8x128xf32>
    tpu.vector_store %arg7[%c0_61, %c0_62], %133 {strides = array<i32>} : memref<8x128xf32, #tpu.memory_space<vmem>>, vector<8x128xf32>,
    return
  }
  func.func @transform_0(%arg0: i32) -> (i32, i32, i32, i32) {
    %c0_i32 = arith.constant 0 : i32
    %c0_i32_0 = arith.constant 0 : i32
    %c0_i32_1 = arith.constant 0 : i32
    %c0_i32_2 = arith.constant 0 : i32
    return %arg0, %c0_i32, %c0_i32_0, %c0_i32_1 : i32, i32, i32, i32
  }
  func.func @transform_1(%arg0: i32) -> (i32, i32) {
    %c0_i32 = arith.constant 0 : i32
    %c0_i32_0 = arith.constant 0 : i32
    %c0_i32_1 = arith.constant 0 : i32
    return %c0_i32, %c0_i32_0 : i32, i32
  }
  func.func @transform_2(%arg0: i32) -> (i32, i32) {
    %c0_i32 = arith.constant 0 : i32
    %c0_i32_0 = arith.constant 0 : i32
    %c0_i32_1 = arith.constant 0 : i32
    return %c0_i32, %c0_i32_0 : i32, i32
  }
  func.func @transform_3(%arg0: i32) -> (i32, i32, i32) {
    %c0_i32 = arith.constant 0 : i32
    %c0_i32_0 = arith.constant 0 : i32
    %c0_i32_1 = arith.constant 0 : i32
    %c0_i32_2 = arith.constant 0 : i32
    return %c0_i32, %c0_i32_0, %c0_i32_1 : i32, i32, i32
  }
  func.func @transform_4(%arg0: i32) -> (i32, i32) {
    %c0_i32 = arith.constant 0 : i32
    %c0_i32_0 = arith.constant 0 : i32
    %c0_i32_1 = arith.constant 0 : i32
    return %c0_i32, %c0_i32_0 : i32, i32
  }
  func.func @transform_5(%arg0: i32) -> (i32, i32) {
    %c0_i32 = arith.constant 0 : i32
    %c0_i32_0 = arith.constant 0 : i32
    %c0_i32_1 = arith.constant 0 : i32
    return %c0_i32, %c0_i32_0 : i32, i32
  }
  func.func @transform_6(%arg0: i32) -> (i32, i32) {
    %c0_i32 = arith.constant 0 : i32
    %c0_i32_0 = arith.constant 0 : i32
    return %arg0, %c0_i32 : i32, i32
  }
}

</mosaic_0001>

<llo_original>
// kernel: tpu_custom_call.1
$region0: #{tpu_custom_call.1}
  #allocation0 [shape = 'u32[]', space=smem, size = 0x4, offset = 0x4, fixed_abs, tag = 'smem constant byte address 0x4 - core index']
  #allocation1 [shape = 'u32[144,128]{1,0:T(1,128)}', space=vmem, size = 0x12000, scoped, tag = 'internal scratch']
  %s0 = inlined_call_operand.vmem [shape: bf16[16,7,7,128], index: 0, kind: input, shape index: {}]
  %s1 = inlined_call_operand.vmem [shape: bf16[128,128], index: 1, kind: input, shape index: {}]
  %s2 = inlined_call_operand.vmem [shape: f32[1,128], index: 2, kind: input, shape index: {}]
  %s3 = inlined_call_operand.hbm [shape: bf16[4,128,768], index: 3, kind: input, shape index: {}]
  %s4 = inlined_call_operand.vmem [shape: bf16[768,128], index: 4, kind: input, shape index: {}]
  %s5 = inlined_call_operand.vmem [shape: f32[1,128], index: 5, kind: input, shape index: {}]
  %s6 = inlined_call_operand.hbm [shape: f32[16,128], index: 6, kind: output, shape index: {}]
  %s7 = sld [smem:[#allocation0]]
  $region61: #{tpu_custom_call.1} parent=0
    _
  %s9 = ssub.s32 1, %s7
  %s10 = scalar_select 0, %s9, %s7
  $region1: #{tpu_custom_call.1} parent=0
    #allocation2 [shape = 'u8[786432]{0}', space=vmem, size = 0xc0000, scoped, tag = 'input window, operand 3, single buffered']
    #allocation3 [shape = 's32[2]{0}', space=sflag, size = 0x8, scoped, tag = 'scoped memory for tpu_custom_call.1']
    #allocation4 [shape = 's32[2]{0}', space=sflag, size = 0x8, scoped, tag = 'scoped memory for tpu_custom_call.1']
    #allocation5 [shape = 'u8[8192]{0}', space=vmem, size = 0x2000, scoped, tag = 'output window, operand 0']
    %11 = vsyncpa [#allocation3], 0
    %12 = vsyncpa [#allocation4], 0
    %s13 = scalar_lea.sflag [#allocation4], 1
    %14 = vsyncpa %s13, 0
    loop: start=0, step=1, limit=4
    $region2: #{tpu_custom_call.1} parent=1 // loop_pre_header
      _
    $region3: #{tpu_custom_call.1} parent=1 // loop_header
      %s16 = sphi 0, %s20
      %p17 = scmp.ge.s32.totalorder %s16, 4
      %s26 = sphi 0, %s28
      %s29 = sphi 0, %s26
      %s30 = sphi 0, %s29
      %s46 = sphi 0, %s30
      %s50 = sphi 0, %s50
      %s52 = sphi 0, %s50
      %s53 = sphi 0, %s52
      %s67 = sphi 0, %s53
      %s71 = sphi 0, %s71
      %s73 = sphi 0, %s71
      %s74 = sphi 0, %s73
      %s88 = sphi 0, %s74
      %s92 = sphi 0, %s92
      %s94 = sphi 0, %s92
      %s95 = sphi 0, %s94
      %s109 = sphi 0, %s95
      %s113 = sphi 0, %s113
      %s115 = sphi 0, %s113
      %s116 = sphi 0, %s115
      %s130 = sphi 0, %s116
      %s134 = sphi 0, %s134
      %s136 = sphi 0, %s134
      %s137 = sphi 0, %s136
      %s151 = sphi 0, %s137
      %s157 = sphi 0, %s159
      %s160 = sphi 0, %s157
      %s161 = sphi 0, %s160
      %s177 = sphi 0, %s161
    $region4: #{tpu_custom_call.1} parent=1 // loop_header_branch
      %19 = sbr.rel (%p17) target = $region8
    $region5: #{tpu_custom_call.1} parent=1 // loop_body
      %s21 = ssub.s32 %s16, 1
      %s22 = ssub.s32 %s16, 2
      %s23 = sadd.s32 %s16, 1
      %s24 = ssub.s32 %s16, %s23
      %p25 = scmp.eq.s32.totalorder %s24, 0
      %s27 = sadd.s32 %s26, 1
      %s28 = scalar_select %p25, %s26, %s27
      %p31 = pneg %p25
      %p32 = scmp.eq.s32.totalorder %s16, 1
      %p33 = por %p31, %p32
      %p34 = scmp.ne.s32.totalorder %s26, %s29
      %p35 = scmp.eq.s32.totalorder %s16, 0
      %p36 = por %p34, %p35
      %p37 = scmp.ne.s32.totalorder %s26, %s29
      %p38 = scmp.eq.s32.totalorder %s21, 1
      %p39 = por %p37, %p38
      %p40 = scmp.ne.s32.totalorder %s29, %s30
      %p41 = scmp.eq.s32.totalorder %s21, 0
      %p42 = por %p40, %p41
      %p43 = scmp.ne.s32.totalorder %s29, %s30
      %p44 = scmp.eq.s32.totalorder %s22, 1
      %p45 = por %p43, %p44
      %p47 = scmp.ne.s32.totalorder %s30, %s46
      %p48 = scmp.eq.s32.totalorder %s22, 0
      %p49 = por %p47, %p48
      %s51 = sadd.s32 %s50, 1
      %p54 = scmp.eq.s32.totalorder %s16, 1
      %p55 = scmp.ne.s32.totalorder %s50, %s52
      %p56 = scmp.eq.s32.totalorder %s16, 0
      %p57 = por %p55, %p56
      %p58 = scmp.ne.s32.totalorder %s50, %s52
      %p59 = scmp.eq.s32.totalorder %s21, 1
      %p60 = por %p58, %p59
      %p61 = scmp.ne.s32.totalorder %s52, %s53
      %p62 = scmp.eq.s32.totalorder %s21, 0
      %p63 = por %p61, %p62
      %p64 = scmp.ne.s32.totalorder %s52, %s53
      %p65 = scmp.eq.s32.totalorder %s22, 1
      %p66 = por %p64, %p65
      %p68 = scmp.ne.s32.totalorder %s53, %s67
      %p69 = scmp.eq.s32.totalorder %s22, 0
      %p70 = por %p68, %p69
      %s72 = sadd.s32 %s71, 1
      %p75 = scmp.eq.s32.totalorder %s16, 1
      %p76 = scmp.ne.s32.totalorder %s71, %s73
      %p77 = scmp.eq.s32.totalorder %s16, 0
      %p78 = por %p76, %p77
      %p79 = scmp.ne.s32.totalorder %s71, %s73
      %p80 = scmp.eq.s32.totalorder %s21, 1
      %p81 = por %p79, %p80
      %p82 = scmp.ne.s32.totalorder %s73, %s74
      %p83 = scmp.eq.s32.totalorder %s21, 0
      %p84 = por %p82, %p83
      %p85 = scmp.ne.s32.totalorder %s73, %s74
      %p86 = scmp.eq.s32.totalorder %s22, 1
      %p87 = por %p85, %p86
      %p89 = scmp.ne.s32.totalorder %s74, %s88
      %p90 = scmp.eq.s32.totalorder %s22, 0
      %p91 = por %p89, %p90
      %s93 = sadd.s32 %s92, 1
      %p96 = scmp.eq.s32.totalorder %s16, 1
      %p97 = scmp.ne.s32.totalorder %s92, %s94
      %p98 = scmp.eq.s32.totalorder %s16, 0
      %p99 = por %p97, %p98
      %p100 = scmp.ne.s32.totalorder %s92, %s94
      %p101 = scmp.eq.s32.totalorder %s21, 1
      %p102 = por %p100, %p101
      %p103 = scmp.ne.s32.totalorder %s94, %s95
      %p104 = scmp.eq.s32.totalorder %s21, 0
      %p105 = por %p103, %p104
      %p106 = scmp.ne.s32.totalorder %s94, %s95
      %p107 = scmp.eq.s32.totalorder %s22, 1
      %p108 = por %p106, %p107
      %p110 = scmp.ne.s32.totalorder %s95, %s109
      %p111 = scmp.eq.s32.totalorder %s22, 0
      %p112 = por %p110, %p111
      %s114 = sadd.s32 %s113, 1
      %p117 = scmp.eq.s32.totalorder %s16, 1
      %p118 = scmp.ne.s32.totalorder %s113, %s115
      %p119 = scmp.eq.s32.totalorder %s16, 0
      %p120 = por %p118, %p119
      %p121 = scmp.ne.s32.totalorder %s113, %s115
      %p122 = scmp.eq.s32.totalorder %s21, 1
      %p123 = por %p121, %p122
      %p124 = scmp.ne.s32.totalorder %s115, %s116
      %p125 = scmp.eq.s32.totalorder %s21, 0
      %p126 = por %p124, %p125
      %p127 = scmp.ne.s32.totalorder %s115, %s116
      %p128 = scmp.eq.s32.totalorder %s22, 1
      %p129 = por %p127, %p128
      %p131 = scmp.ne.s32.totalorder %s116, %s130
      %p132 = scmp.eq.s32.totalorder %s22, 0
      %p133 = por %p131, %p132
      %s135 = sadd.s32 %s134, 1
      %p138 = scmp.eq.s32.totalorder %s16, 1
      %p139 = scmp.ne.s32.totalorder %s134, %s136
      %p140 = scmp.eq.s32.totalorder %s16, 0
      %p141 = por %p139, %p140
      %p142 = scmp.ne.s32.totalorder %s134, %s136
      %p143 = scmp.eq.s32.totalorder %s21, 1
      %p144 = por %p142, %p143
      %p145 = scmp.ne.s32.totalorder %s136, %s137
      %p146 = scmp.eq.s32.totalorder %s21, 0
      %p147 = por %p145, %p146
      %p148 = scmp.ne.s32.totalorder %s136, %s137
      %p149 = scmp.eq.s32.totalorder %s22, 1
      %p150 = por %p148, %p149
      %p152 = scmp.ne.s32.totalorder %s137, %s151
      %p153 = scmp.eq.s32.totalorder %s22, 0
      %p154 = por %p152, %p153
      %s155 = ssub.s32 %s16, %s23
      %p156 = scmp.eq.s32.totalorder %s155, 0
      %s158 = sadd.s32 %s157, 1
      %s159 = scalar_select %p156, %s157, %s158
      %p162 = pneg %p156
      %p163 = scmp.eq.s32.totalorder %s16, 1
      %p164 = por %p162, %p163
      %p165 = scmp.ne.s32.totalorder %s157, %s160
      %p166 = scmp.eq.s32.totalorder %s16, 0
      %p167 = por %p165, %p166
      %p168 = scmp.ne.s32.totalorder %s157, %s160
      %p169 = scmp.eq.s32.totalorder %s21, 1
      %p170 = por %p168, %p169
      %p171 = scmp.ne.s32.totalorder %s160, %s161
      %p172 = scmp.eq.s32.totalorder %s21, 0
      %p173 = por %p171, %p172
      %p174 = scmp.ne.s32.totalorder %s160, %s161
      %p175 = scmp.eq.s32.totalorder %s22, 1
      %p176 = por %p174, %p175
      %p178 = scmp.ne.s32.totalorder %s161, %s177
      %p179 = scmp.eq.s32.totalorder %s22, 0
      %p180 = por %p178, %p179
      %p181 = scmp.le.s32.totalorder 1, %s16
      %p182 = scmp.lt.s32.totalorder %s16, 3
      %p183 = pnand %p181, %p182
      %p184 = pneg %p183
      // Predicated region
      $region9: #{tpu_custom_call.1} parent=5 // pred_check
        _
      $region10: #{tpu_custom_call.1} parent=5 // pred_check_branch
        %186 = sbr.rel (%p183) target = $region12
      $region11: #{tpu_custom_call.1} parent=5 // pred_region
        %s187 = ssub.s32 %s16, 1
        // Predicated region
        $region13: #{tpu_custom_call.1} parent=11 // pred_check
          %p188 = pneg %p63
        $region14: #{tpu_custom_call.1} parent=11 // pred_check_branch
          %190 = sbr.rel (%p188) target = $region16
        $region15: #{tpu_custom_call.1} parent=11 // pred_region
          _
        $region16: #{tpu_custom_call.1} parent=11 // pred_fallthru
          _
        // Predicated region
        $region17: #{tpu_custom_call.1} parent=11 // pred_check
          %p191 = pneg %p84
        $region18: #{tpu_custom_call.1} parent=11 // pred_check_branch
          %193 = sbr.rel (%p191) target = $region20
        $region19: #{tpu_custom_call.1} parent=11 // pred_region
          _
        $region20: #{tpu_custom_call.1} parent=11 // pred_fallthru
          _
        // Predicated region
        $region21: #{tpu_custom_call.1} parent=11 // pred_check
          %p194 = pneg %p105
        $region22: #{tpu_custom_call.1} parent=11 // pred_check_branch
          %196 = sbr.rel (%p194) target = $region24
        $region23: #{tpu_custom_call.1} parent=11 // pred_region
          %s198 = ssub.s32 24576, 24576
          %199 = vsyncadd [#allocation3], %s198
          %s200 = sshll.u32 [#allocation2], 4
          %s201 = int_to_ptr.vmem [resolvable:$true] %s200
          %206 = dma.hbm_to_vmem [thread:$0]  %s3, 24576, %s201, [#allocation3], 384, 384, 24
        $region24: #{tpu_custom_call.1} parent=11 // pred_fallthru
          _
        // Predicated region
        $region25: #{tpu_custom_call.1} parent=11 // pred_check
          %p207 = pneg %p126
        $region26: #{tpu_custom_call.1} parent=11 // pred_check_branch
          %209 = sbr.rel (%p207) target = $region28
        $region27: #{tpu_custom_call.1} parent=11 // pred_region
          _
        $region28: #{tpu_custom_call.1} parent=11 // pred_fallthru
          _
        // Predicated region
        $region29: #{tpu_custom_call.1} parent=11 // pred_check
          %p210 = pneg %p147
        $region30: #{tpu_custom_call.1} parent=11 // pred_check_branch
          %212 = sbr.rel (%p210) target = $region32
        $region31: #{tpu_custom_call.1} parent=11 // pred_region
          _
        $region32: #{tpu_custom_call.1} parent=11 // pred_fallthru
          _
      $region12: #{tpu_custom_call.1} parent=5 // pred_fallthru
        _
      %p213 = scmp.lt.s32.totalorder %s16, 2
      // Predicated region
      $region33: #{tpu_custom_call.1} parent=5 // pred_check
        %p214 = pneg %p213
      $region34: #{tpu_custom_call.1} parent=5 // pred_check_branch
        %216 = sbr.rel (%p214) target = $region36
      $region35: #{tpu_custom_call.1} parent=5 // pred_region
        // Predicated region
        $region37: #{tpu_custom_call.1} parent=35 // pred_check
          %p217 = pneg %p36
        $region38: #{tpu_custom_call.1} parent=35 // pred_check_branch
          %219 = sbr.rel (%p217) target = $region40
        $region39: #{tpu_custom_call.1} parent=35 // pred_region
          %s220 = smul.u32 8, %s16
          %p221 = scmp.lt.s32.totalorder %s220, 15
          %s222 = scalar_select %p221, %s220, 15
          %s223 = smul.addr %s222, 7
          %s224 = smul.addr %s223, 4
          %s225 = scalar_lea.vmem %s0, %s224
          %s226 = smul.u32 8, %s16
        $region40: #{tpu_custom_call.1} parent=35 // pred_fallthru
          _
      $region36: #{tpu_custom_call.1} parent=5 // pred_fallthru
        _
      %p227 = scmp.le.s32.totalorder 1, %s16
      %p228 = scmp.lt.s32.totalorder %s16, 3
      %p229 = pnand %p227, %p228
      %p230 = pneg %p229
      // Predicated region
      $region41: #{tpu_custom_call.1} parent=5 // pred_check
        _
      $region42: #{tpu_custom_call.1} parent=5 // pred_check_branch
        %232 = sbr.rel (%p229) target = $region44
      $region43: #{tpu_custom_call.1} parent=5 // pred_region
        %s233 = ssub.s32 %s16, 1
        // Predicated region
        $region45: #{tpu_custom_call.1} parent=43 // pred_check
          %p234 = pneg %p105
        $region46: #{tpu_custom_call.1} parent=43 // pred_check_branch
          %236 = sbr.rel (%p234) target = $region48
        $region47: #{tpu_custom_call.1} parent=43 // pred_region
          %237 = dma.done [#allocation3], 24576
        $region48: #{tpu_custom_call.1} parent=43 // pred_fallthru
          _
        %s238 = smul.u32 8, %s21
        %p239 = scmp.lt.s32.totalorder %s238, 15
        %s240 = scalar_select %p239, %s238, 15
        %s241 = smul.addr %s240, 7
        %s242 = smul.addr %s241, 4
        %s243 = scalar_lea.vmem %s0, %s242
        %p244 = pneg %p42
        %p245 = pneg %p39
        %p246 = pneg %p63
        %p247 = pneg %p60
        %p248 = pneg %p84
        %p249 = pneg %p81
        %p250 = pneg %p105
        %p251 = pneg %p102
        %p252 = pneg %p126
        %p253 = pneg %p123
        %p254 = pneg %p147
        %p255 = pneg %p144
        %p256 = pneg %p173
        %p257 = pneg %p170
        %s258 = sand.u32 %s160, 1
        %s259 = scalar_lea.sflag [#allocation4], %s258
        %s260 = sand.u32 %s160, 1
        %s261 = smul.addr %s260, 8
        %s262 = scalar_lea.vmem [#allocation5], %s261
        %s263 = smul.u32 8, %s21
        %p264 = scmp.lt.s32.totalorder %s263, 15
        %s265 = scalar_select %p264, %s263, 15
        %s266 = smul.addr %s265, 7
        %s267 = smul.addr %s266, 4
        %s268 = scalar_lea.vmem %s0, %s267
        %s269 = smul.u32 8, %s21
        %s271 = scalar_lea.vmem %s268, 8
        %v272 = vld [vmem:[%s271] sm:$0xf]
        %v273 = vld [vmem:[%s271 + $0x1c] sm:$0xf]
        %v274 = vld [vmem:[%s271 + $0x38] sm:$0xf]
        %v275 = vld [vmem:[%s271 + $0x54] sm:$0xf]
        %v276 = vld [vmem:[%s271 + $0x70] sm:$0xf]
        %v277 = vld [vmem:[%s271 + $0x8c] sm:$0xf]
        %v278 = vld [vmem:[%s271 + $0xa8] sm:$0xf]
        %v279 = vld [vmem:[%s271 + $0xc4] sm:$0xf]
        %v280 = vmax.bf16 %v272, 0
        %v281 = vmax.bf16 %v273, 0
        %v282 = vmax.bf16 %v274, 0
        %v283 = vmax.bf16 %v275, 0
        %v284 = vmax.bf16 %v276, 0
        %v285 = vmax.bf16 %v277, 0
        %v286 = vmax.bf16 %v278, 0
        %v287 = vmax.bf16 %v279, 0
        %v288 = vunpack.c.l.bf16 %v280
        %v289 = vunpack.c.l.bf16 %v281
        %v290 = vunpack.c.l.bf16 %v282
        %v291 = vunpack.c.l.bf16 %v283
        %v292 = vunpack.c.l.bf16 %v284
        %v293 = vunpack.c.l.bf16 %v285
        %v294 = vunpack.c.l.bf16 %v286
        %v295 = vunpack.c.l.bf16 %v287
        %s296 = scalar_lea.vmem %s268, 12
        %v297 = vld [vmem:[%s296] sm:$0xf]
        %v298 = vld [vmem:[%s296 + $0x1c] sm:$0xf]
        %v299 = vld [vmem:[%s296 + $0x38] sm:$0xf]
        %v300 = vld [vmem:[%s296 + $0x54] sm:$0xf]
        %v301 = vld [vmem:[%s296 + $0x70] sm:$0xf]
        %v302 = vld [vmem:[%s296 + $0x8c] sm:$0xf]
        %v303 = vld [vmem:[%s296 + $0xa8] sm:$0xf]
        %v304 = vld [vmem:[%s296 + $0xc4] sm:$0xf]
        %v305 = vmax.bf16 %v297, 0
        %v306 = vmax.bf16 %v298, 0
        %v307 = vmax.bf16 %v299, 0
        %v308 = vmax.bf16 %v300, 0
        %v309 = vmax.bf16 %v301, 0
        %v310 = vmax.bf16 %v302, 0
        %v311 = vmax.bf16 %v303, 0
        %v312 = vmax.bf16 %v304, 0
        %v313 = vunpack.c.l.bf16 %v305
        %v314 = vunpack.c.l.bf16 %v306
        %v315 = vunpack.c.l.bf16 %v307
        %v316 = vunpack.c.l.bf16 %v308
        %v317 = vunpack.c.l.bf16 %v309
        %v318 = vunpack.c.l.bf16 %v310
        %v319 = vunpack.c.l.bf16 %v311
        %v320 = vunpack.c.l.bf16 %v312
        %v321 = vadd.f32 %v288, %v313
        %v322 = vadd.f32 %v289, %v314
        %v323 = vadd.f32 %v290, %v315
        %v324 = vadd.f32 %v291, %v316
        %v325 = vadd.f32 %v292, %v317
        %v326 = vadd.f32 %v293, %v318
        %v327 = vadd.f32 %v294, %v319
        %v328 = vadd.f32 %v295, %v320
        %s329 = scalar_lea.vmem %s268, 16
        %v330 = vld [vmem:[%s329] sm:$0xf]
        %v331 = vld [vmem:[%s329 + $0x1c] sm:$0xf]
        %v332 = vld [vmem:[%s329 + $0x38] sm:$0xf]
        %v333 = vld [vmem:[%s329 + $0x54] sm:$0xf]
        %v334 = vld [vmem:[%s329 + $0x70] sm:$0xf]
        %v335 = vld [vmem:[%s329 + $0x8c] sm:$0xf]
        %v336 = vld [vmem:[%s329 + $0xa8] sm:$0xf]
        %v337 = vld [vmem:[%s329 + $0xc4] sm:$0xf]
        %v338 = vmax.bf16 %v330, 0
        %v339 = vmax.bf16 %v331, 0
        %v340 = vmax.bf16 %v332, 0
        %v341 = vmax.bf16 %v333, 0
        %v342 = vmax.bf16 %v334, 0
        %v343 = vmax.bf16 %v335, 0
        %v344 = vmax.bf16 %v336, 0
        %v345 = vmax.bf16 %v337, 0
        %v346 = vunpack.c.l.bf16 %v338
        %v347 = vunpack.c.l.bf16 %v339
        %v348 = vunpack.c.l.bf16 %v340
        %v349 = vunpack.c.l.bf16 %v341
        %v350 = vunpack.c.l.bf16 %v342
        %v351 = vunpack.c.l.bf16 %v343
        %v352 = vunpack.c.l.bf16 %v344
        %v353 = vunpack.c.l.bf16 %v345
        %v354 = vadd.f32 %v321, %v346
        %v355 = vadd.f32 %v322, %v347
        %v356 = vadd.f32 %v323, %v348
        %v357 = vadd.f32 %v324, %v349
        %v358 = vadd.f32 %v325, %v350
        %v359 = vadd.f32 %v326, %v351
        %v360 = vadd.f32 %v327, %v352
        %v361 = vadd.f32 %v328, %v353
        %v362 = vld [vmem:[%s268] sm:$0xf]
        %v363 = vld [vmem:[%s268 + $0x1c] sm:$0xf]
        %v364 = vld [vmem:[%s268 + $0x38] sm:$0xf]
        %v365 = vld [vmem:[%s268 + $0x54] sm:$0xf]
        %v366 = vld [vmem:[%s268 + $0x70] sm:$0xf]
        %v367 = vld [vmem:[%s268 + $0x8c] sm:$0xf]
        %v368 = vld [vmem:[%s268 + $0xa8] sm:$0xf]
        %v369 = vld [vmem:[%s268 + $0xc4] sm:$0xf]
        %v370 = vmax.bf16 %v362, 0
        %v371 = vmax.bf16 %v363, 0
        %v372 = vmax.bf16 %v364, 0
        %v373 = vmax.bf16 %v365, 0
        %v374 = vmax.bf16 %v366, 0
        %v375 = vmax.bf16 %v367, 0
        %v376 = vmax.bf16 %v368, 0
        %v377 = vmax.bf16 %v369, 0
        %v378 = vunpack.c.l.bf16 %v370
        %v379 = vunpack.c.l.bf16 %v371
        %v380 = vunpack.c.l.bf16 %v372
        %v381 = vunpack.c.l.bf16 %v373
        %v382 = vunpack.c.l.bf16 %v374
        %v383 = vunpack.c.l.bf16 %v375
        %v384 = vunpack.c.l.bf16 %v376
        %v385 = vunpack.c.l.bf16 %v377
        %v386 = vadd.f32 %v354, %v378
        %v387 = vadd.f32 %v355, %v379
        %v388 = vadd.f32 %v356, %v380
        %v389 = vadd.f32 %v357, %v381
        %v390 = vadd.f32 %v358, %v382
        %v391 = vadd.f32 %v359, %v383
        %v392 = vadd.f32 %v360, %v384
        %v393 = vadd.f32 %v361, %v385
        %s394 = scalar_lea.vmem %s268, 4
        %v395 = vld [vmem:[%s394] sm:$0xf]
        %v396 = vld [vmem:[%s394 + $0x1c] sm:$0xf]
        %v397 = vld [vmem:[%s394 + $0x38] sm:$0xf]
        %v398 = vld [vmem:[%s394 + $0x54] sm:$0xf]
        %v399 = vld [vmem:[%s394 + $0x70] sm:$0xf]
        %v400 = vld [vmem:[%s394 + $0x8c] sm:$0xf]
        %v401 = vld [vmem:[%s394 + $0xa8] sm:$0xf]
        %v402 = vld [vmem:[%s394 + $0xc4] sm:$0xf]
        %v403 = vmax.bf16 %v395, 0
        %v404 = vmax.bf16 %v396, 0
        %v405 = vmax.bf16 %v397, 0
        %v406 = vmax.bf16 %v398, 0
        %v407 = vmax.bf16 %v399, 0
        %v408 = vmax.bf16 %v400, 0
        %v409 = vmax.bf16 %v401, 0
        %v410 = vmax.bf16 %v402, 0
        %v411 = vunpack.c.l.bf16 %v403
        %v412 = vunpack.c.l.bf16 %v404
        %v413 = vunpack.c.l.bf16 %v405
        %v414 = vunpack.c.l.bf16 %v406
        %v415 = vunpack.c.l.bf16 %v407
        %v416 = vunpack.c.l.bf16 %v408
        %v417 = vunpack.c.l.bf16 %v409
        %v418 = vunpack.c.l.bf16 %v410
        %v419 = vadd.f32 %v386, %v411
        %v420 = vadd.f32 %v387, %v412
        %v421 = vadd.f32 %v388, %v413
        %v422 = vadd.f32 %v389, %v414
        %v423 = vadd.f32 %v390, %v415
        %v424 = vadd.f32 %v391, %v416
        %v425 = vadd.f32 %v392, %v417
        %v426 = vadd.f32 %v393, %v418
        %s427 = scalar_lea.vmem %s268, 20
        %v428 = vld [vmem:[%s427] sm:$0xf]
        %v429 = vld [vmem:[%s427 + $0x1c] sm:$0xf]
        %v430 = vld [vmem:[%s427 + $0x38] sm:$0xf]
        %v431 = vld [vmem:[%s427 + $0x54] sm:$0xf]
        %v432 = vld [vmem:[%s427 + $0x70] sm:$0xf]
        %v433 = vld [vmem:[%s427 + $0x8c] sm:$0xf]
        %v434 = vld [vmem:[%s427 + $0xa8] sm:$0xf]
        %v435 = vld [vmem:[%s427 + $0xc4] sm:$0xf]
        %v436 = vmax.bf16 %v428, 0
        %v437 = vmax.bf16 %v429, 0
        %v438 = vmax.bf16 %v430, 0
        %v439 = vmax.bf16 %v431, 0
        %v440 = vmax.bf16 %v432, 0
        %v441 = vmax.bf16 %v433, 0
        %v442 = vmax.bf16 %v434, 0
        %v443 = vmax.bf16 %v435, 0
        %v444 = vunpack.c.l.bf16 %v436
        %v445 = vunpack.c.l.bf16 %v437
        %v446 = vunpack.c.l.bf16 %v438
        %v447 = vunpack.c.l.bf16 %v439
        %v448 = vunpack.c.l.bf16 %v440
        %v449 = vunpack.c.l.bf16 %v441
        %v450 = vunpack.c.l.bf16 %v442
        %v451 = vunpack.c.l.bf16 %v443
        %v452 = vadd.f32 %v354, %v444
        %v453 = vadd.f32 %v355, %v445
        %v454 = vadd.f32 %v356, %v446
        %v455 = vadd.f32 %v357, %v447
        %v456 = vadd.f32 %v358, %v448
        %v457 = vadd.f32 %v359, %v449
        %v458 = vadd.f32 %v360, %v450
        %v459 = vadd.f32 %v361, %v451
        %s460 = scalar_lea.vmem %s268, 24
        %v461 = vld [vmem:[%s460] sm:$0xf]
        %v462 = vld [vmem:[%s460 + $0x1c] sm:$0xf]
        %v463 = vld [vmem:[%s460 + $0x38] sm:$0xf]
        %v464 = vld [vmem:[%s460 + $0x54] sm:$0xf]
        %v465 = vld [vmem:[%s460 + $0x70] sm:$0xf]
        %v466 = vld [vmem:[%s460 + $0x8c] sm:$0xf]
        %v467 = vld [vmem:[%s460 + $0xa8] sm:$0xf]
        %v468 = vld [vmem:[%s460 + $0xc4] sm:$0xf]
        %v469 = vmax.bf16 %v461, 0
        %v470 = vmax.bf16 %v462, 0
        %v471 = vmax.bf16 %v463, 0
        %v472 = vmax.bf16 %v464, 0
        %v473 = vmax.bf16 %v465, 0
        %v474 = vmax.bf16 %v466, 0
        %v475 = vmax.bf16 %v467, 0
        %v476 = vmax.bf16 %v468, 0
        %v477 = vunpack.c.l.bf16 %v469
        %v478 = vunpack.c.l.bf16 %v470
        %v479 = vunpack.c.l.bf16 %v471
        %v480 = vunpack.c.l.bf16 %v472
        %v481 = vunpack.c.l.bf16 %v473
        %v482 = vunpack.c.l.bf16 %v474
        %v483 = vunpack.c.l.bf16 %v475
        %v484 = vunpack.c.l.bf16 %v476
        %v485 = vadd.f32 %v452, %v477
        %v486 = vadd.f32 %v453, %v478
        %v487 = vadd.f32 %v454, %v479
        %v488 = vadd.f32 %v455, %v480
        %v489 = vadd.f32 %v456, %v481
        %v490 = vadd.f32 %v457, %v482
        %v491 = vadd.f32 %v458, %v483
        %v492 = vadd.f32 %v459, %v484
        %v501 = vrot.slane %v419, 1
        %v502 = vrot.slane %v420, 1
        %v503 = vrot.slane %v421, 1
        %v504 = vrot.slane %v422, 1
        %v505 = vrot.slane %v423, 1
        %v506 = vrot.slane %v424, 1
        %v507 = vrot.slane %v425, 1
        %v508 = vrot.slane %v426, 1
        %v517 = vadd.f32 %v419, %v501
        %v518 = vadd.f32 %v420, %v502
        %v519 = vadd.f32 %v421, %v503
        %v520 = vadd.f32 %v422, %v504
        %v521 = vadd.f32 %v423, %v505
        %v522 = vadd.f32 %v424, %v506
        %v523 = vadd.f32 %v425, %v507
        %v524 = vadd.f32 %v426, %v508
        %v525 = vrot.slane %v419, 2
        %v526 = vrot.slane %v420, 2
        %v527 = vrot.slane %v421, 2
        %v528 = vrot.slane %v422, 2
        %v529 = vrot.slane %v423, 2
        %v530 = vrot.slane %v424, 2
        %v531 = vrot.slane %v425, 2
        %v532 = vrot.slane %v426, 2
        %v541 = vadd.f32 %v517, %v525
        %v542 = vadd.f32 %v518, %v526
        %v543 = vadd.f32 %v519, %v527
        %v544 = vadd.f32 %v520, %v528
        %v545 = vadd.f32 %v521, %v529
        %v546 = vadd.f32 %v522, %v530
        %v547 = vadd.f32 %v523, %v531
        %v548 = vadd.f32 %v524, %v532
        %v549 = vrot.slane %v419, 6
        %v550 = vrot.slane %v420, 6
        %v551 = vrot.slane %v421, 6
        %v552 = vrot.slane %v422, 6
        %v553 = vrot.slane %v423, 6
        %v554 = vrot.slane %v424, 6
        %v555 = vrot.slane %v425, 6
        %v556 = vrot.slane %v426, 6
        %v565 = vadd.f32 %v541, %v549
        %v566 = vadd.f32 %v542, %v550
        %v567 = vadd.f32 %v543, %v551
        %v568 = vadd.f32 %v544, %v552
        %v569 = vadd.f32 %v545, %v553
        %v570 = vadd.f32 %v546, %v554
        %v571 = vadd.f32 %v547, %v555
        %v572 = vadd.f32 %v548, %v556
        %v573 = vrot.slane %v419, 7
        %v574 = vrot.slane %v420, 7
        %v575 = vrot.slane %v421, 7
        %v576 = vrot.slane %v422, 7
        %v577 = vrot.slane %v423, 7
        %v578 = vrot.slane %v424, 7
        %v579 = vrot.slane %v425, 7
        %v580 = vrot.slane %v426, 7
        %v589 = vadd.f32 %v565, %v573
        %v590 = vadd.f32 %v566, %v574
        %v591 = vadd.f32 %v567, %v575
        %v592 = vadd.f32 %v568, %v576
        %v593 = vadd.f32 %v569, %v577
        %v594 = vadd.f32 %v570, %v578
        %v595 = vadd.f32 %v571, %v579
        %v596 = vadd.f32 %v572, %v580
        %v597 = vrot.slane %v419, 3
        %v598 = vrot.slane %v420, 3
        %v599 = vrot.slane %v421, 3
        %v600 = vrot.slane %v422, 3
        %v601 = vrot.slane %v423, 3
        %v602 = vrot.slane %v424, 3
        %v603 = vrot.slane %v425, 3
        %v604 = vrot.slane %v426, 3
        %v613 = vadd.f32 %v541, %v597
        %v614 = vadd.f32 %v542, %v598
        %v615 = vadd.f32 %v543, %v599
        %v616 = vadd.f32 %v544, %v600
        %v617 = vadd.f32 %v545, %v601
        %v618 = vadd.f32 %v546, %v602
        %v619 = vadd.f32 %v547, %v603
        %v620 = vadd.f32 %v548, %v604
        %v621 = vrot.slane %v419, 4
        %v622 = vrot.slane %v420, 4
        %v623 = vrot.slane %v421, 4
        %v624 = vrot.slane %v422, 4
        %v625 = vrot.slane %v423, 4
        %v626 = vrot.slane %v424, 4
        %v627 = vrot.slane %v425, 4
        %v628 = vrot.slane %v426, 4
        %v637 = vadd.f32 %v613, %v621
        %v638 = vadd.f32 %v614, %v622
        %v639 = vadd.f32 %v615, %v623
        %v640 = vadd.f32 %v616, %v624
        %v641 = vadd.f32 %v617, %v625
        %v642 = vadd.f32 %v618, %v626
        %v643 = vadd.f32 %v619, %v627
        %v644 = vadd.f32 %v620, %v628
        %v653 = vrot.slane %v485, 1
        %v654 = vrot.slane %v486, 1
        %v655 = vrot.slane %v487, 1
        %v656 = vrot.slane %v488, 1
        %v657 = vrot.slane %v489, 1
        %v658 = vrot.slane %v490, 1
        %v659 = vrot.slane %v491, 1
        %v660 = vrot.slane %v492, 1
        %v669 = vadd.f32 %v485, %v653
        %v670 = vadd.f32 %v486, %v654
        %v671 = vadd.f32 %v487, %v655
        %v672 = vadd.f32 %v488, %v656
        %v673 = vadd.f32 %v489, %v657
        %v674 = vadd.f32 %v490, %v658
        %v675 = vadd.f32 %v491, %v659
        %v676 = vadd.f32 %v492, %v660
        %v677 = vrot.slane %v485, 2
        %v678 = vrot.slane %v486, 2
        %v679 = vrot.slane %v487, 2
        %v680 = vrot.slane %v488, 2
        %v681 = vrot.slane %v489, 2
        %v682 = vrot.slane %v490, 2
        %v683 = vrot.slane %v491, 2
        %v684 = vrot.slane %v492, 2
        %v693 = vadd.f32 %v669, %v677
        %v694 = vadd.f32 %v670, %v678
        %v695 = vadd.f32 %v671, %v679
        %v696 = vadd.f32 %v672, %v680
        %v697 = vadd.f32 %v673, %v681
        %v698 = vadd.f32 %v674, %v682
        %v699 = vadd.f32 %v675, %v683
        %v700 = vadd.f32 %v676, %v684
        %v701 = vrot.slane %v485, 6
        %v702 = vrot.slane %v486, 6
        %v703 = vrot.slane %v487, 6
        %v704 = vrot.slane %v488, 6
        %v705 = vrot.slane %v489, 6
        %v706 = vrot.slane %v490, 6
        %v707 = vrot.slane %v491, 6
        %v708 = vrot.slane %v492, 6
        %v717 = vadd.f32 %v693, %v701
        %v718 = vadd.f32 %v694, %v702
        %v719 = vadd.f32 %v695, %v703
        %v720 = vadd.f32 %v696, %v704
        %v721 = vadd.f32 %v697, %v705
        %v722 = vadd.f32 %v698, %v706
        %v723 = vadd.f32 %v699, %v707
        %v724 = vadd.f32 %v700, %v708
        %v725 = vrot.slane %v485, 7
        %v726 = vrot.slane %v486, 7
        %v727 = vrot.slane %v487, 7
        %v728 = vrot.slane %v488, 7
        %v729 = vrot.slane %v489, 7
        %v730 = vrot.slane %v490, 7
        %v731 = vrot.slane %v491, 7
        %v732 = vrot.slane %v492, 7
        %v741 = vadd.f32 %v717, %v725
        %v742 = vadd.f32 %v718, %v726
        %v743 = vadd.f32 %v719, %v727
        %v744 = vadd.f32 %v720, %v728
        %v745 = vadd.f32 %v721, %v729
        %v746 = vadd.f32 %v722, %v730
        %v747 = vadd.f32 %v723, %v731
        %v748 = vadd.f32 %v724, %v732
        %v749 = vrot.slane %v485, 3
        %v750 = vrot.slane %v486, 3
        %v751 = vrot.slane %v487, 3
        %v752 = vrot.slane %v488, 3
        %v753 = vrot.slane %v489, 3
        %v754 = vrot.slane %v490, 3
        %v755 = vrot.slane %v491, 3
        %v756 = vrot.slane %v492, 3
        %v765 = vadd.f32 %v693, %v749
        %v766 = vadd.f32 %v694, %v750
        %v767 = vadd.f32 %v695, %v751
        %v768 = vadd.f32 %v696, %v752
        %v769 = vadd.f32 %v697, %v753
        %v770 = vadd.f32 %v698, %v754
        %v771 = vadd.f32 %v699, %v755
        %v772 = vadd.f32 %v700, %v756
        %v773 = vrot.slane %v485, 4
        %v774 = vrot.slane %v486, 4
        %v775 = vrot.slane %v487, 4
        %v776 = vrot.slane %v488, 4
        %v777 = vrot.slane %v489, 4
        %v778 = vrot.slane %v490, 4
        %v779 = vrot.slane %v491, 4
        %v780 = vrot.slane %v492, 4
        %v789 = vadd.f32 %v765, %v773
        %v790 = vadd.f32 %v766, %v774
        %v791 = vadd.f32 %v767, %v775
        %v792 = vadd.f32 %v768, %v776
        %v793 = vadd.f32 %v769, %v777
        %v794 = vadd.f32 %v770, %v778
        %v795 = vadd.f32 %v771, %v779
        %v796 = vadd.f32 %v772, %v780
        %v797 = vld [vmem:[%s1] sm:$0xf]
        %v798 = vld [vmem:[%s1 + $0x4] sm:$0xf]
        %v799 = vld [vmem:[%s1 + $0x8] sm:$0xf]
        %v800 = vld [vmem:[%s1 + $0xc] sm:$0xf]
        %v801 = vld [vmem:[%s1 + $0x10] sm:$0xf]
        %v802 = vld [vmem:[%s1 + $0x14] sm:$0xf]
        %v803 = vld [vmem:[%s1 + $0x18] sm:$0xf]
        %v804 = vld [vmem:[%s1 + $0x1c] sm:$0xf]
        %v805 = vld [vmem:[%s1 + $0x20] sm:$0xf]
        %v806 = vld [vmem:[%s1 + $0x24] sm:$0xf]
        %v807 = vld [vmem:[%s1 + $0x28] sm:$0xf]
        %v808 = vld [vmem:[%s1 + $0x2c] sm:$0xf]
        %v809 = vld [vmem:[%s1 + $0x30] sm:$0xf]
        %v810 = vld [vmem:[%s1 + $0x34] sm:$0xf]
        %v811 = vld [vmem:[%s1 + $0x38] sm:$0xf]
        %v812 = vld [vmem:[%s1 + $0x3c] sm:$0xf]
        %v813 = vld [vmem:[%s2] sm:$0x1]
        %v814 = vpack.c.bf16 %v589, %v589
        %v815 = vpack.c.bf16 %v590, %v590
        %v816 = vpack.c.bf16 %v591, %v591
        %v817 = vpack.c.bf16 %v592, %v592
        %v818 = vpack.c.bf16 %v593, %v593
        %v819 = vpack.c.bf16 %v594, %v594
        %v820 = vpack.c.bf16 %v595, %v595
        %v821 = vpack.c.bf16 %v596, %v596
        %v823 = vlaneseq
        %v824 = vshrl.u32 %v823, 7
        %v825 = vsub.s32 0, %v824
        %v826 = vrot.slane %v813, %v825
        %v836 = vunpack.c.l.b16 %v814
        %v837 = vunpack.c.l.b16 %v815
        %v838 = vunpack.c.l.b16 %v816
        %v839 = vunpack.c.l.b16 %v817
        %v840 = vunpack.c.l.b16 %v818
        %v841 = vunpack.c.l.b16 %v819
        %v842 = vunpack.c.l.b16 %v820
        %v843 = vunpack.c.l.b16 %v821
        %v844 = vrot.slane %v836, 2
        %v845 = vrot.slane %v837, 1
        %vm846 = vcmask 1041409
        %v847 = vsel %vm846, %v845, %v844
        %vm848 = vcmask 1042434
        %v849 = vsel %vm848, %v838, %v847
        %v850 = vrot.slane %v839, 7
        %vm851 = vcmask 1043459
        %v852 = vsel %vm851, %v850, %v849
        %v853 = vrot.slane %v840, 6
        %vm854 = vcmask 1044484
        %v855 = vsel %vm854, %v853, %v852
        %v856 = vrot.slane %v841, 5
        %vm857 = vcmask 1045509
        %v858 = vsel %vm857, %v856, %v855
        %v859 = vrot.slane %v842, 4
        %vm860 = vcmask 1046534
        %v861 = vsel %vm860, %v859, %v858
        %v862 = vrot.slane %v843, 3
        %vm863 = vcmask 1047559
        %v864 = vsel %vm863, %v862, %v861
        %v865 = vpack.c.b16 %v864, %v864
        %v883 = vunpack.c.l.b16 %v797
        %v884 = vunpack.c.l.b16 %v798
        %v885 = vunpack.c.l.b16 %v799
        %v886 = vunpack.c.l.b16 %v800
        %v887 = vunpack.c.l.b16 %v801
        %v888 = vunpack.c.l.b16 %v802
        %v889 = vunpack.c.l.b16 %v803
        %v890 = vunpack.c.l.b16 %v804
        %v891 = vunpack.c.l.b16 %v805
        %v892 = vunpack.c.l.b16 %v806
        %v893 = vunpack.c.l.b16 %v807
        %v894 = vunpack.c.l.b16 %v808
        %v895 = vunpack.c.l.b16 %v809
        %v896 = vunpack.c.l.b16 %v810
        %v897 = vunpack.c.l.b16 %v811
        %v898 = vunpack.c.l.b16 %v812
        %v899 = vpack.c.b16 %v884, %v883
        %v900 = vpack.c.b16 %v886, %v885
        %v901 = vpack.c.b16 %v888, %v887
        %v902 = vpack.c.b16 %v890, %v889
        %v903 = vpack.c.b16 %v892, %v891
        %v904 = vpack.c.b16 %v894, %v893
        %v905 = vpack.c.b16 %v896, %v895
        %v906 = vpack.c.b16 %v898, %v897
        %915 = vmatprep.subr.bf16.mxu0 0
        %916 = vmatpush1.bf16.msra.mxu0 %v899
        %917 = vmatprep.subr.bf16.mxu0 0
        %918 = vmatpush1.bf16.msra.mxu0 %v900
        %919 = vmatprep.subr.bf16.mxu0 0
        %920 = vmatpush1.bf16.msra.mxu0 %v901
        %921 = vmatprep.subr.bf16.mxu0 0
        %922 = vmatpush1.bf16.msra.mxu0 %v902
        %923 = vmatprep.subr.bf16.mxu0 0
        %924 = vmatpush1.bf16.msra.mxu0 %v903
        %925 = vmatprep.subr.bf16.mxu0 0
        %926 = vmatpush1.bf16.msra.mxu0 %v904
        %927 = vmatprep.subr.bf16.mxu0 0
        %928 = vmatpush1.bf16.msra.mxu0 %v905
        %929 = vmatprep.subr.bf16.mxu0 0
        %930 = vmatpush1.bf16.msra.mxu0 %v906
        %931 = vmatprep.subr.bf16.mxu0 0
        %932 = vmatpush1.bf16.msra.mxu0 0
        %933 = vmatprep.subr.bf16.mxu0 0
        %934 = vmatpush1.bf16.msra.mxu0 0
        %935 = vmatprep.subr.bf16.mxu0 0
        %936 = vmatpush1.bf16.msra.mxu0 0
        %937 = vmatprep.subr.bf16.mxu0 0
        %938 = vmatpush1.bf16.msra.mxu0 0
        %939 = vmatprep.subr.bf16.mxu0 0
        %940 = vmatpush1.bf16.msra.mxu0 0
        %941 = vmatprep.subr.bf16.mxu0 0
        %942 = vmatpush1.bf16.msra.mxu0 0
        %943 = vmatprep.subr.bf16.mxu0 0
        %944 = vmatpush1.bf16.msra.mxu0 0
        %945 = vmatprep.subr.bf16.mxu0 0
        %946 = vmatpush1.bf16.msra.mxu0 0
        %947 = vmatprep.mubr.bf16.mxu0 0
        %948 = vmatmul.mubr.bf16.gmra.mrb[0].mxu0 %v865
        %v949 = vpop.f32.mrb[0].mxu0
        %v950 = vadd.f32 %v826, %v949
        %v951 = vpop.f32.mrb[0].mxu0
        %v952 = vpop.f32.mrb[0].mxu0
        %v953 = vpop.f32.mrb[0].mxu0
        %954 = vdwg.mxu0
        %v955 = vmax.f32 %v950, 0.0
        %v956 = vpack.c.bf16 %v955, %v955
        %v957 = vld [vmem:[#allocation2] sm:$0xff]
        %v958 = vld [vmem:[#allocation2 + $0x8] sm:$0xff]
        %v959 = vld [vmem:[#allocation2 + $0x10] sm:$0xff]
        %v960 = vld [vmem:[#allocation2 + $0x18] sm:$0xff]
        %v961 = vld [vmem:[#allocation2 + $0x20] sm:$0xff]
        %v962 = vld [vmem:[#allocation2 + $0x28] sm:$0xff]
        %v963 = vld [vmem:[#allocation2 + $0x30] sm:$0xff]
        %v964 = vld [vmem:[#allocation2 + $0x38] sm:$0xff]
        %v965 = vld [vmem:[#allocation2 + $0x40] sm:$0xff]
        %v966 = vld [vmem:[#allocation2 + $0x48] sm:$0xff]
        %v967 = vld [vmem:[#allocation2 + $0x50] sm:$0xff]
        %v968 = vld [vmem:[#allocation2 + $0x58] sm:$0xff]
        %v969 = vld [vmem:[#allocation2 + $0x60] sm:$0xff]
        %v970 = vld [vmem:[#allocation2 + $0x68] sm:$0xff]
        %v971 = vld [vmem:[#allocation2 + $0x70] sm:$0xff]
        %v972 = vld [vmem:[#allocation2 + $0x78] sm:$0xff]
        %v973 = vld [vmem:[#allocation2 + $0x80] sm:$0xff]
        %v974 = vld [vmem:[#allocation2 + $0x88] sm:$0xff]
        %v975 = vld [vmem:[#allocation2 + $0x90] sm:$0xff]
        %v976 = vld [vmem:[#allocation2 + $0x98] sm:$0xff]
        %v977 = vld [vmem:[#allocation2 + $0xa0] sm:$0xff]
        %v978 = vld [vmem:[#allocation2 + $0xa8] sm:$0xff]
        %v979 = vld [vmem:[#allocation2 + $0xb0] sm:$0xff]
        %v980 = vld [vmem:[#allocation2 + $0xb8] sm:$0xff]
        %v981 = vld [vmem:[#allocation2 + $0xc0] sm:$0xff]
        %v982 = vld [vmem:[#allocation2 + $0xc8] sm:$0xff]
        %v983 = vld [vmem:[#allocation2 + $0xd0] sm:$0xff]
        %v984 = vld [vmem:[#allocation2 + $0xd8] sm:$0xff]
        %v985 = vld [vmem:[#allocation2 + $0xe0] sm:$0xff]
        %v986 = vld [vmem:[#allocation2 + $0xe8] sm:$0xff]
        %v987 = vld [vmem:[#allocation2 + $0xf0] sm:$0xff]
        %v988 = vld [vmem:[#allocation2 + $0xf8] sm:$0xff]
        %v989 = vld [vmem:[#allocation2 + $0x100] sm:$0xff]
        %v990 = vld [vmem:[#allocation2 + $0x108] sm:$0xff]
        %v991 = vld [vmem:[#allocation2 + $0x110] sm:$0xff]
        %v992 = vld [vmem:[#allocation2 + $0x118] sm:$0xff]
        %v993 = vld [vmem:[#allocation2 + $0x120] sm:$0xff]
        %v994 = vld [vmem:[#allocation2 + $0x128] sm:$0xff]
        %v995 = vld [vmem:[#allocation2 + $0x130] sm:$0xff]
        %v996 = vld [vmem:[#allocation2 + $0x138] sm:$0xff]
        %v997 = vld [vmem:[#allocation2 + $0x140] sm:$0xff]
        %v998 = vld [vmem:[#allocation2 + $0x148] sm:$0xff]
        %v999 = vld [vmem:[#allocation2 + $0x150] sm:$0xff]
        %v1000 = vld [vmem:[#allocation2 + $0x158] sm:$0xff]
        %v1001 = vld [vmem:[#allocation2 + $0x160] sm:$0xff]
        %v1002 = vld [vmem:[#allocation2 + $0x168] sm:$0xff]
        %v1003 = vld [vmem:[#allocation2 + $0x170] sm:$0xff]
        %v1004 = vld [vmem:[#allocation2 + $0x178] sm:$0xff]
        %v1005 = vpack.c.bf16 %v637, %v637
        %v1006 = vpack.c.bf16 %v638, %v638
        %v1007 = vpack.c.bf16 %v639, %v639
        %v1008 = vpack.c.bf16 %v640, %v640
        %v1009 = vpack.c.bf16 %v641, %v641
        %v1010 = vpack.c.bf16 %v642, %v642
        %v1011 = vpack.c.bf16 %v643, %v643
        %v1012 = vpack.c.bf16 %v644, %v644
        %v1021 = vunpack.c.l.b16 %v1005
        %v1022 = vunpack.c.l.b16 %v1006
        %v1023 = vunpack.c.l.b16 %v1007
        %v1024 = vunpack.c.l.b16 %v1008
        %v1025 = vunpack.c.l.b16 %v1009
        %v1026 = vunpack.c.l.b16 %v1010
        %v1027 = vunpack.c.l.b16 %v1011
        %v1028 = vunpack.c.l.b16 %v1012
        %v1029 = vrot.slane %v1021, 2
        %v1030 = vrot.slane %v1022, 1
        %v1031 = vsel %vm846, %v1030, %v1029
        %v1032 = vsel %vm848, %v1023, %v1031
        %v1033 = vrot.slane %v1024, 7
        %v1034 = vsel %vm851, %v1033, %v1032
        %v1035 = vrot.slane %v1025, 6
        %v1036 = vsel %vm854, %v1035, %v1034
        %v1037 = vrot.slane %v1026, 5
        %v1038 = vsel %vm857, %v1037, %v1036
        %v1039 = vrot.slane %v1027, 4
        %v1040 = vsel %vm860, %v1039, %v1038
        %v1041 = vrot.slane %v1028, 3
        %v1042 = vsel %vm863, %v1041, %v1040
        %v1043 = vpack.c.b16 %v1042, %v1042
        %1045 = vmatprep.subr.bf16.mxu0 0
        %1046 = vmatpush1.bf16.msra.mxu0 %v899
        %1047 = vmatprep.subr.bf16.mxu0 0
        %1048 = vmatpush1.bf16.msra.mxu0 %v900
        %1049 = vmatprep.subr.bf16.mxu0 0
        %1050 = vmatpush1.bf16.msra.mxu0 %v901
        %1051 = vmatprep.subr.bf16.mxu0 0
        %1052 = vmatpush1.bf16.msra.mxu0 %v902
        %1053 = vmatprep.subr.bf16.mxu0 0
        %1054 = vmatpush1.bf16.msra.mxu0 %v903
        %1055 = vmatprep.subr.bf16.mxu0 0
        %1056 = vmatpush1.bf16.msra.mxu0 %v904
        %1057 = vmatprep.subr.bf16.mxu0 0
        %1058 = vmatpush1.bf16.msra.mxu0 %v905
        %1059 = vmatprep.subr.bf16.mxu0 0
        %1060 = vmatpush1.bf16.msra.mxu0 %v906
        %1061 = vmatprep.subr.bf16.mxu0 0
        %1062 = vmatpush1.bf16.msra.mxu0 0
        %1063 = vmatprep.subr.bf16.mxu0 0
        %1064 = vmatpush1.bf16.msra.mxu0 0
        %1065 = vmatprep.subr.bf16.mxu0 0
        %1066 = vmatpush1.bf16.msra.mxu0 0
        %1067 = vmatprep.subr.bf16.mxu0 0
        %1068 = vmatpush1.bf16.msra.mxu0 0
        %1069 = vmatprep.subr.bf16.mxu0 0
        %1070 = vmatpush1.bf16.msra.mxu0 0
        %1071 = vmatprep.subr.bf16.mxu0 0
        %1072 = vmatpush1.bf16.msra.mxu0 0
        %1073 = vmatprep.subr.bf16.mxu0 0
        %1074 = vmatpush1.bf16.msra.mxu0 0
        %1075 = vmatprep.subr.bf16.mxu0 0
        %1076 = vmatpush1.bf16.msra.mxu0 0
        %1077 = vmatprep.mubr.bf16.mxu0 0
        %1078 = vmatmul.mubr.bf16.gmra.mrb[0].mxu0 %v1043
        %v1079 = vpop.f32.mrb[0].mxu0
        %v1080 = vadd.f32 %v826, %v1079
        %v1081 = vpop.f32.mrb[0].mxu0
        %v1082 = vpop.f32.mrb[0].mxu0
        %v1083 = vpop.f32.mrb[0].mxu0
        %1084 = vdwg.mxu0
        %v1085 = vmax.f32 %v1080, 0.0
        %v1086 = vpack.c.bf16 %v1085, %v1085
        %s1087 = scalar_lea.vmem [#allocation2], 384
        %v1088 = vld [vmem:[%s1087] sm:$0xff]
        %v1089 = vld [vmem:[%s1087 + $0x8] sm:$0xff]
        %v1090 = vld [vmem:[%s1087 + $0x10] sm:$0xff]
        %v1091 = vld [vmem:[%s1087 + $0x18] sm:$0xff]
        %v1092 = vld [vmem:[%s1087 + $0x20] sm:$0xff]
        %v1093 = vld [vmem:[%s1087 + $0x28] sm:$0xff]
        %v1094 = vld [vmem:[%s1087 + $0x30] sm:$0xff]
        %v1095 = vld [vmem:[%s1087 + $0x38] sm:$0xff]
        %v1096 = vld [vmem:[%s1087 + $0x40] sm:$0xff]
        %v1097 = vld [vmem:[%s1087 + $0x48] sm:$0xff]
        %v1098 = vld [vmem:[%s1087 + $0x50] sm:$0xff]
        %v1099 = vld [vmem:[%s1087 + $0x58] sm:$0xff]
        %v1100 = vld [vmem:[%s1087 + $0x60] sm:$0xff]
        %v1101 = vld [vmem:[%s1087 + $0x68] sm:$0xff]
        %v1102 = vld [vmem:[%s1087 + $0x70] sm:$0xff]
        %v1103 = vld [vmem:[%s1087 + $0x78] sm:$0xff]
        %v1104 = vld [vmem:[%s1087 + $0x80] sm:$0xff]
        %v1105 = vld [vmem:[%s1087 + $0x88] sm:$0xff]
        %v1106 = vld [vmem:[%s1087 + $0x90] sm:$0xff]
        %v1107 = vld [vmem:[%s1087 + $0x98] sm:$0xff]
        %v1108 = vld [vmem:[%s1087 + $0xa0] sm:$0xff]
        %v1109 = vld [vmem:[%s1087 + $0xa8] sm:$0xff]
        %v1110 = vld [vmem:[%s1087 + $0xb0] sm:$0xff]
        %v1111 = vld [vmem:[%s1087 + $0xb8] sm:$0xff]
        %v1112 = vld [vmem:[%s1087 + $0xc0] sm:$0xff]
        %v1113 = vld [vmem:[%s1087 + $0xc8] sm:$0xff]
        %v1114 = vld [vmem:[%s1087 + $0xd0] sm:$0xff]
        %v1115 = vld [vmem:[%s1087 + $0xd8] sm:$0xff]
        %v1116 = vld [vmem:[%s1087 + $0xe0] sm:$0xff]
        %v1117 = vld [vmem:[%s1087 + $0xe8] sm:$0xff]
        %v1118 = vld [vmem:[%s1087 + $0xf0] sm:$0xff]
        %v1119 = vld [vmem:[%s1087 + $0xf8] sm:$0xff]
        %v1120 = vld [vmem:[%s1087 + $0x100] sm:$0xff]
        %v1121 = vld [vmem:[%s1087 + $0x108] sm:$0xff]
        %v1122 = vld [vmem:[%s1087 + $0x110] sm:$0xff]
        %v1123 = vld [vmem:[%s1087 + $0x118] sm:$0xff]
        %v1124 = vld [vmem:[%s1087 + $0x120] sm:$0xff]
        %v1125 = vld [vmem:[%s1087 + $0x128] sm:$0xff]
        %v1126 = vld [vmem:[%s1087 + $0x130] sm:$0xff]
        %v1127 = vld [vmem:[%s1087 + $0x138] sm:$0xff]
        %v1128 = vld [vmem:[%s1087 + $0x140] sm:$0xff]
        %v1129 = vld [vmem:[%s1087 + $0x148] sm:$0xff]
        %v1130 = vld [vmem:[%s1087 + $0x150] sm:$0xff]
        %v1131 = vld [vmem:[%s1087 + $0x158] sm:$0xff]
        %v1132 = vld [vmem:[%s1087 + $0x160] sm:$0xff]
        %v1133 = vld [vmem:[%s1087 + $0x168] sm:$0xff]
        %v1134 = vld [vmem:[%s1087 + $0x170] sm:$0xff]
        %v1135 = vld [vmem:[%s1087 + $0x178] sm:$0xff]
        %v1184 = vunpack.c.l.b16 %v1088
        %v1185 = vunpack.c.h.b16 %v1088
        %v1186 = vunpack.c.l.b16 %v1089
        %v1187 = vunpack.c.h.b16 %v1089
        %v1188 = vunpack.c.l.b16 %v1090
        %v1189 = vunpack.c.h.b16 %v1090
        %v1190 = vunpack.c.l.b16 %v1091
        %v1191 = vunpack.c.h.b16 %v1091
        %v1192 = vunpack.c.l.b16 %v1092
        %v1193 = vunpack.c.h.b16 %v1092
        %v1194 = vunpack.c.l.b16 %v1093
        %v1195 = vunpack.c.h.b16 %v1093
        %v1196 = vunpack.c.l.b16 %v1094
        %v1197 = vunpack.c.h.b16 %v1094
        %v1198 = vunpack.c.l.b16 %v1095
        %v1199 = vunpack.c.h.b16 %v1095
        %v1200 = vunpack.c.l.b16 %v1096
        %v1201 = vunpack.c.h.b16 %v1096
        %v1202 = vunpack.c.l.b16 %v1097
        %v1203 = vunpack.c.h.b16 %v1097
        %v1204 = vunpack.c.l.b16 %v1098
        %v1205 = vunpack.c.h.b16 %v1098
        %v1206 = vunpack.c.l.b16 %v1099
        %v1207 = vunpack.c.h.b16 %v1099
        %v1208 = vunpack.c.l.b16 %v1100
        %v1209 = vunpack.c.h.b16 %v1100
        %v1210 = vunpack.c.l.b16 %v1101
        %v1211 = vunpack.c.h.b16 %v1101
        %v1212 = vunpack.c.l.b16 %v1102
        %v1213 = vunpack.c.h.b16 %v1102
        %v1214 = vunpack.c.l.b16 %v1103
        %v1215 = vunpack.c.h.b16 %v1103
        %v1216 = vunpack.c.l.b16 %v1104
        %v1217 = vunpack.c.h.b16 %v1104
        %v1218 = vunpack.c.l.b16 %v1105
        %v1219 = vunpack.c.h.b16 %v1105
        %v1220 = vunpack.c.l.b16 %v1106
        %v1221 = vunpack.c.h.b16 %v1106
        %v1222 = vunpack.c.l.b16 %v1107
        %v1223 = vunpack.c.h.b16 %v1107
        %v1224 = vunpack.c.l.b16 %v1108
        %v1225 = vunpack.c.h.b16 %v1108
        %v1226 = vunpack.c.l.b16 %v1109
        %v1227 = vunpack.c.h.b16 %v1109
        %v1228 = vunpack.c.l.b16 %v1110
        %v1229 = vunpack.c.h.b16 %v1110
        %v1230 = vunpack.c.l.b16 %v1111
        %v1231 = vunpack.c.h.b16 %v1111
        %v1232 = vunpack.c.l.b16 %v1112
        %v1233 = vunpack.c.h.b16 %v1112
        %v1234 = vunpack.c.l.b16 %v1113
        %v1235 = vunpack.c.h.b16 %v1113
        %v1236 = vunpack.c.l.b16 %v1114
        %v1237 = vunpack.c.h.b16 %v1114
        %v1238 = vunpack.c.l.b16 %v1115
        %v1239 = vunpack.c.h.b16 %v1115
        %v1240 = vunpack.c.l.b16 %v1116
        %v1241 = vunpack.c.h.b16 %v1116
        %v1242 = vunpack.c.l.b16 %v1117
        %v1243 = vunpack.c.h.b16 %v1117
        %v1244 = vunpack.c.l.b16 %v1118
        %v1245 = vunpack.c.h.b16 %v1118
        %v1246 = vunpack.c.l.b16 %v1119
        %v1247 = vunpack.c.h.b16 %v1119
        %v1248 = vunpack.c.l.b16 %v1120
        %v1249 = vunpack.c.h.b16 %v1120
        %v1250 = vunpack.c.l.b16 %v1121
        %v1251 = vunpack.c.h.b16 %v1121
        %v1252 = vunpack.c.l.b16 %v1122
        %v1253 = vunpack.c.h.b16 %v1122
        %v1254 = vunpack.c.l.b16 %v1123
        %v1255 = vunpack.c.h.b16 %v1123
        %v1256 = vunpack.c.l.b16 %v1124
        %v1257 = vunpack.c.h.b16 %v1124
        %v1258 = vunpack.c.l.b16 %v1125
        %v1259 = vunpack.c.h.b16 %v1125
        %v1260 = vunpack.c.l.b16 %v1126
        %v1261 = vunpack.c.h.b16 %v1126
        %v1262 = vunpack.c.l.b16 %v1127
        %v1263 = vunpack.c.h.b16 %v1127
        %v1264 = vunpack.c.l.b16 %v1128
        %v1265 = vunpack.c.h.b16 %v1128
        %v1266 = vunpack.c.l.b16 %v1129
        %v1267 = vunpack.c.h.b16 %v1129
        %v1268 = vunpack.c.l.b16 %v1130
        %v1269 = vunpack.c.h.b16 %v1130
        %v1270 = vunpack.c.l.b16 %v1131
        %v1271 = vunpack.c.h.b16 %v1131
        %v1272 = vunpack.c.l.b16 %v1132
        %v1273 = vunpack.c.h.b16 %v1132
        %v1274 = vunpack.c.l.b16 %v1133
        %v1275 = vunpack.c.h.b16 %v1133
        %v1276 = vunpack.c.l.b16 %v1134
        %v1277 = vunpack.c.h.b16 %v1134
        %v1278 = vunpack.c.l.b16 %v1135
        %v1279 = vunpack.c.h.b16 %v1135
        %v1280 = vpack.c.b16 %v1190, %v1184
        %v1281 = vpack.c.b16 %v1191, %v1185
        %v1282 = vpack.c.b16 %v1192, %v1186
        %v1283 = vpack.c.b16 %v1193, %v1187
        %v1284 = vpack.c.b16 %v1194, %v1188
        %v1285 = vpack.c.b16 %v1195, %v1189
        %v1286 = vpack.c.b16 %v1202, %v1196
        %v1287 = vpack.c.b16 %v1203, %v1197
        %v1288 = vpack.c.b16 %v1204, %v1198
        %v1289 = vpack.c.b16 %v1205, %v1199
        %v1290 = vpack.c.b16 %v1206, %v1200
        %v1291 = vpack.c.b16 %v1207, %v1201
        %v1292 = vpack.c.b16 %v1214, %v1208
        %v1293 = vpack.c.b16 %v1215, %v1209
        %v1294 = vpack.c.b16 %v1216, %v1210
        %v1295 = vpack.c.b16 %v1217, %v1211
        %v1296 = vpack.c.b16 %v1218, %v1212
        %v1297 = vpack.c.b16 %v1219, %v1213
        %v1298 = vpack.c.b16 %v1226, %v1220
        %v1299 = vpack.c.b16 %v1227, %v1221
        %v1300 = vpack.c.b16 %v1228, %v1222
        %v1301 = vpack.c.b16 %v1229, %v1223
        %v1302 = vpack.c.b16 %v1230, %v1224
        %v1303 = vpack.c.b16 %v1231, %v1225
        %v1304 = vpack.c.b16 %v1238, %v1232
        %v1305 = vpack.c.b16 %v1239, %v1233
        %v1306 = vpack.c.b16 %v1240, %v1234
        %v1307 = vpack.c.b16 %v1241, %v1235
        %v1308 = vpack.c.b16 %v1242, %v1236
        %v1309 = vpack.c.b16 %v1243, %v1237
        %v1310 = vpack.c.b16 %v1250, %v1244
        %v1311 = vpack.c.b16 %v1251, %v1245
        %v1312 = vpack.c.b16 %v1252, %v1246
        %v1313 = vpack.c.b16 %v1253, %v1247
        %v1314 = vpack.c.b16 %v1254, %v1248
        %v1315 = vpack.c.b16 %v1255, %v1249
        %v1316 = vpack.c.b16 %v1262, %v1256
        %v1317 = vpack.c.b16 %v1263, %v1257
        %v1318 = vpack.c.b16 %v1264, %v1258
        %v1319 = vpack.c.b16 %v1265, %v1259
        %v1320 = vpack.c.b16 %v1266, %v1260
        %v1321 = vpack.c.b16 %v1267, %v1261
        %v1322 = vpack.c.b16 %v1274, %v1268
        %v1323 = vpack.c.b16 %v1275, %v1269
        %v1324 = vpack.c.b16 %v1276, %v1270
        %v1325 = vpack.c.b16 %v1277, %v1271
        %v1326 = vpack.c.b16 %v1278, %v1272
        %v1327 = vpack.c.b16 %v1279, %v1273
        %1376 = vmatprep.subr.bf16.mxu0 %v1281
        %1377 = vmatpush1.bf16.msra.mxu0 %v1280
        %1378 = vmatprep.subr.bf16.mxu0 %v1287
        %1379 = vmatpush1.bf16.msra.mxu0 %v1286
        %1380 = vmatprep.subr.bf16.mxu0 %v1293
        %1381 = vmatpush1.bf16.msra.mxu0 %v1292
        %1382 = vmatprep.subr.bf16.mxu0 %v1299
        %1383 = vmatpush1.bf16.msra.mxu0 %v1298
        %1384 = vmatprep.subr.bf16.mxu0 %v1305
        %1385 = vmatpush1.bf16.msra.mxu0 %v1304
        %1386 = vmatprep.subr.bf16.mxu0 %v1311
        %1387 = vmatpush1.bf16.msra.mxu0 %v1310
        %1388 = vmatprep.subr.bf16.mxu0 %v1317
        %1389 = vmatpush1.bf16.msra.mxu0 %v1316
        %1390 = vmatprep.subr.bf16.mxu0 %v1323
        %1391 = vmatpush1.bf16.msra.mxu0 %v1322
        %1392 = vmatprep.subr.bf16.mxu0 0
        %1393 = vmatpush1.bf16.msra.mxu0 0
        %1394 = vmatprep.subr.bf16.mxu0 0
        %1395 = vmatpush1.bf16.msra.mxu0 0
        %1396 = vmatprep.subr.bf16.mxu0 0
        %1397 = vmatpush1.bf16.msra.mxu0 0
        %1398 = vmatprep.subr.bf16.mxu0 0
        %1399 = vmatpush1.bf16.msra.mxu0 0
        %1400 = vmatprep.subr.bf16.mxu0 0
        %1401 = vmatpush1.bf16.msra.mxu0 0
        %1402 = vmatprep.subr.bf16.mxu0 0
        %1403 = vmatpush1.bf16.msra.mxu0 0
        %1404 = vmatprep.subr.bf16.mxu0 0
        %1405 = vmatpush1.bf16.msra.mxu0 0
        %1406 = vmatprep.subr.bf16.mxu0 0
        %1407 = vmatpush1.bf16.msra.mxu0 0
        %1408 = vmatprep.mubr.bf16.mxu0 0
        %1409 = vmatmul.mubr.bf16.gmra.mrb[0].mxu0 %v1086
        %v1410 = vpop.f32.mrb[0].mxu0
        %v1411 = vadd.f32 0.0, %v1410
        %v1412 = vpop.f32.mrb[0].mxu0
        %v1413 = vadd.f32 0.0, %v1412
        %v1414 = vpop.f32.mrb[0].mxu0
        %v1415 = vpop.f32.mrb[0].mxu0
        %1416 = vdwg.mxu0
        %1417 = vmatprep.subr.bf16.mxu0 %v1283
        %1418 = vmatpush1.bf16.msra.mxu0 %v1282
        %1419 = vmatprep.subr.bf16.mxu0 %v1289
        %1420 = vmatpush1.bf16.msra.mxu0 %v1288
        %1421 = vmatprep.subr.bf16.mxu0 %v1295
        %1422 = vmatpush1.bf16.msra.mxu0 %v1294
        %1423 = vmatprep.subr.bf16.mxu0 %v1301
        %1424 = vmatpush1.bf16.msra.mxu0 %v1300
        %1425 = vmatprep.subr.bf16.mxu0 %v1307
        %1426 = vmatpush1.bf16.msra.mxu0 %v1306
        %1427 = vmatprep.subr.bf16.mxu0 %v1313
        %1428 = vmatpush1.bf16.msra.mxu0 %v1312
        %1429 = vmatprep.subr.bf16.mxu0 %v1319
        %1430 = vmatpush1.bf16.msra.mxu0 %v1318
        %1431 = vmatprep.subr.bf16.mxu0 %v1325
        %1432 = vmatpush1.bf16.msra.mxu0 %v1324
        %1433 = vmatprep.subr.bf16.mxu0 0
        %1434 = vmatpush1.bf16.msra.mxu0 0
        %1435 = vmatprep.subr.bf16.mxu0 0
        %1436 = vmatpush1.bf16.msra.mxu0 0
        %1437 = vmatprep.subr.bf16.mxu0 0
        %1438 = vmatpush1.bf16.msra.mxu0 0
        %1439 = vmatprep.subr.bf16.mxu0 0
        %1440 = vmatpush1.bf16.msra.mxu0 0
        %1441 = vmatprep.subr.bf16.mxu0 0
        %1442 = vmatpush1.bf16.msra.mxu0 0
        %1443 = vmatprep.subr.bf16.mxu0 0
        %1444 = vmatpush1.bf16.msra.mxu0 0
        %1445 = vmatprep.subr.bf16.mxu0 0
        %1446 = vmatpush1.bf16.msra.mxu0 0
        %1447 = vmatprep.subr.bf16.mxu0 0
        %1448 = vmatpush1.bf16.msra.mxu0 0
        %1449 = vmatprep.mubr.bf16.mxu0 0
        %1450 = vmatmul.mubr.bf16.gmra.mrb[0].mxu0 %v1086
        %v1451 = vpop.f32.mrb[0].mxu0
        %v1452 = vadd.f32 0.0, %v1451
        %v1453 = vpop.f32.mrb[0].mxu0
        %v1454 = vadd.f32 0.0, %v1453
        %v1455 = vpop.f32.mrb[0].mxu0
        %v1456 = vpop.f32.mrb[0].mxu0
        %1457 = vdwg.mxu0
        %1458 = vmatprep.subr.bf16.mxu0 %v1285
        %1459 = vmatpush1.bf16.msra.mxu0 %v1284
        %1460 = vmatprep.subr.bf16.mxu0 %v1291
        %1461 = vmatpush1.bf16.msra.mxu0 %v1290
        %1462 = vmatprep.subr.bf16.mxu0 %v1297
        %1463 = vmatpush1.bf16.msra.mxu0 %v1296
        %1464 = vmatprep.subr.bf16.mxu0 %v1303
        %1465 = vmatpush1.bf16.msra.mxu0 %v1302
        %1466 = vmatprep.subr.bf16.mxu0 %v1309
        %1467 = vmatpush1.bf16.msra.mxu0 %v1308
        %1468 = vmatprep.subr.bf16.mxu0 %v1315
        %1469 = vmatpush1.bf16.msra.mxu0 %v1314
        %1470 = vmatprep.subr.bf16.mxu0 %v1321
        %1471 = vmatpush1.bf16.msra.mxu0 %v1320
        %1472 = vmatprep.subr.bf16.mxu0 %v1327
        %1473 = vmatpush1.bf16.msra.mxu0 %v1326
        %1474 = vmatprep.subr.bf16.mxu0 0
        %1475 = vmatpush1.bf16.msra.mxu0 0
        %1476 = vmatprep.subr.bf16.mxu0 0
        %1477 = vmatpush1.bf16.msra.mxu0 0
        %1478 = vmatprep.subr.bf16.mxu0 0
        %1479 = vmatpush1.bf16.msra.mxu0 0
        %1480 = vmatprep.subr.bf16.mxu0 0
        %1481 = vmatpush1.bf16.msra.mxu0 0
        %1482 = vmatprep.subr.bf16.mxu0 0
        %1483 = vmatpush1.bf16.msra.mxu0 0
        %1484 = vmatprep.subr.bf16.mxu0 0
        %1485 = vmatpush1.bf16.msra.mxu0 0
        %1486 = vmatprep.subr.bf16.mxu0 0
        %1487 = vmatpush1.bf16.msra.mxu0 0
        %1488 = vmatprep.subr.bf16.mxu0 0
        %1489 = vmatpush1.bf16.msra.mxu0 0
        %1490 = vmatprep.mubr.bf16.mxu0 0
        %1491 = vmatmul.mubr.bf16.gmra.mrb[0].mxu0 %v1086
        %v1492 = vpop.f32.mrb[0].mxu0
        %v1493 = vadd.f32 0.0, %v1492
        %v1494 = vpop.f32.mrb[0].mxu0
        %v1495 = vadd.f32 0.0, %v1494
        %v1496 = vpop.f32.mrb[0].mxu0
        %v1497 = vpop.f32.mrb[0].mxu0
        %1498 = vdwg.mxu0
        %v1547 = vunpack.c.l.b16 %v957
        %v1548 = vunpack.c.h.b16 %v957
        %v1549 = vunpack.c.l.b16 %v958
        %v1550 = vunpack.c.h.b16 %v958
        %v1551 = vunpack.c.l.b16 %v959
        %v1552 = vunpack.c.h.b16 %v959
        %v1553 = vunpack.c.l.b16 %v960
        %v1554 = vunpack.c.h.b16 %v960
        %v1555 = vunpack.c.l.b16 %v961
        %v1556 = vunpack.c.h.b16 %v961
        %v1557 = vunpack.c.l.b16 %v962
        %v1558 = vunpack.c.h.b16 %v962
        %v1559 = vunpack.c.l.b16 %v963
        %v1560 = vunpack.c.h.b16 %v963
        %v1561 = vunpack.c.l.b16 %v964
        %v1562 = vunpack.c.h.b16 %v964
        %v1563 = vunpack.c.l.b16 %v965
        %v1564 = vunpack.c.h.b16 %v965
        %v1565 = vunpack.c.l.b16 %v966
        %v1566 = vunpack.c.h.b16 %v966
        %v1567 = vunpack.c.l.b16 %v967
        %v1568 = vunpack.c.h.b16 %v967
        %v1569 = vunpack.c.l.b16 %v968
        %v1570 = vunpack.c.h.b16 %v968
        %v1571 = vunpack.c.l.b16 %v969
        %v1572 = vunpack.c.h.b16 %v969
        %v1573 = vunpack.c.l.b16 %v970
        %v1574 = vunpack.c.h.b16 %v970
        %v1575 = vunpack.c.l.b16 %v971
        %v1576 = vunpack.c.h.b16 %v971
        %v1577 = vunpack.c.l.b16 %v972
        %v1578 = vunpack.c.h.b16 %v972
        %v1579 = vunpack.c.l.b16 %v973
        %v1580 = vunpack.c.h.b16 %v973
        %v1581 = vunpack.c.l.b16 %v974
        %v1582 = vunpack.c.h.b16 %v974
        %v1583 = vunpack.c.l.b16 %v975
        %v1584 = vunpack.c.h.b16 %v975
        %v1585 = vunpack.c.l.b16 %v976
        %v1586 = vunpack.c.h.b16 %v976
        %v1587 = vunpack.c.l.b16 %v977
        %v1588 = vunpack.c.h.b16 %v977
        %v1589 = vunpack.c.l.b16 %v978
        %v1590 = vunpack.c.h.b16 %v978
        %v1591 = vunpack.c.l.b16 %v979
        %v1592 = vunpack.c.h.b16 %v979
        %v1593 = vunpack.c.l.b16 %v980
        %v1594 = vunpack.c.h.b16 %v980
        %v1595 = vunpack.c.l.b16 %v981
        %v1596 = vunpack.c.h.b16 %v981
        %v1597 = vunpack.c.l.b16 %v982
        %v1598 = vunpack.c.h.b16 %v982
        %v1599 = vunpack.c.l.b16 %v983
        %v1600 = vunpack.c.h.b16 %v983
        %v1601 = vunpack.c.l.b16 %v984
        %v1602 = vunpack.c.h.b16 %v984
        %v1603 = vunpack.c.l.b16 %v985
        %v1604 = vunpack.c.h.b16 %v985
        %v1605 = vunpack.c.l.b16 %v986
        %v1606 = vunpack.c.h.b16 %v986
        %v1607 = vunpack.c.l.b16 %v987
        %v1608 = vunpack.c.h.b16 %v987
        %v1609 = vunpack.c.l.b16 %v988
        %v1610 = vunpack.c.h.b16 %v988
        %v1611 = vunpack.c.l.b16 %v989
        %v1612 = vunpack.c.h.b16 %v989
        %v1613 = vunpack.c.l.b16 %v990
        %v1614 = vunpack.c.h.b16 %v990
        %v1615 = vunpack.c.l.b16 %v991
        %v1616 = vunpack.c.h.b16 %v991
        %v1617 = vunpack.c.l.b16 %v992
        %v1618 = vunpack.c.h.b16 %v992
        %v1619 = vunpack.c.l.b16 %v993
        %v1620 = vunpack.c.h.b16 %v993
        %v1621 = vunpack.c.l.b16 %v994
        %v1622 = vunpack.c.h.b16 %v994
        %v1623 = vunpack.c.l.b16 %v995
        %v1624 = vunpack.c.h.b16 %v995
        %v1625 = vunpack.c.l.b16 %v996
        %v1626 = vunpack.c.h.b16 %v996
        %v1627 = vunpack.c.l.b16 %v997
        %v1628 = vunpack.c.h.b16 %v997
        %v1629 = vunpack.c.l.b16 %v998
        %v1630 = vunpack.c.h.b16 %v998
        %v1631 = vunpack.c.l.b16 %v999
        %v1632 = vunpack.c.h.b16 %v999
        %v1633 = vunpack.c.l.b16 %v1000
        %v1634 = vunpack.c.h.b16 %v1000
        %v1635 = vunpack.c.l.b16 %v1001
        %v1636 = vunpack.c.h.b16 %v1001
        %v1637 = vunpack.c.l.b16 %v1002
        %v1638 = vunpack.c.h.b16 %v1002
        %v1639 = vunpack.c.l.b16 %v1003
        %v1640 = vunpack.c.h.b16 %v1003
        %v1641 = vunpack.c.l.b16 %v1004
        %v1642 = vunpack.c.h.b16 %v1004
        %v1643 = vpack.c.b16 %v1553, %v1547
        %v1644 = vpack.c.b16 %v1554, %v1548
        %v1645 = vpack.c.b16 %v1555, %v1549
        %v1646 = vpack.c.b16 %v1556, %v1550
        %v1647 = vpack.c.b16 %v1557, %v1551
        %v1648 = vpack.c.b16 %v1558, %v1552
        %v1649 = vpack.c.b16 %v1565, %v1559
        %v1650 = vpack.c.b16 %v1566, %v1560
        %v1651 = vpack.c.b16 %v1567, %v1561
        %v1652 = vpack.c.b16 %v1568, %v1562
        %v1653 = vpack.c.b16 %v1569, %v1563
        %v1654 = vpack.c.b16 %v1570, %v1564
        %v1655 = vpack.c.b16 %v1577, %v1571
        %v1656 = vpack.c.b16 %v1578, %v1572
        %v1657 = vpack.c.b16 %v1579, %v1573
        %v1658 = vpack.c.b16 %v1580, %v1574
        %v1659 = vpack.c.b16 %v1581, %v1575
        %v1660 = vpack.c.b16 %v1582, %v1576
        %v1661 = vpack.c.b16 %v1589, %v1583
        %v1662 = vpack.c.b16 %v1590, %v1584
        %v1663 = vpack.c.b16 %v1591, %v1585
        %v1664 = vpack.c.b16 %v1592, %v1586
        %v1665 = vpack.c.b16 %v1593, %v1587
        %v1666 = vpack.c.b16 %v1594, %v1588
        %v1667 = vpack.c.b16 %v1601, %v1595
        %v1668 = vpack.c.b16 %v1602, %v1596
        %v1669 = vpack.c.b16 %v1603, %v1597
        %v1670 = vpack.c.b16 %v1604, %v1598
        %v1671 = vpack.c.b16 %v1605, %v1599
        %v1672 = vpack.c.b16 %v1606, %v1600
        %v1673 = vpack.c.b16 %v1613, %v1607
        %v1674 = vpack.c.b16 %v1614, %v1608
        %v1675 = vpack.c.b16 %v1615, %v1609
        %v1676 = vpack.c.b16 %v1616, %v1610
        %v1677 = vpack.c.b16 %v1617, %v1611
        %v1678 = vpack.c.b16 %v1618, %v1612
        %v1679 = vpack.c.b16 %v1625, %v1619
        %v1680 = vpack.c.b16 %v1626, %v1620
        %v1681 = vpack.c.b16 %v1627, %v1621
        %v1682 = vpack.c.b16 %v1628, %v1622
        %v1683 = vpack.c.b16 %v1629, %v1623
        %v1684 = vpack.c.b16 %v1630, %v1624
        %v1685 = vpack.c.b16 %v1637, %v1631
        %v1686 = vpack.c.b16 %v1638, %v1632
        %v1687 = vpack.c.b16 %v1639, %v1633
        %v1688 = vpack.c.b16 %v1640, %v1634
        %v1689 = vpack.c.b16 %v1641, %v1635
        %v1690 = vpack.c.b16 %v1642, %v1636
        %1739 = vmatprep.subr.bf16.mxu0 %v1644
        %1740 = vmatpush1.bf16.msra.mxu0 %v1643
        %1741 = vmatprep.subr.bf16.mxu0 %v1650
        %1742 = vmatpush1.bf16.msra.mxu0 %v1649
        %1743 = vmatprep.subr.bf16.mxu0 %v1656
        %1744 = vmatpush1.bf16.msra.mxu0 %v1655
        %1745 = vmatprep.subr.bf16.mxu0 %v1662
        %1746 = vmatpush1.bf16.msra.mxu0 %v1661
        %1747 = vmatprep.subr.bf16.mxu0 %v1668
        %1748 = vmatpush1.bf16.msra.mxu0 %v1667
        %1749 = vmatprep.subr.bf16.mxu0 %v1674
        %1750 = vmatpush1.bf16.msra.mxu0 %v1673
        %1751 = vmatprep.subr.bf16.mxu0 %v1680
        %1752 = vmatpush1.bf16.msra.mxu0 %v1679
        %1753 = vmatprep.subr.bf16.mxu0 %v1686
        %1754 = vmatpush1.bf16.msra.mxu0 %v1685
        %1755 = vmatprep.subr.bf16.mxu0 0
        %1756 = vmatpush1.bf16.msra.mxu0 0
        %1757 = vmatprep.subr.bf16.mxu0 0
        %1758 = vmatpush1.bf16.msra.mxu0 0
        %1759 = vmatprep.subr.bf16.mxu0 0
        %1760 = vmatpush1.bf16.msra.mxu0 0
        %1761 = vmatprep.subr.bf16.mxu0 0
        %1762 = vmatpush1.bf16.msra.mxu0 0
        %1763 = vmatprep.subr.bf16.mxu0 0
        %1764 = vmatpush1.bf16.msra.mxu0 0
        %1765 = vmatprep.subr.bf16.mxu0 0
        %1766 = vmatpush1.bf16.msra.mxu0 0
        %1767 = vmatprep.subr.bf16.mxu0 0
        %1768 = vmatpush1.bf16.msra.mxu0 0
        %1769 = vmatprep.subr.bf16.mxu0 0
        %1770 = vmatpush1.bf16.msra.mxu0 0
        %1771 = vmatprep.mubr.bf16.mxu0 0
        %1772 = vmatmul.mubr.bf16.gmra.mrb[0].mxu0 %v956
        %v1773 = vpop.f32.mrb[0].mxu0
        %v1774 = vadd.f32 %v1411, %v1773
        %v1775 = vpop.f32.mrb[0].mxu0
        %v1776 = vadd.f32 %v1413, %v1775
        %v1777 = vpop.f32.mrb[0].mxu0
        %v1778 = vpop.f32.mrb[0].mxu0
        %1779 = vdwg.mxu0
        %1780 = vmatprep.subr.bf16.mxu0 %v1646
        %1781 = vmatpush1.bf16.msra.mxu0 %v1645
        %1782 = vmatprep.subr.bf16.mxu0 %v1652
        %1783 = vmatpush1.bf16.msra.mxu0 %v1651
        %1784 = vmatprep.subr.bf16.mxu0 %v1658
        %1785 = vmatpush1.bf16.msra.mxu0 %v1657
        %1786 = vmatprep.subr.bf16.mxu0 %v1664
        %1787 = vmatpush1.bf16.msra.mxu0 %v1663
        %1788 = vmatprep.subr.bf16.mxu0 %v1670
        %1789 = vmatpush1.bf16.msra.mxu0 %v1669
        %1790 = vmatprep.subr.bf16.mxu0 %v1676
        %1791 = vmatpush1.bf16.msra.mxu0 %v1675
        %1792 = vmatprep.subr.bf16.mxu0 %v1682
        %1793 = vmatpush1.bf16.msra.mxu0 %v1681
        %1794 = vmatprep.subr.bf16.mxu0 %v1688
        %1795 = vmatpush1.bf16.msra.mxu0 %v1687
        %1796 = vmatprep.subr.bf16.mxu0 0
        %1797 = vmatpush1.bf16.msra.mxu0 0
        %1798 = vmatprep.subr.bf16.mxu0 0
        %1799 = vmatpush1.bf16.msra.mxu0 0
        %1800 = vmatprep.subr.bf16.mxu0 0
        %1801 = vmatpush1.bf16.msra.mxu0 0
        %1802 = vmatprep.subr.bf16.mxu0 0
        %1803 = vmatpush1.bf16.msra.mxu0 0
        %1804 = vmatprep.subr.bf16.mxu0 0
        %1805 = vmatpush1.bf16.msra.mxu0 0
        %1806 = vmatprep.subr.bf16.mxu0 0
        %1807 = vmatpush1.bf16.msra.mxu0 0
        %1808 = vmatprep.subr.bf16.mxu0 0
        %1809 = vmatpush1.bf16.msra.mxu0 0
        %1810 = vmatprep.subr.bf16.mxu0 0
        %1811 = vmatpush1.bf16.msra.mxu0 0
        %1812 = vmatprep.mubr.bf16.mxu0 0
        %1813 = vmatmul.mubr.bf16.gmra.mrb[0].mxu0 %v956
        %v1814 = vpop.f32.mrb[0].mxu0
        %v1815 = vadd.f32 %v1452, %v1814
        %v1816 = vpop.f32.mrb[0].mxu0
        %v1817 = vadd.f32 %v1454, %v1816
        %v1818 = vpop.f32.mrb[0].mxu0
        %v1819 = vpop.f32.mrb[0].mxu0
        %1820 = vdwg.mxu0
        %1821 = vmatprep.subr.bf16.mxu0 %v1648
        %1822 = vmatpush1.bf16.msra.mxu0 %v1647
        %1823 = vmatprep.subr.bf16.mxu0 %v1654
        %1824 = vmatpush1.bf16.msra.mxu0 %v1653
        %1825 = vmatprep.subr.bf16.mxu0 %v1660
        %1826 = vmatpush1.bf16.msra.mxu0 %v1659
        %1827 = vmatprep.subr.bf16.mxu0 %v1666
        %1828 = vmatpush1.bf16.msra.mxu0 %v1665
        %1829 = vmatprep.subr.bf16.mxu0 %v1672
        %1830 = vmatpush1.bf16.msra.mxu0 %v1671
        %1831 = vmatprep.subr.bf16.mxu0 %v1678
        %1832 = vmatpush1.bf16.msra.mxu0 %v1677
        %1833 = vmatprep.subr.bf16.mxu0 %v1684
        %1834 = vmatpush1.bf16.msra.mxu0 %v1683
        %1835 = vmatprep.subr.bf16.mxu0 %v1690
        %1836 = vmatpush1.bf16.msra.mxu0 %v1689
        %1837 = vmatprep.subr.bf16.mxu0 0
        %1838 = vmatpush1.bf16.msra.mxu0 0
        %1839 = vmatprep.subr.bf16.mxu0 0
        %1840 = vmatpush1.bf16.msra.mxu0 0
        %1841 = vmatprep.subr.bf16.mxu0 0
        %1842 = vmatpush1.bf16.msra.mxu0 0
        %1843 = vmatprep.subr.bf16.mxu0 0
        %1844 = vmatpush1.bf16.msra.mxu0 0
        %1845 = vmatprep.subr.bf16.mxu0 0
        %1846 = vmatpush1.bf16.msra.mxu0 0
        %1847 = vmatprep.subr.bf16.mxu0 0
        %1848 = vmatpush1.bf16.msra.mxu0 0
        %1849 = vmatprep.subr.bf16.mxu0 0
        %1850 = vmatpush1.bf16.msra.mxu0 0
        %1851 = vmatprep.subr.bf16.mxu0 0
        %1852 = vmatpush1.bf16.msra.mxu0 0
        %1853 = vmatprep.mubr.bf16.mxu0 0
        %1854 = vmatmul.mubr.bf16.gmra.mrb[0].mxu0 %v956
        %v1855 = vpop.f32.mrb[0].mxu0
        %v1856 = vadd.f32 %v1493, %v1855
        %v1857 = vpop.f32.mrb[0].mxu0
        %v1858 = vadd.f32 %v1495, %v1857
        %v1859 = vpop.f32.mrb[0].mxu0
        %v1860 = vpop.f32.mrb[0].mxu0
        %1861 = vdwg.mxu0
        %v1862 = vpack.c.bf16 %v741, %v741
        %v1863 = vpack.c.bf16 %v742, %v742
        %v1864 = vpack.c.bf16 %v743, %v743
        %v1865 = vpack.c.bf16 %v744, %v744
        %v1866 = vpack.c.bf16 %v745, %v745
        %v1867 = vpack.c.bf16 %v746, %v746
        %v1868 = vpack.c.bf16 %v747, %v747
        %v1869 = vpack.c.bf16 %v748, %v748
        %v1878 = vunpack.c.l.b16 %v1862
        %v1879 = vunpack.c.l.b16 %v1863
        %v1880 = vunpack.c.l.b16 %v1864
        %v1881 = vunpack.c.l.b16 %v1865
        %v1882 = vunpack.c.l.b16 %v1866
        %v1883 = vunpack.c.l.b16 %v1867
        %v1884 = vunpack.c.l.b16 %v1868
        %v1885 = vunpack.c.l.b16 %v1869
        %v1886 = vrot.slane %v1878, 2
        %v1887 = vrot.slane %v1879, 1
        %v1888 = vsel %vm846, %v1887, %v1886
        %v1889 = vsel %vm848, %v1880, %v1888
        %v1890 = vrot.slane %v1881, 7
        %v1891 = vsel %vm851, %v1890, %v1889
        %v1892 = vrot.slane %v1882, 6
        %v1893 = vsel %vm854, %v1892, %v1891
        %v1894 = vrot.slane %v1883, 5
        %v1895 = vsel %vm857, %v1894, %v1893
        %v1896 = vrot.slane %v1884, 4
        %v1897 = vsel %vm860, %v1896, %v1895
        %v1898 = vrot.slane %v1885, 3
        %v1899 = vsel %vm863, %v1898, %v1897
        %v1900 = vpack.c.b16 %v1899, %v1899
        %1902 = vmatprep.subr.bf16.mxu0 0
        %1903 = vmatpush1.bf16.msra.mxu0 %v899
        %1904 = vmatprep.subr.bf16.mxu0 0
        %1905 = vmatpush1.bf16.msra.mxu0 %v900
        %1906 = vmatprep.subr.bf16.mxu0 0
        %1907 = vmatpush1.bf16.msra.mxu0 %v901
        %1908 = vmatprep.subr.bf16.mxu0 0
        %1909 = vmatpush1.bf16.msra.mxu0 %v902
        %1910 = vmatprep.subr.bf16.mxu0 0
        %1911 = vmatpush1.bf16.msra.mxu0 %v903
        %1912 = vmatprep.subr.bf16.mxu0 0
        %1913 = vmatpush1.bf16.msra.mxu0 %v904
        %1914 = vmatprep.subr.bf16.mxu0 0
        %1915 = vmatpush1.bf16.msra.mxu0 %v905
        %1916 = vmatprep.subr.bf16.mxu0 0
        %1917 = vmatpush1.bf16.msra.mxu0 %v906
        %1918 = vmatprep.subr.bf16.mxu0 0
        %1919 = vmatpush1.bf16.msra.mxu0 0
        %1920 = vmatprep.subr.bf16.mxu0 0
        %1921 = vmatpush1.bf16.msra.mxu0 0
        %1922 = vmatprep.subr.bf16.mxu0 0
        %1923 = vmatpush1.bf16.msra.mxu0 0
        %1924 = vmatprep.subr.bf16.mxu0 0
        %1925 = vmatpush1.bf16.msra.mxu0 0
        %1926 = vmatprep.subr.bf16.mxu0 0
        %1927 = vmatpush1.bf16.msra.mxu0 0
        %1928 = vmatprep.subr.bf16.mxu0 0
        %1929 = vmatpush1.bf16.msra.mxu0 0
        %1930 = vmatprep.subr.bf16.mxu0 0
        %1931 = vmatpush1.bf16.msra.mxu0 0
        %1932 = vmatprep.subr.bf16.mxu0 0
        %1933 = vmatpush1.bf16.msra.mxu0 0
        %1934 = vmatprep.mubr.bf16.mxu0 0
        %1935 = vmatmul.mubr.bf16.gmra.mrb[0].mxu0 %v1900
        %v1936 = vpop.f32.mrb[0].mxu0
        %v1937 = vadd.f32 %v826, %v1936
        %v1938 = vpop.f32.mrb[0].mxu0
        %v1939 = vpop.f32.mrb[0].mxu0
        %v1940 = vpop.f32.mrb[0].mxu0
        %1941 = vdwg.mxu0
        %v1942 = vmax.f32 %v1937, 0.0
        %v1943 = vpack.c.bf16 %v1942, %v1942
        %s1944 = scalar_lea.vmem [#allocation2], 768
        %v1945 = vld [vmem:[%s1944] sm:$0xff]
        %v1946 = vld [vmem:[%s1944 + $0x8] sm:$0xff]
        %v1947 = vld [vmem:[%s1944 + $0x10] sm:$0xff]
        %v1948 = vld [vmem:[%s1944 + $0x18] sm:$0xff]
        %v1949 = vld [vmem:[%s1944 + $0x20] sm:$0xff]
        %v1950 = vld [vmem:[%s1944 + $0x28] sm:$0xff]
        %v1951 = vld [vmem:[%s1944 + $0x30] sm:$0xff]
        %v1952 = vld [vmem:[%s1944 + $0x38] sm:$0xff]
        %v1953 = vld [vmem:[%s1944 + $0x40] sm:$0xff]
        %v1954 = vld [vmem:[%s1944 + $0x48] sm:$0xff]
        %v1955 = vld [vmem:[%s1944 + $0x50] sm:$0xff]
        %v1956 = vld [vmem:[%s1944 + $0x58] sm:$0xff]
        %v1957 = vld [vmem:[%s1944 + $0x60] sm:$0xff]
        %v1958 = vld [vmem:[%s1944 + $0x68] sm:$0xff]
        %v1959 = vld [vmem:[%s1944 + $0x70] sm:$0xff]
        %v1960 = vld [vmem:[%s1944 + $0x78] sm:$0xff]
        %v1961 = vld [vmem:[%s1944 + $0x80] sm:$0xff]
        %v1962 = vld [vmem:[%s1944 + $0x88] sm:$0xff]
        %v1963 = vld [vmem:[%s1944 + $0x90] sm:$0xff]
        %v1964 = vld [vmem:[%s1944 + $0x98] sm:$0xff]
        %v1965 = vld [vmem:[%s1944 + $0xa0] sm:$0xff]
        %v1966 = vld [vmem:[%s1944 + $0xa8] sm:$0xff]
        %v1967 = vld [vmem:[%s1944 + $0xb0] sm:$0xff]
        %v1968 = vld [vmem:[%s1944 + $0xb8] sm:$0xff]
        %v1969 = vld [vmem:[%s1944 + $0xc0] sm:$0xff]
        %v1970 = vld [vmem:[%s1944 + $0xc8] sm:$0xff]
        %v1971 = vld [vmem:[%s1944 + $0xd0] sm:$0xff]
        %v1972 = vld [vmem:[%s1944 + $0xd8] sm:$0xff]
        %v1973 = vld [vmem:[%s1944 + $0xe0] sm:$0xff]
        %v1974 = vld [vmem:[%s1944 + $0xe8] sm:$0xff]
        %v1975 = vld [vmem:[%s1944 + $0xf0] sm:$0xff]
        %v1976 = vld [vmem:[%s1944 + $0xf8] sm:$0xff]
        %v1977 = vld [vmem:[%s1944 + $0x100] sm:$0xff]
        %v1978 = vld [vmem:[%s1944 + $0x108] sm:$0xff]
        %v1979 = vld [vmem:[%s1944 + $0x110] sm:$0xff]
        %v1980 = vld [vmem:[%s1944 + $0x118] sm:$0xff]
        %v1981 = vld [vmem:[%s1944 + $0x120] sm:$0xff]
        %v1982 = vld [vmem:[%s1944 + $0x128] sm:$0xff]
        %v1983 = vld [vmem:[%s1944 + $0x130] sm:$0xff]
        %v1984 = vld [vmem:[%s1944 + $0x138] sm:$0xff]
        %v1985 = vld [vmem:[%s1944 + $0x140] sm:$0xff]
        %v1986 = vld [vmem:[%s1944 + $0x148] sm:$0xff]
        %v1987 = vld [vmem:[%s1944 + $0x150] sm:$0xff]
        %v1988 = vld [vmem:[%s1944 + $0x158] sm:$0xff]
        %v1989 = vld [vmem:[%s1944 + $0x160] sm:$0xff]
        %v1990 = vld [vmem:[%s1944 + $0x168] sm:$0xff]
        %v1991 = vld [vmem:[%s1944 + $0x170] sm:$0xff]
        %v1992 = vld [vmem:[%s1944 + $0x178] sm:$0xff]
        %v2041 = vunpack.c.l.b16 %v1945
        %v2042 = vunpack.c.h.b16 %v1945
        %v2043 = vunpack.c.l.b16 %v1946
        %v2044 = vunpack.c.h.b16 %v1946
        %v2045 = vunpack.c.l.b16 %v1947
        %v2046 = vunpack.c.h.b16 %v1947
        %v2047 = vunpack.c.l.b16 %v1948
        %v2048 = vunpack.c.h.b16 %v1948
        %v2049 = vunpack.c.l.b16 %v1949
        %v2050 = vunpack.c.h.b16 %v1949
        %v2051 = vunpack.c.l.b16 %v1950
        %v2052 = vunpack.c.h.b16 %v1950
        %v2053 = vunpack.c.l.b16 %v1951
        %v2054 = vunpack.c.h.b16 %v1951
        %v2055 = vunpack.c.l.b16 %v1952
        %v2056 = vunpack.c.h.b16 %v1952
        %v2057 = vunpack.c.l.b16 %v1953
        %v2058 = vunpack.c.h.b16 %v1953
        %v2059 = vunpack.c.l.b16 %v1954
        %v2060 = vunpack.c.h.b16 %v1954
        %v2061 = vunpack.c.l.b16 %v1955
        %v2062 = vunpack.c.h.b16 %v1955
        %v2063 = vunpack.c.l.b16 %v1956
        %v2064 = vunpack.c.h.b16 %v1956
        %v2065 = vunpack.c.l.b16 %v1957
        %v2066 = vunpack.c.h.b16 %v1957
        %v2067 = vunpack.c.l.b16 %v1958
        %v2068 = vunpack.c.h.b16 %v1958
        %v2069 = vunpack.c.l.b16 %v1959
        %v2070 = vunpack.c.h.b16 %v1959
        %v2071 = vunpack.c.l.b16 %v1960
        %v2072 = vunpack.c.h.b16 %v1960
        %v2073 = vunpack.c.l.b16 %v1961
        %v2074 = vunpack.c.h.b16 %v1961
        %v2075 = vunpack.c.l.b16 %v1962
        %v2076 = vunpack.c.h.b16 %v1962
        %v2077 = vunpack.c.l.b16 %v1963
        %v2078 = vunpack.c.h.b16 %v1963
        %v2079 = vunpack.c.l.b16 %v1964
        %v2080 = vunpack.c.h.b16 %v1964
        %v2081 = vunpack.c.l.b16 %v1965
        %v2082 = vunpack.c.h.b16 %v1965
        %v2083 = vunpack.c.l.b16 %v1966
        %v2084 = vunpack.c.h.b16 %v1966
        %v2085 = vunpack.c.l.b16 %v1967
        %v2086 = vunpack.c.h.b16 %v1967
        %v2087 = vunpack.c.l.b16 %v1968
        %v2088 = vunpack.c.h.b16 %v1968
        %v2089 = vunpack.c.l.b16 %v1969
        %v2090 = vunpack.c.h.b16 %v1969
        %v2091 = vunpack.c.l.b16 %v1970
        %v2092 = vunpack.c.h.b16 %v1970
        %v2093 = vunpack.c.l.b16 %v1971
        %v2094 = vunpack.c.h.b16 %v1971
        %v2095 = vunpack.c.l.b16 %v1972
        %v2096 = vunpack.c.h.b16 %v1972
        %v2097 = vunpack.c.l.b16 %v1973
        %v2098 = vunpack.c.h.b16 %v1973
        %v2099 = vunpack.c.l.b16 %v1974
        %v2100 = vunpack.c.h.b16 %v1974
        %v2101 = vunpack.c.l.b16 %v1975
        %v2102 = vunpack.c.h.b16 %v1975
        %v2103 = vunpack.c.l.b16 %v1976
        %v2104 = vunpack.c.h.b16 %v1976
        %v2105 = vunpack.c.l.b16 %v1977
        %v2106 = vunpack.c.h.b16 %v1977
        %v2107 = vunpack.c.l.b16 %v1978
        %v2108 = vunpack.c.h.b16 %v1978
        %v2109 = vunpack.c.l.b16 %v1979
        %v2110 = vunpack.c.h.b16 %v1979
        %v2111 = vunpack.c.l.b16 %v1980
        %v2112 = vunpack.c.h.b16 %v1980
        %v2113 = vunpack.c.l.b16 %v1981
        %v2114 = vunpack.c.h.b16 %v1981
        %v2115 = vunpack.c.l.b16 %v1982
        %v2116 = vunpack.c.h.b16 %v1982
        %v2117 = vunpack.c.l.b16 %v1983
        %v2118 = vunpack.c.h.b16 %v1983
        %v2119 = vunpack.c.l.b16 %v1984
        %v2120 = vunpack.c.h.b16 %v1984
        %v2121 = vunpack.c.l.b16 %v1985
        %v2122 = vunpack.c.h.b16 %v1985
        %v2123 = vunpack.c.l.b16 %v1986
        %v2124 = vunpack.c.h.b16 %v1986
        %v2125 = vunpack.c.l.b16 %v1987
        %v2126 = vunpack.c.h.b16 %v1987
        %v2127 = vunpack.c.l.b16 %v1988
        %v2128 = vunpack.c.h.b16 %v1988
        %v2129 = vunpack.c.l.b16 %v1989
        %v2130 = vunpack.c.h.b16 %v1989
        %v2131 = vunpack.c.l.b16 %v1990
        %v2132 = vunpack.c.h.b16 %v1990
        %v2133 = vunpack.c.l.b16 %v1991
        %v2134 = vunpack.c.h.b16 %v1991
        %v2135 = vunpack.c.l.b16 %v1992
        %v2136 = vunpack.c.h.b16 %v1992
        %v2137 = vpack.c.b16 %v2047, %v2041
        %v2138 = vpack.c.b16 %v2048, %v2042
        %v2139 = vpack.c.b16 %v2049, %v2043
        %v2140 = vpack.c.b16 %v2050, %v2044
        %v2141 = vpack.c.b16 %v2051, %v2045
        %v2142 = vpack.c.b16 %v2052, %v2046
        %v2143 = vpack.c.b16 %v2059, %v2053
        %v2144 = vpack.c.b16 %v2060, %v2054
        %v2145 = vpack.c.b16 %v2061, %v2055
        %v2146 = vpack.c.b16 %v2062, %v2056
        %v2147 = vpack.c.b16 %v2063, %v2057
        %v2148 = vpack.c.b16 %v2064, %v2058
        %v2149 = vpack.c.b16 %v2071, %v2065
        %v2150 = vpack.c.b16 %v2072, %v2066
        %v2151 = vpack.c.b16 %v2073, %v2067
        %v2152 = vpack.c.b16 %v2074, %v2068
        %v2153 = vpack.c.b16 %v2075, %v2069
        %v2154 = vpack.c.b16 %v2076, %v2070
        %v2155 = vpack.c.b16 %v2083, %v2077
        %v2156 = vpack.c.b16 %v2084, %v2078
        %v2157 = vpack.c.b16 %v2085, %v2079
        %v2158 = vpack.c.b16 %v2086, %v2080
        %v2159 = vpack.c.b16 %v2087, %v2081
        %v2160 = vpack.c.b16 %v2088, %v2082
        %v2161 = vpack.c.b16 %v2095, %v2089
        %v2162 = vpack.c.b16 %v2096, %v2090
        %v2163 = vpack.c.b16 %v2097, %v2091
        %v2164 = vpack.c.b16 %v2098, %v2092
        %v2165 = vpack.c.b16 %v2099, %v2093
        %v2166 = vpack.c.b16 %v2100, %v2094
        %v2167 = vpack.c.b16 %v2107, %v2101
        %v2168 = vpack.c.b16 %v2108, %v2102
        %v2169 = vpack.c.b16 %v2109, %v2103
        %v2170 = vpack.c.b16 %v2110, %v2104
        %v2171 = vpack.c.b16 %v2111, %v2105
        %v2172 = vpack.c.b16 %v2112, %v2106
        %v2173 = vpack.c.b16 %v2119, %v2113
        %v2174 = vpack.c.b16 %v2120, %v2114
        %v2175 = vpack.c.b16 %v2121, %v2115
        %v2176 = vpack.c.b16 %v2122, %v2116
        %v2177 = vpack.c.b16 %v2123, %v2117
        %v2178 = vpack.c.b16 %v2124, %v2118
        %v2179 = vpack.c.b16 %v2131, %v2125
        %v2180 = vpack.c.b16 %v2132, %v2126
        %v2181 = vpack.c.b16 %v2133, %v2127
        %v2182 = vpack.c.b16 %v2134, %v2128
        %v2183 = vpack.c.b16 %v2135, %v2129
        %v2184 = vpack.c.b16 %v2136, %v2130
        %2233 = vmatprep.subr.bf16.mxu0 %v2138
        %2234 = vmatpush1.bf16.msra.mxu0 %v2137
        %2235 = vmatprep.subr.bf16.mxu0 %v2144
        %2236 = vmatpush1.bf16.msra.mxu0 %v2143
        %2237 = vmatprep.subr.bf16.mxu0 %v2150
        %2238 = vmatpush1.bf16.msra.mxu0 %v2149
        %2239 = vmatprep.subr.bf16.mxu0 %v2156
        %2240 = vmatpush1.bf16.msra.mxu0 %v2155
        %2241 = vmatprep.subr.bf16.mxu0 %v2162
        %2242 = vmatpush1.bf16.msra.mxu0 %v2161
        %2243 = vmatprep.subr.bf16.mxu0 %v2168
        %2244 = vmatpush1.bf16.msra.mxu0 %v2167
        %2245 = vmatprep.subr.bf16.mxu0 %v2174
        %2246 = vmatpush1.bf16.msra.mxu0 %v2173
        %2247 = vmatprep.subr.bf16.mxu0 %v2180
        %2248 = vmatpush1.bf16.msra.mxu0 %v2179
        %2249 = vmatprep.subr.bf16.mxu0 0
        %2250 = vmatpush1.bf16.msra.mxu0 0
        %2251 = vmatprep.subr.bf16.mxu0 0
        %2252 = vmatpush1.bf16.msra.mxu0 0
        %2253 = vmatprep.subr.bf16.mxu0 0
        %2254 = vmatpush1.bf16.msra.mxu0 0
        %2255 = vmatprep.subr.bf16.mxu0 0
        %2256 = vmatpush1.bf16.msra.mxu0 0
        %2257 = vmatprep.subr.bf16.mxu0 0
        %2258 = vmatpush1.bf16.msra.mxu0 0
        %2259 = vmatprep.subr.bf16.mxu0 0
        %2260 = vmatpush1.bf16.msra.mxu0 0
        %2261 = vmatprep.subr.bf16.mxu0 0
        %2262 = vmatpush1.bf16.msra.mxu0 0
        %2263 = vmatprep.subr.bf16.mxu0 0
        %2264 = vmatpush1.bf16.msra.mxu0 0
        %2265 = vmatprep.mubr.bf16.mxu0 0
        %2266 = vmatmul.mubr.bf16.gmra.mrb[0].mxu0 %v1943
        %v2267 = vpop.f32.mrb[0].mxu0
        %v2268 = vadd.f32 0.0, %v2267
        %v2269 = vpop.f32.mrb[0].mxu0
        %v2270 = vadd.f32 0.0, %v2269
        %v2271 = vpop.f32.mrb[0].mxu0
        %v2272 = vpop.f32.mrb[0].mxu0
        %2273 = vdwg.mxu0
        %2274 = vmatprep.subr.bf16.mxu0 %v2140
        %2275 = vmatpush1.bf16.msra.mxu0 %v2139
        %2276 = vmatprep.subr.bf16.mxu0 %v2146
        %2277 = vmatpush1.bf16.msra.mxu0 %v2145
        %2278 = vmatprep.subr.bf16.mxu0 %v2152
        %2279 = vmatpush1.bf16.msra.mxu0 %v2151
        %2280 = vmatprep.subr.bf16.mxu0 %v2158
        %2281 = vmatpush1.bf16.msra.mxu0 %v2157
        %2282 = vmatprep.subr.bf16.mxu0 %v2164
        %2283 = vmatpush1.bf16.msra.mxu0 %v2163
        %2284 = vmatprep.subr.bf16.mxu0 %v2170
        %2285 = vmatpush1.bf16.msra.mxu0 %v2169
        %2286 = vmatprep.subr.bf16.mxu0 %v2176
        %2287 = vmatpush1.bf16.msra.mxu0 %v2175
        %2288 = vmatprep.subr.bf16.mxu0 %v2182
        %2289 = vmatpush1.bf16.msra.mxu0 %v2181
        %2290 = vmatprep.subr.bf16.mxu0 0
        %2291 = vmatpush1.bf16.msra.mxu0 0
        %2292 = vmatprep.subr.bf16.mxu0 0
        %2293 = vmatpush1.bf16.msra.mxu0 0
        %2294 = vmatprep.subr.bf16.mxu0 0
        %2295 = vmatpush1.bf16.msra.mxu0 0
        %2296 = vmatprep.subr.bf16.mxu0 0
        %2297 = vmatpush1.bf16.msra.mxu0 0
        %2298 = vmatprep.subr.bf16.mxu0 0
        %2299 = vmatpush1.bf16.msra.mxu0 0
        %2300 = vmatprep.subr.bf16.mxu0 0
        %2301 = vmatpush1.bf16.msra.mxu0 0
        %2302 = vmatprep.subr.bf16.mxu0 0
        %2303 = vmatpush1.bf16.msra.mxu0 0
        %2304 = vmatprep.subr.bf16.mxu0 0
        %2305 = vmatpush1.bf16.msra.mxu0 0
        %2306 = vmatprep.mubr.bf16.mxu0 0
        %2307 = vmatmul.mubr.bf16.gmra.mrb[0].mxu0 %v1943
        %v2308 = vpop.f32.mrb[0].mxu0
        %v2309 = vadd.f32 0.0, %v2308
        %v2310 = vpop.f32.mrb[0].mxu0
        %v2311 = vadd.f32 0.0, %v2310
        %v2312 = vpop.f32.mrb[0].mxu0
        %v2313 = vpop.f32.mrb[0].mxu0
        %2314 = vdwg.mxu0
        %2315 = vmatprep.subr.bf16.mxu0 %v2142
        %2316 = vmatpush1.bf16.msra.mxu0 %v2141
        %2317 = vmatprep.subr.bf16.mxu0 %v2148
        %2318 = vmatpush1.bf16.msra.mxu0 %v2147
        %2319 = vmatprep.subr.bf16.mxu0 %v2154
        %2320 = vmatpush1.bf16.msra.mxu0 %v2153
        %2321 = vmatprep.subr.bf16.mxu0 %v2160
        %2322 = vmatpush1.bf16.msra.mxu0 %v2159
        %2323 = vmatprep.subr.bf16.mxu0 %v2166
        %2324 = vmatpush1.bf16.msra.mxu0 %v2165
        %2325 = vmatprep.subr.bf16.mxu0 %v2172
        %2326 = vmatpush1.bf16.msra.mxu0 %v2171
        %2327 = vmatprep.subr.bf16.mxu0 %v2178
        %2328 = vmatpush1.bf16.msra.mxu0 %v2177
        %2329 = vmatprep.subr.bf16.mxu0 %v2184
        %2330 = vmatpush1.bf16.msra.mxu0 %v2183
        %2331 = vmatprep.subr.bf16.mxu0 0
        %2332 = vmatpush1.bf16.msra.mxu0 0
        %2333 = vmatprep.subr.bf16.mxu0 0
        %2334 = vmatpush1.bf16.msra.mxu0 0
        %2335 = vmatprep.subr.bf16.mxu0 0
        %2336 = vmatpush1.bf16.msra.mxu0 0
        %2337 = vmatprep.subr.bf16.mxu0 0
        %2338 = vmatpush1.bf16.msra.mxu0 0
        %2339 = vmatprep.subr.bf16.mxu0 0
        %2340 = vmatpush1.bf16.msra.mxu0 0
        %2341 = vmatprep.subr.bf16.mxu0 0
        %2342 = vmatpush1.bf16.msra.mxu0 0
        %2343 = vmatprep.subr.bf16.mxu0 0
        %2344 = vmatpush1.bf16.msra.mxu0 0
        %2345 = vmatprep.subr.bf16.mxu0 0
        %2346 = vmatpush1.bf16.msra.mxu0 0
        %2347 = vmatprep.mubr.bf16.mxu0 0
        %2348 = vmatmul.mubr.bf16.gmra.mrb[0].mxu0 %v1943
        %v2349 = vpop.f32.mrb[0].mxu0
        %v2350 = vadd.f32 0.0, %v2349
        %v2351 = vpop.f32.mrb[0].mxu0
        %v2352 = vadd.f32 0.0, %v2351
        %v2353 = vpop.f32.mrb[0].mxu0
        %v2354 = vpop.f32.mrb[0].mxu0
        %2355 = vdwg.mxu0
        %v2356 = vadd.f32 %v1774, %v2268
        %v2357 = vadd.f32 %v1776, %v2270
        %v2358 = vadd.f32 %v1815, %v2309
        %v2359 = vadd.f32 %v1817, %v2311
        %v2360 = vadd.f32 %v1856, %v2350
        %v2361 = vadd.f32 %v1858, %v2352
        %v2362 = vpack.c.bf16 %v789, %v789
        %v2363 = vpack.c.bf16 %v790, %v790
        %v2364 = vpack.c.bf16 %v791, %v791
        %v2365 = vpack.c.bf16 %v792, %v792
        %v2366 = vpack.c.bf16 %v793, %v793
        %v2367 = vpack.c.bf16 %v794, %v794
        %v2368 = vpack.c.bf16 %v795, %v795
        %v2369 = vpack.c.bf16 %v796, %v796
        %v2378 = vunpack.c.l.b16 %v2362
        %v2379 = vunpack.c.l.b16 %v2363
        %v2380 = vunpack.c.l.b16 %v2364
        %v2381 = vunpack.c.l.b16 %v2365
        %v2382 = vunpack.c.l.b16 %v2366
        %v2383 = vunpack.c.l.b16 %v2367
        %v2384 = vunpack.c.l.b16 %v2368
        %v2385 = vunpack.c.l.b16 %v2369
        %v2386 = vrot.slane %v2378, 2
        %v2387 = vrot.slane %v2379, 1
        %v2388 = vsel %vm846, %v2387, %v2386
        %v2389 = vsel %vm848, %v2380, %v2388
        %v2390 = vrot.slane %v2381, 7
        %v2391 = vsel %vm851, %v2390, %v2389
        %v2392 = vrot.slane %v2382, 6
        %v2393 = vsel %vm854, %v2392, %v2391
        %v2394 = vrot.slane %v2383, 5
        %v2395 = vsel %vm857, %v2394, %v2393
        %v2396 = vrot.slane %v2384, 4
        %v2397 = vsel %vm860, %v2396, %v2395
        %v2398 = vrot.slane %v2385, 3
        %v2399 = vsel %vm863, %v2398, %v2397
        %v2400 = vpack.c.b16 %v2399, %v2399
        %2402 = vmatprep.subr.bf16.mxu0 0
        %2403 = vmatpush1.bf16.msra.mxu0 %v899
        %2404 = vmatprep.subr.bf16.mxu0 0
        %2405 = vmatpush1.bf16.msra.mxu0 %v900
        %2406 = vmatprep.subr.bf16.mxu0 0
        %2407 = vmatpush1.bf16.msra.mxu0 %v901
        %2408 = vmatprep.subr.bf16.mxu0 0
        %2409 = vmatpush1.bf16.msra.mxu0 %v902
        %2410 = vmatprep.subr.bf16.mxu0 0
        %2411 = vmatpush1.bf16.msra.mxu0 %v903
        %2412 = vmatprep.subr.bf16.mxu0 0
        %2413 = vmatpush1.bf16.msra.mxu0 %v904
        %2414 = vmatprep.subr.bf16.mxu0 0
        %2415 = vmatpush1.bf16.msra.mxu0 %v905
        %2416 = vmatprep.subr.bf16.mxu0 0
        %2417 = vmatpush1.bf16.msra.mxu0 %v906
        %2418 = vmatprep.subr.bf16.mxu0 0
        %2419 = vmatpush1.bf16.msra.mxu0 0
        %2420 = vmatprep.subr.bf16.mxu0 0
        %2421 = vmatpush1.bf16.msra.mxu0 0
        %2422 = vmatprep.subr.bf16.mxu0 0
        %2423 = vmatpush1.bf16.msra.mxu0 0
        %2424 = vmatprep.subr.bf16.mxu0 0
        %2425 = vmatpush1.bf16.msra.mxu0 0
        %2426 = vmatprep.subr.bf16.mxu0 0
        %2427 = vmatpush1.bf16.msra.mxu0 0
        %2428 = vmatprep.subr.bf16.mxu0 0
        %2429 = vmatpush1.bf16.msra.mxu0 0
        %2430 = vmatprep.subr.bf16.mxu0 0
        %2431 = vmatpush1.bf16.msra.mxu0 0
        %2432 = vmatprep.subr.bf16.mxu0 0
        %2433 = vmatpush1.bf16.msra.mxu0 0
        %2434 = vmatprep.mubr.bf16.mxu0 0
        %2435 = vmatmul.mubr.bf16.gmra.mrb[0].mxu0 %v2400
        %v2436 = vpop.f32.mrb[0].mxu0
        %v2437 = vadd.f32 %v826, %v2436
        %v2438 = vpop.f32.mrb[0].mxu0
        %v2439 = vpop.f32.mrb[0].mxu0
        %v2440 = vpop.f32.mrb[0].mxu0
        %2441 = vdwg.mxu0
        %v2442 = vmax.f32 %v2437, 0.0
        %v2443 = vpack.c.bf16 %v2442, %v2442
        %s2444 = scalar_lea.vmem [#allocation2], 1152
        %v2445 = vld [vmem:[%s2444] sm:$0xff]
        %v2446 = vld [vmem:[%s2444 + $0x8] sm:$0xff]
        %v2447 = vld [vmem:[%s2444 + $0x10] sm:$0xff]
        %v2448 = vld [vmem:[%s2444 + $0x18] sm:$0xff]
        %v2449 = vld [vmem:[%s2444 + $0x20] sm:$0xff]
        %v2450 = vld [vmem:[%s2444 + $0x28] sm:$0xff]
        %v2451 = vld [vmem:[%s2444 + $0x30] sm:$0xff]
        %v2452 = vld [vmem:[%s2444 + $0x38] sm:$0xff]
        %v2453 = vld [vmem:[%s2444 + $0x40] sm:$0xff]
        %v2454 = vld [vmem:[%s2444 + $0x48] sm:$0xff]
        %v2455 = vld [vmem:[%s2444 + $0x50] sm:$0xff]
        %v2456 = vld [vmem:[%s2444 + $0x58] sm:$0xff]
        %v2457 = vld [vmem:[%s2444 + $0x60] sm:$0xff]
        %v2458 = vld [vmem:[%s2444 + $0x68] sm:$0xff]
        %v2459 = vld [vmem:[%s2444 + $0x70] sm:$0xff]
        %v2460 = vld [vmem:[%s2444 + $0x78] sm:$0xff]
        %v2461 = vld [vmem:[%s2444 + $0x80] sm:$0xff]
        %v2462 = vld [vmem:[%s2444 + $0x88] sm:$0xff]
        %v2463 = vld [vmem:[%s2444 + $0x90] sm:$0xff]
        %v2464 = vld [vmem:[%s2444 + $0x98] sm:$0xff]
        %v2465 = vld [vmem:[%s2444 + $0xa0] sm:$0xff]
        %v2466 = vld [vmem:[%s2444 + $0xa8] sm:$0xff]
        %v2467 = vld [vmem:[%s2444 + $0xb0] sm:$0xff]
        %v2468 = vld [vmem:[%s2444 + $0xb8] sm:$0xff]
        %v2469 = vld [vmem:[%s2444 + $0xc0] sm:$0xff]
        %v2470 = vld [vmem:[%s2444 + $0xc8] sm:$0xff]
        %v2471 = vld [vmem:[%s2444 + $0xd0] sm:$0xff]
        %v2472 = vld [vmem:[%s2444 + $0xd8] sm:$0xff]
        %v2473 = vld [vmem:[%s2444 + $0xe0] sm:$0xff]
        %v2474 = vld [vmem:[%s2444 + $0xe8] sm:$0xff]
        %v2475 = vld [vmem:[%s2444 + $0xf0] sm:$0xff]
        %v2476 = vld [vmem:[%s2444 + $0xf8] sm:$0xff]
        %v2477 = vld [vmem:[%s2444 + $0x100] sm:$0xff]
        %v2478 = vld [vmem:[%s2444 + $0x108] sm:$0xff]
        %v2479 = vld [vmem:[%s2444 + $0x110] sm:$0xff]
        %v2480 = vld [vmem:[%s2444 + $0x118] sm:$0xff]
        %v2481 = vld [vmem:[%s2444 + $0x120] sm:$0xff]
        %v2482 = vld [vmem:[%s2444 + $0x128] sm:$0xff]
        %v2483 = vld [vmem:[%s2444 + $0x130] sm:$0xff]
        %v2484 = vld [vmem:[%s2444 + $0x138] sm:$0xff]
        %v2485 = vld [vmem:[%s2444 + $0x140] sm:$0xff]
        %v2486 = vld [vmem:[%s2444 + $0x148] sm:$0xff]
        %v2487 = vld [vmem:[%s2444 + $0x150] sm:$0xff]
        %v2488 = vld [vmem:[%s2444 + $0x158] sm:$0xff]
        %v2489 = vld [vmem:[%s2444 + $0x160] sm:$0xff]
        %v2490 = vld [vmem:[%s2444 + $0x168] sm:$0xff]
        %v2491 = vld [vmem:[%s2444 + $0x170] sm:$0xff]
        %v2492 = vld [vmem:[%s2444 + $0x178] sm:$0xff]
        %v2541 = vunpack.c.l.b16 %v2445
        %v2542 = vunpack.c.h.b16 %v2445
        %v2543 = vunpack.c.l.b16 %v2446
        %v2544 = vunpack.c.h.b16 %v2446
        %v2545 = vunpack.c.l.b16 %v2447
        %v2546 = vunpack.c.h.b16 %v2447
        %v2547 = vunpack.c.l.b16 %v2448
        %v2548 = vunpack.c.h.b16 %v2448
        %v2549 = vunpack.c.l.b16 %v2449
        %v2550 = vunpack.c.h.b16 %v2449
        %v2551 = vunpack.c.l.b16 %v2450
        %v2552 = vunpack.c.h.b16 %v2450
        %v2553 = vunpack.c.l.b16 %v2451
        %v2554 = vunpack.c.h.b16 %v2451
        %v2555 = vunpack.c.l.b16 %v2452
        %v2556 = vunpack.c.h.b16 %v2452
        %v2557 = vunpack.c.l.b16 %v2453
        %v2558 = vunpack.c.h.b16 %v2453
        %v2559 = vunpack.c.l.b16 %v2454
        %v2560 = vunpack.c.h.b16 %v2454
        %v2561 = vunpack.c.l.b16 %v2455
        %v2562 = vunpack.c.h.b16 %v2455
        %v2563 = vunpack.c.l.b16 %v2456
        %v2564 = vunpack.c.h.b16 %v2456
        %v2565 = vunpack.c.l.b16 %v2457
        %v2566 = vunpack.c.h.b16 %v2457
        %v2567 = vunpack.c.l.b16 %v2458
        %v2568 = vunpack.c.h.b16 %v2458
        %v2569 = vunpack.c.l.b16 %v2459
        %v2570 = vunpack.c.h.b16 %v2459
        %v2571 = vunpack.c.l.b16 %v2460
        %v2572 = vunpack.c.h.b16 %v2460
        %v2573 = vunpack.c.l.b16 %v2461
        %v2574 = vunpack.c.h.b16 %v2461
        %v2575 = vunpack.c.l.b16 %v2462
        %v2576 = vunpack.c.h.b16 %v2462
        %v2577 = vunpack.c.l.b16 %v2463
        %v2578 = vunpack.c.h.b16 %v2463
        %v2579 = vunpack.c.l.b16 %v2464
        %v2580 = vunpack.c.h.b16 %v2464
        %v2581 = vunpack.c.l.b16 %v2465
        %v2582 = vunpack.c.h.b16 %v2465
        %v2583 = vunpack.c.l.b16 %v2466
        %v2584 = vunpack.c.h.b16 %v2466
        %v2585 = vunpack.c.l.b16 %v2467
        %v2586 = vunpack.c.h.b16 %v2467
        %v2587 = vunpack.c.l.b16 %v2468
        %v2588 = vunpack.c.h.b16 %v2468
        %v2589 = vunpack.c.l.b16 %v2469
        %v2590 = vunpack.c.h.b16 %v2469
        %v2591 = vunpack.c.l.b16 %v2470
        %v2592 = vunpack.c.h.b16 %v2470
        %v2593 = vunpack.c.l.b16 %v2471
        %v2594 = vunpack.c.h.b16 %v2471
        %v2595 = vunpack.c.l.b16 %v2472
        %v2596 = vunpack.c.h.b16 %v2472
        %v2597 = vunpack.c.l.b16 %v2473
        %v2598 = vunpack.c.h.b16 %v2473
        %v2599 = vunpack.c.l.b16 %v2474
        %v2600 = vunpack.c.h.b16 %v2474
        %v2601 = vunpack.c.l.b16 %v2475
        %v2602 = vunpack.c.h.b16 %v2475
        %v2603 = vunpack.c.l.b16 %v2476
        %v2604 = vunpack.c.h.b16 %v2476
        %v2605 = vunpack.c.l.b16 %v2477
        %v2606 = vunpack.c.h.b16 %v2477
        %v2607 = vunpack.c.l.b16 %v2478
        %v2608 = vunpack.c.h.b16 %v2478
        %v2609 = vunpack.c.l.b16 %v2479
        %v2610 = vunpack.c.h.b16 %v2479
        %v2611 = vunpack.c.l.b16 %v2480
        %v2612 = vunpack.c.h.b16 %v2480
        %v2613 = vunpack.c.l.b16 %v2481
        %v2614 = vunpack.c.h.b16 %v2481
        %v2615 = vunpack.c.l.b16 %v2482
        %v2616 = vunpack.c.h.b16 %v2482
        %v2617 = vunpack.c.l.b16 %v2483
        %v2618 = vunpack.c.h.b16 %v2483
        %v2619 = vunpack.c.l.b16 %v2484
        %v2620 = vunpack.c.h.b16 %v2484
        %v2621 = vunpack.c.l.b16 %v2485
        %v2622 = vunpack.c.h.b16 %v2485
        %v2623 = vunpack.c.l.b16 %v2486
        %v2624 = vunpack.c.h.b16 %v2486
        %v2625 = vunpack.c.l.b16 %v2487
        %v2626 = vunpack.c.h.b16 %v2487
        %v2627 = vunpack.c.l.b16 %v2488
        %v2628 = vunpack.c.h.b16 %v2488
        %v2629 = vunpack.c.l.b16 %v2489
        %v2630 = vunpack.c.h.b16 %v2489
        %v2631 = vunpack.c.l.b16 %v2490
        %v2632 = vunpack.c.h.b16 %v2490
        %v2633 = vunpack.c.l.b16 %v2491
        %v2634 = vunpack.c.h.b16 %v2491
        %v2635 = vunpack.c.l.b16 %v2492
        %v2636 = vunpack.c.h.b16 %v2492
        %v2637 = vpack.c.b16 %v2547, %v2541
        %v2638 = vpack.c.b16 %v2548, %v2542
        %v2639 = vpack.c.b16 %v2549, %v2543
        %v2640 = vpack.c.b16 %v2550, %v2544
        %v2641 = vpack.c.b16 %v2551, %v2545
        %v2642 = vpack.c.b16 %v2552, %v2546
        %v2643 = vpack.c.b16 %v2559, %v2553
        %v2644 = vpack.c.b16 %v2560, %v2554
        %v2645 = vpack.c.b16 %v2561, %v2555
        %v2646 = vpack.c.b16 %v2562, %v2556
        %v2647 = vpack.c.b16 %v2563, %v2557
        %v2648 = vpack.c.b16 %v2564, %v2558
        %v2649 = vpack.c.b16 %v2571, %v2565
        %v2650 = vpack.c.b16 %v2572, %v2566
        %v2651 = vpack.c.b16 %v2573, %v2567
        %v2652 = vpack.c.b16 %v2574, %v2568
        %v2653 = vpack.c.b16 %v2575, %v2569
        %v2654 = vpack.c.b16 %v2576, %v2570
        %v2655 = vpack.c.b16 %v2583, %v2577
        %v2656 = vpack.c.b16 %v2584, %v2578
        %v2657 = vpack.c.b16 %v2585, %v2579
        %v2658 = vpack.c.b16 %v2586, %v2580
        %v2659 = vpack.c.b16 %v2587, %v2581
        %v2660 = vpack.c.b16 %v2588, %v2582
        %v2661 = vpack.c.b16 %v2595, %v2589
        %v2662 = vpack.c.b16 %v2596, %v2590
        %v2663 = vpack.c.b16 %v2597, %v2591
        %v2664 = vpack.c.b16 %v2598, %v2592
        %v2665 = vpack.c.b16 %v2599, %v2593
        %v2666 = vpack.c.b16 %v2600, %v2594
        %v2667 = vpack.c.b16 %v2607, %v2601
        %v2668 = vpack.c.b16 %v2608, %v2602
        %v2669 = vpack.c.b16 %v2609, %v2603
        %v2670 = vpack.c.b16 %v2610, %v2604
        %v2671 = vpack.c.b16 %v2611, %v2605
        %v2672 = vpack.c.b16 %v2612, %v2606
        %v2673 = vpack.c.b16 %v2619, %v2613
        %v2674 = vpack.c.b16 %v2620, %v2614
        %v2675 = vpack.c.b16 %v2621, %v2615
        %v2676 = vpack.c.b16 %v2622, %v2616
        %v2677 = vpack.c.b16 %v2623, %v2617
        %v2678 = vpack.c.b16 %v2624, %v2618
        %v2679 = vpack.c.b16 %v2631, %v2625
        %v2680 = vpack.c.b16 %v2632, %v2626
        %v2681 = vpack.c.b16 %v2633, %v2627
        %v2682 = vpack.c.b16 %v2634, %v2628
        %v2683 = vpack.c.b16 %v2635, %v2629
        %v2684 = vpack.c.b16 %v2636, %v2630
        %2733 = vmatprep.subr.bf16.mxu0 %v2638
        %2734 = vmatpush1.bf16.msra.mxu0 %v2637
        %2735 = vmatprep.subr.bf16.mxu0 %v2644
        %2736 = vmatpush1.bf16.msra.mxu0 %v2643
        %2737 = vmatprep.subr.bf16.mxu0 %v2650
        %2738 = vmatpush1.bf16.msra.mxu0 %v2649
        %2739 = vmatprep.subr.bf16.mxu0 %v2656
        %2740 = vmatpush1.bf16.msra.mxu0 %v2655
        %2741 = vmatprep.subr.bf16.mxu0 %v2662
        %2742 = vmatpush1.bf16.msra.mxu0 %v2661
        %2743 = vmatprep.subr.bf16.mxu0 %v2668
        %2744 = vmatpush1.bf16.msra.mxu0 %v2667
        %2745 = vmatprep.subr.bf16.mxu0 %v2674
        %2746 = vmatpush1.bf16.msra.mxu0 %v2673
        %2747 = vmatprep.subr.bf16.mxu0 %v2680
        %2748 = vmatpush1.bf16.msra.mxu0 %v2679
        %2749 = vmatprep.subr.bf16.mxu0 0
        %2750 = vmatpush1.bf16.msra.mxu0 0
        %2751 = vmatprep.subr.bf16.mxu0 0
        %2752 = vmatpush1.bf16.msra.mxu0 0
        %2753 = vmatprep.subr.bf16.mxu0 0
        %2754 = vmatpush1.bf16.msra.mxu0 0
        %2755 = vmatprep.subr.bf16.mxu0 0
        %2756 = vmatpush1.bf16.msra.mxu0 0
        %2757 = vmatprep.subr.bf16.mxu0 0
        %2758 = vmatpush1.bf16.msra.mxu0 0
        %2759 = vmatprep.subr.bf16.mxu0 0
        %2760 = vmatpush1.bf16.msra.mxu0 0
        %2761 = vmatprep.subr.bf16.mxu0 0
        %2762 = vmatpush1.bf16.msra.mxu0 0
        %2763 = vmatprep.subr.bf16.mxu0 0
        %2764 = vmatpush1.bf16.msra.mxu0 0
        %2765 = vmatprep.mubr.bf16.mxu0 0
        %2766 = vmatmul.mubr.bf16.gmra.mrb[0].mxu0 %v2443
        %v2767 = vpop.f32.mrb[0].mxu0
        %v2768 = vadd.f32 0.0, %v2767
        %v2769 = vpop.f32.mrb[0].mxu0
        %v2770 = vadd.f32 0.0, %v2769
        %v2771 = vpop.f32.mrb[0].mxu0
        %v2772 = vpop.f32.mrb[0].mxu0
        %2773 = vdwg.mxu0
        %2774 = vmatprep.subr.bf16.mxu0 %v2640
        %2775 = vmatpush1.bf16.msra.mxu0 %v2639
        %2776 = vmatprep.subr.bf16.mxu0 %v2646
        %2777 = vmatpush1.bf16.msra.mxu0 %v2645
        %2778 = vmatprep.subr.bf16.mxu0 %v2652
        %2779 = vmatpush1.bf16.msra.mxu0 %v2651
        %2780 = vmatprep.subr.bf16.mxu0 %v2658
        %2781 = vmatpush1.bf16.msra.mxu0 %v2657
        %2782 = vmatprep.subr.bf16.mxu0 %v2664
        %2783 = vmatpush1.bf16.msra.mxu0 %v2663
        %2784 = vmatprep.subr.bf16.mxu0 %v2670
        %2785 = vmatpush1.bf16.msra.mxu0 %v2669
        %2786 = vmatprep.subr.bf16.mxu0 %v2676
        %2787 = vmatpush1.bf16.msra.mxu0 %v2675
        %2788 = vmatprep.subr.bf16.mxu0 %v2682
        %2789 = vmatpush1.bf16.msra.mxu0 %v2681
        %2790 = vmatprep.subr.bf16.mxu0 0
        %2791 = vmatpush1.bf16.msra.mxu0 0
        %2792 = vmatprep.subr.bf16.mxu0 0
        %2793 = vmatpush1.bf16.msra.mxu0 0
        %2794 = vmatprep.subr.bf16.mxu0 0
        %2795 = vmatpush1.bf16.msra.mxu0 0
        %2796 = vmatprep.subr.bf16.mxu0 0
        %2797 = vmatpush1.bf16.msra.mxu0 0
        %2798 = vmatprep.subr.bf16.mxu0 0
        %2799 = vmatpush1.bf16.msra.mxu0 0
        %2800 = vmatprep.subr.bf16.mxu0 0
        %2801 = vmatpush1.bf16.msra.mxu0 0
        %2802 = vmatprep.subr.bf16.mxu0 0
        %2803 = vmatpush1.bf16.msra.mxu0 0
        %2804 = vmatprep.subr.bf16.mxu0 0
        %2805 = vmatpush1.bf16.msra.mxu0 0
        %2806 = vmatprep.mubr.bf16.mxu0 0
        %2807 = vmatmul.mubr.bf16.gmra.mrb[0].mxu0 %v2443
        %v2808 = vpop.f32.mrb[0].mxu0
        %v2809 = vadd.f32 0.0, %v2808
        %v2810 = vpop.f32.mrb[0].mxu0
        %v2811 = vadd.f32 0.0, %v2810
        %v2812 = vpop.f32.mrb[0].mxu0
        %v2813 = vpop.f32.mrb[0].mxu0
        %2814 = vdwg.mxu0
        %2815 = vmatprep.subr.bf16.mxu0 %v2642
        %2816 = vmatpush1.bf16.msra.mxu0 %v2641
        %2817 = vmatprep.subr.bf16.mxu0 %v2648
        %2818 = vmatpush1.bf16.msra.mxu0 %v2647
        %2819 = vmatprep.subr.bf16.mxu0 %v2654
        %2820 = vmatpush1.bf16.msra.mxu0 %v2653
        %2821 = vmatprep.subr.bf16.mxu0 %v2660
        %2822 = vmatpush1.bf16.msra.mxu0 %v2659
        %2823 = vmatprep.subr.bf16.mxu0 %v2666
        %2824 = vmatpush1.bf16.msra.mxu0 %v2665
        %2825 = vmatprep.subr.bf16.mxu0 %v2672
        %2826 = vmatpush1.bf16.msra.mxu0 %v2671
        %2827 = vmatprep.subr.bf16.mxu0 %v2678
        %2828 = vmatpush1.bf16.msra.mxu0 %v2677
        %2829 = vmatprep.subr.bf16.mxu0 %v2684
        %2830 = vmatpush1.bf16.msra.mxu0 %v2683
        %2831 = vmatprep.subr.bf16.mxu0 0
        %2832 = vmatpush1.bf16.msra.mxu0 0
        %2833 = vmatprep.subr.bf16.mxu0 0
        %2834 = vmatpush1.bf16.msra.mxu0 0
        %2835 = vmatprep.subr.bf16.mxu0 0
        %2836 = vmatpush1.bf16.msra.mxu0 0
        %2837 = vmatprep.subr.bf16.mxu0 0
        %2838 = vmatpush1.bf16.msra.mxu0 0
        %2839 = vmatprep.subr.bf16.mxu0 0
        %2840 = vmatpush1.bf16.msra.mxu0 0
        %2841 = vmatprep.subr.bf16.mxu0 0
        %2842 = vmatpush1.bf16.msra.mxu0 0
        %2843 = vmatprep.subr.bf16.mxu0 0
        %2844 = vmatpush1.bf16.msra.mxu0 0
        %2845 = vmatprep.subr.bf16.mxu0 0
        %2846 = vmatpush1.bf16.msra.mxu0 0
        %2847 = vmatprep.mubr.bf16.mxu0 0
        %2848 = vmatmul.mubr.bf16.gmra.mrb[0].mxu0 %v2443
        %v2849 = vpop.f32.mrb[0].mxu0
        %v2850 = vadd.f32 0.0, %v2849
        %v2851 = vpop.f32.mrb[0].mxu0
        %v2852 = vadd.f32 0.0, %v2851
        %v2853 = vpop.f32.mrb[0].mxu0
        %v2854 = vpop.f32.mrb[0].mxu0
        %2855 = vdwg.mxu0
        %v2856 = vadd.f32 %v2356, %v2768
        %v2857 = vadd.f32 %v2357, %v2770
        %v2858 = vadd.f32 %v2358, %v2809
        %v2859 = vadd.f32 %v2359, %v2811
        %v2860 = vadd.f32 %v2360, %v2850
        %v2861 = vadd.f32 %v2361, %v2852
        %v2862 = vmax.f32 %v2856, 0.0
        %v2863 = vmax.f32 %v2857, 0.0
        %v2864 = vmax.f32 %v2858, 0.0
        %v2865 = vmax.f32 %v2859, 0.0
        %v2866 = vmax.f32 %v2860, 0.0
        %v2867 = vmax.f32 %v2861, 0.0
        %v2868 = vpack.c.bf16 %v2862, %v2862
        %v2869 = vpack.c.bf16 %v2863, %v2863
        %v2870 = vpack.c.bf16 %v2864, %v2864
        %v2871 = vpack.c.bf16 %v2865, %v2865
        %v2872 = vpack.c.bf16 %v2866, %v2866
        %v2873 = vpack.c.bf16 %v2867, %v2867
        %v2874 = vld [vmem:[%s4] sm:$0xf]
        %v2875 = vld [vmem:[%s4 + $0x4] sm:$0xf]
        %v2876 = vld [vmem:[%s4 + $0x8] sm:$0xf]
        %v2877 = vld [vmem:[%s4 + $0xc] sm:$0xf]
        %v2878 = vld [vmem:[%s4 + $0x10] sm:$0xf]
        %v2879 = vld [vmem:[%s4 + $0x14] sm:$0xf]
        %v2880 = vld [vmem:[%s4 + $0x18] sm:$0xf]
        %v2881 = vld [vmem:[%s4 + $0x1c] sm:$0xf]
        %v2882 = vld [vmem:[%s4 + $0x20] sm:$0xf]
        %v2883 = vld [vmem:[%s4 + $0x24] sm:$0xf]
        %v2884 = vld [vmem:[%s4 + $0x28] sm:$0xf]
        %v2885 = vld [vmem:[%s4 + $0x2c] sm:$0xf]
        %v2886 = vld [vmem:[%s4 + $0x30] sm:$0xf]
        %v2887 = vld [vmem:[%s4 + $0x34] sm:$0xf]
        %v2888 = vld [vmem:[%s4 + $0x38] sm:$0xf]
        %v2889 = vld [vmem:[%s4 + $0x3c] sm:$0xf]
        %v2890 = vld [vmem:[%s4 + $0x40] sm:$0xf]
        %v2891 = vld [vmem:[%s4 + $0x44] sm:$0xf]
        %v2892 = vld [vmem:[%s4 + $0x48] sm:$0xf]
        %v2893 = vld [vmem:[%s4 + $0x4c] sm:$0xf]
        %v2894 = vld [vmem:[%s4 + $0x50] sm:$0xf]
        %v2895 = vld [vmem:[%s4 + $0x54] sm:$0xf]
        %v2896 = vld [vmem:[%s4 + $0x58] sm:$0xf]
        %v2897 = vld [vmem:[%s4 + $0x5c] sm:$0xf]
        %v2898 = vld [vmem:[%s4 + $0x60] sm:$0xf]
        %v2899 = vld [vmem:[%s4 + $0x64] sm:$0xf]
        %v2900 = vld [vmem:[%s4 + $0x68] sm:$0xf]
        %v2901 = vld [vmem:[%s4 + $0x6c] sm:$0xf]
        %v2902 = vld [vmem:[%s4 + $0x70] sm:$0xf]
        %v2903 = vld [vmem:[%s4 + $0x74] sm:$0xf]
        %v2904 = vld [vmem:[%s4 + $0x78] sm:$0xf]
        %v2905 = vld [vmem:[%s4 + $0x7c] sm:$0xf]
        %v2906 = vld [vmem:[%s4 + $0x80] sm:$0xf]
        %v2907 = vld [vmem:[%s4 + $0x84] sm:$0xf]
        %v2908 = vld [vmem:[%s4 + $0x88] sm:$0xf]
        %v2909 = vld [vmem:[%s4 + $0x8c] sm:$0xf]
        %v2910 = vld [vmem:[%s4 + $0x90] sm:$0xf]
        %v2911 = vld [vmem:[%s4 + $0x94] sm:$0xf]
        %v2912 = vld [vmem:[%s4 + $0x98] sm:$0xf]
        %v2913 = vld [vmem:[%s4 + $0x9c] sm:$0xf]
        %v2914 = vld [vmem:[%s4 + $0xa0] sm:$0xf]
        %v2915 = vld [vmem:[%s4 + $0xa4] sm:$0xf]
        %v2916 = vld [vmem:[%s4 + $0xa8] sm:$0xf]
        %v2917 = vld [vmem:[%s4 + $0xac] sm:$0xf]
        %v2918 = vld [vmem:[%s4 + $0xb0] sm:$0xf]
        %v2919 = vld [vmem:[%s4 + $0xb4] sm:$0xf]
        %v2920 = vld [vmem:[%s4 + $0xb8] sm:$0xf]
        %v2921 = vld [vmem:[%s4 + $0xbc] sm:$0xf]
        %v2922 = vld [vmem:[%s4 + $0xc0] sm:$0xf]
        %v2923 = vld [vmem:[%s4 + $0xc4] sm:$0xf]
        %v2924 = vld [vmem:[%s4 + $0xc8] sm:$0xf]
        %v2925 = vld [vmem:[%s4 + $0xcc] sm:$0xf]
        %v2926 = vld [vmem:[%s4 + $0xd0] sm:$0xf]
        %v2927 = vld [vmem:[%s4 + $0xd4] sm:$0xf]
        %v2928 = vld [vmem:[%s4 + $0xd8] sm:$0xf]
        %v2929 = vld [vmem:[%s4 + $0xdc] sm:$0xf]
        %v2930 = vld [vmem:[%s4 + $0xe0] sm:$0xf]
        %v2931 = vld [vmem:[%s4 + $0xe4] sm:$0xf]
        %v2932 = vld [vmem:[%s4 + $0xe8] sm:$0xf]
        %v2933 = vld [vmem:[%s4 + $0xec] sm:$0xf]
        %v2934 = vld [vmem:[%s4 + $0xf0] sm:$0xf]
        %v2935 = vld [vmem:[%s4 + $0xf4] sm:$0xf]
        %v2936 = vld [vmem:[%s4 + $0xf8] sm:$0xf]
        %v2937 = vld [vmem:[%s4 + $0xfc] sm:$0xf]
        %v2938 = vld [vmem:[%s4 + $0x100] sm:$0xf]
        %v2939 = vld [vmem:[%s4 + $0x104] sm:$0xf]
        %v2940 = vld [vmem:[%s4 + $0x108] sm:$0xf]
        %v2941 = vld [vmem:[%s4 + $0x10c] sm:$0xf]
        %v2942 = vld [vmem:[%s4 + $0x110] sm:$0xf]
        %v2943 = vld [vmem:[%s4 + $0x114] sm:$0xf]
        %v2944 = vld [vmem:[%s4 + $0x118] sm:$0xf]
        %v2945 = vld [vmem:[%s4 + $0x11c] sm:$0xf]
        %v2946 = vld [vmem:[%s4 + $0x120] sm:$0xf]
        %v2947 = vld [vmem:[%s4 + $0x124] sm:$0xf]
        %v2948 = vld [vmem:[%s4 + $0x128] sm:$0xf]
        %v2949 = vld [vmem:[%s4 + $0x12c] sm:$0xf]
        %v2950 = vld [vmem:[%s4 + $0x130] sm:$0xf]
        %v2951 = vld [vmem:[%s4 + $0x134] sm:$0xf]
        %v2952 = vld [vmem:[%s4 + $0x138] sm:$0xf]
        %v2953 = vld [vmem:[%s4 + $0x13c] sm:$0xf]
        %v2954 = vld [vmem:[%s4 + $0x140] sm:$0xf]
        %v2955 = vld [vmem:[%s4 + $0x144] sm:$0xf]
        %v2956 = vld [vmem:[%s4 + $0x148] sm:$0xf]
        %v2957 = vld [vmem:[%s4 + $0x14c] sm:$0xf]
        %v2958 = vld [vmem:[%s4 + $0x150] sm:$0xf]
        %v2959 = vld [vmem:[%s4 + $0x154] sm:$0xf]
        %v2960 = vld [vmem:[%s4 + $0x158] sm:$0xf]
        %v2961 = vld [vmem:[%s4 + $0x15c] sm:$0xf]
        %v2962 = vld [vmem:[%s4 + $0x160] sm:$0xf]
        %v2963 = vld [vmem:[%s4 + $0x164] sm:$0xf]
        %v2964 = vld [vmem:[%s4 + $0x168] sm:$0xf]
        %v2965 = vld [vmem:[%s4 + $0x16c] sm:$0xf]
        %v2966 = vld [vmem:[%s4 + $0x170] sm:$0xf]
        %v2967 = vld [vmem:[%s4 + $0x174] sm:$0xf]
        %v2968 = vld [vmem:[%s4 + $0x178] sm:$0xf]
        %v2969 = vld [vmem:[%s4 + $0x17c] sm:$0xf]
        %v2970 = vld [vmem:[%s5] sm:$0x1]
        %v2972 = vlaneseq
        %v2973 = vshrl.u32 %v2972, 7
        %v2974 = vsub.s32 0, %v2973
        %v2975 = vrot.slane %v2970, %v2974
        %v3073 = vunpack.c.l.b16 %v2874
        %v3074 = vunpack.c.l.b16 %v2875
        %v3075 = vunpack.c.l.b16 %v2876
        %v3076 = vunpack.c.l.b16 %v2877
        %v3077 = vunpack.c.l.b16 %v2878
        %v3078 = vunpack.c.l.b16 %v2879
        %v3079 = vunpack.c.l.b16 %v2880
        %v3080 = vunpack.c.l.b16 %v2881
        %v3081 = vunpack.c.l.b16 %v2882
        %v3082 = vunpack.c.l.b16 %v2883
        %v3083 = vunpack.c.l.b16 %v2884
        %v3084 = vunpack.c.l.b16 %v2885
        %v3085 = vunpack.c.l.b16 %v2886
        %v3086 = vunpack.c.l.b16 %v2887
        %v3087 = vunpack.c.l.b16 %v2888
        %v3088 = vunpack.c.l.b16 %v2889
        %v3089 = vunpack.c.l.b16 %v2890
        %v3090 = vunpack.c.l.b16 %v2891
        %v3091 = vunpack.c.l.b16 %v2892
        %v3092 = vunpack.c.l.b16 %v2893
        %v3093 = vunpack.c.l.b16 %v2894
        %v3094 = vunpack.c.l.b16 %v2895
        %v3095 = vunpack.c.l.b16 %v2896
        %v3096 = vunpack.c.l.b16 %v2897
        %v3097 = vunpack.c.l.b16 %v2898
        %v3098 = vunpack.c.l.b16 %v2899
        %v3099 = vunpack.c.l.b16 %v2900
        %v3100 = vunpack.c.l.b16 %v2901
        %v3101 = vunpack.c.l.b16 %v2902
        %v3102 = vunpack.c.l.b16 %v2903
        %v3103 = vunpack.c.l.b16 %v2904
        %v3104 = vunpack.c.l.b16 %v2905
        %v3105 = vunpack.c.l.b16 %v2906
        %v3106 = vunpack.c.l.b16 %v2907
        %v3107 = vunpack.c.l.b16 %v2908
        %v3108 = vunpack.c.l.b16 %v2909
        %v3109 = vunpack.c.l.b16 %v2910
        %v3110 = vunpack.c.l.b16 %v2911
        %v3111 = vunpack.c.l.b16 %v2912
        %v3112 = vunpack.c.l.b16 %v2913
        %v3113 = vunpack.c.l.b16 %v2914
        %v3114 = vunpack.c.l.b16 %v2915
        %v3115 = vunpack.c.l.b16 %v2916
        %v3116 = vunpack.c.l.b16 %v2917
        %v3117 = vunpack.c.l.b16 %v2918
        %v3118 = vunpack.c.l.b16 %v2919
        %v3119 = vunpack.c.l.b16 %v2920
        %v3120 = vunpack.c.l.b16 %v2921
        %v3121 = vunpack.c.l.b16 %v2922
        %v3122 = vunpack.c.l.b16 %v2923
        %v3123 = vunpack.c.l.b16 %v2924
        %v3124 = vunpack.c.l.b16 %v2925
        %v3125 = vunpack.c.l.b16 %v2926
        %v3126 = vunpack.c.l.b16 %v2927
        %v3127 = vunpack.c.l.b16 %v2928
        %v3128 = vunpack.c.l.b16 %v2929
        %v3129 = vunpack.c.l.b16 %v2930
        %v3130 = vunpack.c.l.b16 %v2931
        %v3131 = vunpack.c.l.b16 %v2932
        %v3132 = vunpack.c.l.b16 %v2933
        %v3133 = vunpack.c.l.b16 %v2934
        %v3134 = vunpack.c.l.b16 %v2935
        %v3135 = vunpack.c.l.b16 %v2936
        %v3136 = vunpack.c.l.b16 %v2937
        %v3137 = vunpack.c.l.b16 %v2938
        %v3138 = vunpack.c.l.b16 %v2939
        %v3139 = vunpack.c.l.b16 %v2940
        %v3140 = vunpack.c.l.b16 %v2941
        %v3141 = vunpack.c.l.b16 %v2942
        %v3142 = vunpack.c.l.b16 %v2943
        %v3143 = vunpack.c.l.b16 %v2944
        %v3144 = vunpack.c.l.b16 %v2945
        %v3145 = vunpack.c.l.b16 %v2946
        %v3146 = vunpack.c.l.b16 %v2947
        %v3147 = vunpack.c.l.b16 %v2948
        %v3148 = vunpack.c.l.b16 %v2949
        %v3149 = vunpack.c.l.b16 %v2950
        %v3150 = vunpack.c.l.b16 %v2951
        %v3151 = vunpack.c.l.b16 %v2952
        %v3152 = vunpack.c.l.b16 %v2953
        %v3153 = vunpack.c.l.b16 %v2954
        %v3154 = vunpack.c.l.b16 %v2955
        %v3155 = vunpack.c.l.b16 %v2956
        %v3156 = vunpack.c.l.b16 %v2957
        %v3157 = vunpack.c.l.b16 %v2958
        %v3158 = vunpack.c.l.b16 %v2959
        %v3159 = vunpack.c.l.b16 %v2960
        %v3160 = vunpack.c.l.b16 %v2961
        %v3161 = vunpack.c.l.b16 %v2962
        %v3162 = vunpack.c.l.b16 %v2963
        %v3163 = vunpack.c.l.b16 %v2964
        %v3164 = vunpack.c.l.b16 %v2965
        %v3165 = vunpack.c.l.b16 %v2966
        %v3166 = vunpack.c.l.b16 %v2967
        %v3167 = vunpack.c.l.b16 %v2968
        %v3168 = vunpack.c.l.b16 %v2969
        %v3169 = vpack.c.b16 %v3074, %v3073
        %v3170 = vpack.c.b16 %v3076, %v3075
        %v3171 = vpack.c.b16 %v3078, %v3077
        %v3172 = vpack.c.b16 %v3080, %v3079
        %v3173 = vpack.c.b16 %v3082, %v3081
        %v3174 = vpack.c.b16 %v3084, %v3083
        %v3175 = vpack.c.b16 %v3086, %v3085
        %v3176 = vpack.c.b16 %v3088, %v3087
        %v3177 = vpack.c.b16 %v3090, %v3089
        %v3178 = vpack.c.b16 %v3092, %v3091
        %v3179 = vpack.c.b16 %v3094, %v3093
        %v3180 = vpack.c.b16 %v3096, %v3095
        %v3181 = vpack.c.b16 %v3098, %v3097
        %v3182 = vpack.c.b16 %v3100, %v3099
        %v3183 = vpack.c.b16 %v3102, %v3101
        %v3184 = vpack.c.b16 %v3104, %v3103
        %v3185 = vpack.c.b16 %v3106, %v3105
        %v3186 = vpack.c.b16 %v3108, %v3107
        %v3187 = vpack.c.b16 %v3110, %v3109
        %v3188 = vpack.c.b16 %v3112, %v3111
        %v3189 = vpack.c.b16 %v3114, %v3113
        %v3190 = vpack.c.b16 %v3116, %v3115
        %v3191 = vpack.c.b16 %v3118, %v3117
        %v3192 = vpack.c.b16 %v3120, %v3119
        %v3193 = vpack.c.b16 %v3122, %v3121
        %v3194 = vpack.c.b16 %v3124, %v3123
        %v3195 = vpack.c.b16 %v3126, %v3125
        %v3196 = vpack.c.b16 %v3128, %v3127
        %v3197 = vpack.c.b16 %v3130, %v3129
        %v3198 = vpack.c.b16 %v3132, %v3131
        %v3199 = vpack.c.b16 %v3134, %v3133
        %v3200 = vpack.c.b16 %v3136, %v3135
        %v3201 = vpack.c.b16 %v3138, %v3137
        %v3202 = vpack.c.b16 %v3140, %v3139
        %v3203 = vpack.c.b16 %v3142, %v3141
        %v3204 = vpack.c.b16 %v3144, %v3143
        %v3205 = vpack.c.b16 %v3146, %v3145
        %v3206 = vpack.c.b16 %v3148, %v3147
        %v3207 = vpack.c.b16 %v3150, %v3149
        %v3208 = vpack.c.b16 %v3152, %v3151
        %v3209 = vpack.c.b16 %v3154, %v3153
        %v3210 = vpack.c.b16 %v3156, %v3155
        %v3211 = vpack.c.b16 %v3158, %v3157
        %v3212 = vpack.c.b16 %v3160, %v3159
        %v3213 = vpack.c.b16 %v3162, %v3161
        %v3214 = vpack.c.b16 %v3164, %v3163
        %v3215 = vpack.c.b16 %v3166, %v3165
        %v3216 = vpack.c.b16 %v3168, %v3167
        %3265 = vmatprep.subr.bf16.mxu0 0
        %3266 = vmatpush1.bf16.msra.mxu0 %v3169
        %3267 = vmatprep.subr.bf16.mxu0 0
        %3268 = vmatpush1.bf16.msra.mxu0 %v3170
        %3269 = vmatprep.subr.bf16.mxu0 0
        %3270 = vmatpush1.bf16.msra.mxu0 %v3171
        %3271 = vmatprep.subr.bf16.mxu0 0
        %3272 = vmatpush1.bf16.msra.mxu0 %v3172
        %3273 = vmatprep.subr.bf16.mxu0 0
        %3274 = vmatpush1.bf16.msra.mxu0 %v3173
        %3275 = vmatprep.subr.bf16.mxu0 0
        %3276 = vmatpush1.bf16.msra.mxu0 %v3174
        %3277 = vmatprep.subr.bf16.mxu0 0
        %3278 = vmatpush1.bf16.msra.mxu0 %v3175
        %3279 = vmatprep.subr.bf16.mxu0 0
        %3280 = vmatpush1.bf16.msra.mxu0 %v3176
        %3281 = vmatprep.subr.bf16.mxu0 0
        %3282 = vmatpush1.bf16.msra.mxu0 %v3177
        %3283 = vmatprep.subr.bf16.mxu0 0
        %3284 = vmatpush1.bf16.msra.mxu0 %v3178
        %3285 = vmatprep.subr.bf16.mxu0 0
        %3286 = vmatpush1.bf16.msra.mxu0 %v3179
        %3287 = vmatprep.subr.bf16.mxu0 0
        %3288 = vmatpush1.bf16.msra.mxu0 %v3180
        %3289 = vmatprep.subr.bf16.mxu0 0
        %3290 = vmatpush1.bf16.msra.mxu0 %v3181
        %3291 = vmatprep.subr.bf16.mxu0 0
        %3292 = vmatpush1.bf16.msra.mxu0 %v3182
        %3293 = vmatprep.subr.bf16.mxu0 0
        %3294 = vmatpush1.bf16.msra.mxu0 %v3183
        %3295 = vmatprep.subr.bf16.mxu0 0
        %3296 = vmatpush1.bf16.msra.mxu0 %v3184
        %3297 = vmatprep.mubr.bf16.mxu0 %v2869
        %3298 = vmatmul.mubr.bf16.gmra.mrb[0].mxu0 %v2868
        %v3299 = vpop.f32.mrb[0].mxu0
        %v3300 = vadd.f32 %v2975, %v3299
        %v3301 = vpop.f32.mrb[0].mxu0
        %v3302 = vpop.f32.mrb[0].mxu0
        %v3303 = vpop.f32.mrb[0].mxu0
        %3304 = vdwg.mxu0
        %3305 = vmatprep.subr.bf16.mxu0 0
        %3306 = vmatpush1.bf16.msra.mxu0 %v3185
        %3307 = vmatprep.subr.bf16.mxu0 0
        %3308 = vmatpush1.bf16.msra.mxu0 %v3186
        %3309 = vmatprep.subr.bf16.mxu0 0
        %3310 = vmatpush1.bf16.msra.mxu0 %v3187
        %3311 = vmatprep.subr.bf16.mxu0 0
        %3312 = vmatpush1.bf16.msra.mxu0 %v3188
        %3313 = vmatprep.subr.bf16.mxu0 0
        %3314 = vmatpush1.bf16.msra.mxu0 %v3189
        %3315 = vmatprep.subr.bf16.mxu0 0
        %3316 = vmatpush1.bf16.msra.mxu0 %v3190
        %3317 = vmatprep.subr.bf16.mxu0 0
        %3318 = vmatpush1.bf16.msra.mxu0 %v3191
        %3319 = vmatprep.subr.bf16.mxu0 0
        %3320 = vmatpush1.bf16.msra.mxu0 %v3192
        %3321 = vmatprep.subr.bf16.mxu0 0
        %3322 = vmatpush1.bf16.msra.mxu0 %v3193
        %3323 = vmatprep.subr.bf16.mxu0 0
        %3324 = vmatpush1.bf16.msra.mxu0 %v3194
        %3325 = vmatprep.subr.bf16.mxu0 0
        %3326 = vmatpush1.bf16.msra.mxu0 %v3195
        %3327 = vmatprep.subr.bf16.mxu0 0
        %3328 = vmatpush1.bf16.msra.mxu0 %v3196
        %3329 = vmatprep.subr.bf16.mxu0 0
        %3330 = vmatpush1.bf16.msra.mxu0 %v3197
        %3331 = vmatprep.subr.bf16.mxu0 0
        %3332 = vmatpush1.bf16.msra.mxu0 %v3198
        %3333 = vmatprep.subr.bf16.mxu0 0
        %3334 = vmatpush1.bf16.msra.mxu0 %v3199
        %3335 = vmatprep.subr.bf16.mxu0 0
        %3336 = vmatpush1.bf16.msra.mxu0 %v3200
        %3337 = vmatprep.mubr.bf16.mxu0 %v2871
        %3338 = vmatmul.mubr.bf16.gmra.mrb[0].mxu0 %v2870
        %v3339 = vpop.f32.mrb[0].mxu0
        %v3340 = vadd.f32 %v3300, %v3339
        %v3341 = vpop.f32.mrb[0].mxu0
        %v3342 = vpop.f32.mrb[0].mxu0
        %v3343 = vpop.f32.mrb[0].mxu0
        %3344 = vdwg.mxu0
        %3345 = vmatprep.subr.bf16.mxu0 0
        %3346 = vmatpush1.bf16.msra.mxu0 %v3201
        %3347 = vmatprep.subr.bf16.mxu0 0
        %3348 = vmatpush1.bf16.msra.mxu0 %v3202
        %3349 = vmatprep.subr.bf16.mxu0 0
        %3350 = vmatpush1.bf16.msra.mxu0 %v3203
        %3351 = vmatprep.subr.bf16.mxu0 0
        %3352 = vmatpush1.bf16.msra.mxu0 %v3204
        %3353 = vmatprep.subr.bf16.mxu0 0
        %3354 = vmatpush1.bf16.msra.mxu0 %v3205
        %3355 = vmatprep.subr.bf16.mxu0 0
        %3356 = vmatpush1.bf16.msra.mxu0 %v3206
        %3357 = vmatprep.subr.bf16.mxu0 0
        %3358 = vmatpush1.bf16.msra.mxu0 %v3207
        %3359 = vmatprep.subr.bf16.mxu0 0
        %3360 = vmatpush1.bf16.msra.mxu0 %v3208
        %3361 = vmatprep.subr.bf16.mxu0 0
        %3362 = vmatpush1.bf16.msra.mxu0 %v3209
        %3363 = vmatprep.subr.bf16.mxu0 0
        %3364 = vmatpush1.bf16.msra.mxu0 %v3210
        %3365 = vmatprep.subr.bf16.mxu0 0
        %3366 = vmatpush1.bf16.msra.mxu0 %v3211
        %3367 = vmatprep.subr.bf16.mxu0 0
        %3368 = vmatpush1.bf16.msra.mxu0 %v3212
        %3369 = vmatprep.subr.bf16.mxu0 0
        %3370 = vmatpush1.bf16.msra.mxu0 %v3213
        %3371 = vmatprep.subr.bf16.mxu0 0
        %3372 = vmatpush1.bf16.msra.mxu0 %v3214
        %3373 = vmatprep.subr.bf16.mxu0 0
        %3374 = vmatpush1.bf16.msra.mxu0 %v3215
        %3375 = vmatprep.subr.bf16.mxu0 0
        %3376 = vmatpush1.bf16.msra.mxu0 %v3216
        %3377 = vmatprep.mubr.bf16.mxu0 %v2873
        %3378 = vmatmul.mubr.bf16.gmra.mrb[0].mxu0 %v2872
        %v3379 = vpop.f32.mrb[0].mxu0
        %v3380 = vadd.f32 %v3340, %v3379
        %v3381 = vpop.f32.mrb[0].mxu0
        %v3382 = vpop.f32.mrb[0].mxu0
        %v3383 = vpop.f32.mrb[0].mxu0
        %3384 = vdwg.mxu0
        %3385 = vst [vmem:[%s262] sm:$0xff] %v3380
        %s3386 = sand.u32 %s160, 1
        %s3387 = scalar_lea.sflag [#allocation4], %s3386
        %s3388 = sand.u32 %s160, 1
        %s3389 = smul.addr %s3388, 8
        %s3390 = scalar_lea.vmem [#allocation5], %s3389
        // Predicated region
        $region49: #{tpu_custom_call.1} parent=43 // pred_check
          %p3391 = pneg %p170
        $region50: #{tpu_custom_call.1} parent=43 // pred_check_branch
          %3393 = sbr.rel (%p3391) target = $region52
        $region51: #{tpu_custom_call.1} parent=43 // pred_region
          %s3395 = ssub.s32 128, 128
          %3396 = vsyncadd %s3387, %s3395
          %s3397 = smul.addr %s21, 128
          %s3398 = scalar_lea.hbm %s6, %s3397
          %s3400 = sshll.u32 %s3390, 4
          %s3401 = int_to_ptr.vmem [resolvable:$true] %s3400
          %3403 = dma.vmem_to_hbm [thread:$0]  %s3401, 128, %s3398, %s3387
        $region52: #{tpu_custom_call.1} parent=43 // pred_fallthru
          _
      $region44: #{tpu_custom_call.1} parent=5 // pred_fallthru
        _
      %p3404 = scmp.le.s32.totalorder 2, %s16
      // Predicated region
      $region53: #{tpu_custom_call.1} parent=5 // pred_check
        %p3405 = pneg %p3404
      $region54: #{tpu_custom_call.1} parent=5 // pred_check_branch
        %3407 = sbr.rel (%p3405) target = $region56
      $region55: #{tpu_custom_call.1} parent=5 // pred_region
        %s3408 = ssub.s32 %s16, 2
        // Predicated region
        $region57: #{tpu_custom_call.1} parent=55 // pred_check
          %p3409 = pneg %p176
        $region58: #{tpu_custom_call.1} parent=55 // pred_check_branch
          %3411 = sbr.rel (%p3409) target = $region60
        $region59: #{tpu_custom_call.1} parent=55 // pred_region
          %s3412 = sand.u32 %s161, 1
          %s3413 = scalar_lea.sflag [#allocation4], %s3412
          %s3414 = sand.u32 %s161, 1
          %s3415 = smul.addr %s3414, 8
          %s3416 = scalar_lea.vmem [#allocation5], %s3415
          %3417 = dma.done %s3413, 128
        $region60: #{tpu_custom_call.1} parent=55 // pred_fallthru
          _
      $region56: #{tpu_custom_call.1} parent=5 // pred_fallthru
        _
    $region6: #{tpu_custom_call.1} parent=1 // loop_footer
      %s20 = sadd.s32 1, %s16
    $region7: #{tpu_custom_call.1} parent=1 // loop_footer_branch
      %15 = sbr.rel target = $region3
    $region8: #{tpu_custom_call.1} parent=1 // loop_exit
      _
    %3418 = vsyncpa [#allocation3], 1
    %s3419 = scalar_lea.sflag [#allocation3], 1
    %3420 = vsyncpa %s3419, 1
    %3421 = vsyncpa [#allocation4], 1
    %s3422 = scalar_lea.sflag [#allocation4], 1
    %3423 = vsyncpa %s3422, 1

</llo_original>
